<compile_context>
chip_gen: v7x
topology: tpu7x:2x2x1
jax: 0.10.0
libtpu: 0.0.40
codegen_flags: <defaults>
</compile_context>

<pallas_src>
import functools

import jax
import jax.numpy as jnp
from jax.experimental import pallas as pl
from jax.experimental.pallas import tpu as pltpu


# ----------------------------------------------------------------------------
# Fused C3 kernel (one grid step = one image, flat (M=H*W, C) layout)
# ----------------------------------------------------------------------------
def _c3_fused_kernel(x_ref, ri_ref, ci_ref,
                     w12_ref, sb12_ref,      # cv1 | cv2 merged       (C1, 2c_)
                     wm1_ref, sbm1_ref,      # m.cv1 (y2 rows zeroed) (2c_, c_)
                     wm2_ref, sbm2_ref,      # m.cv2 3x3 tap stack    (9c_, c_)
                     w3_ref, sb3_ref,        # cv3 + shortcut merged  (3c_, C2)
                     out_ref, *, H, W):
    f32, bf16 = jnp.float32, jnp.bfloat16
    M = H * W

    def bn_silu(y, sb_ref):                      # folded BN + SiLU, in f32
        y = y * sb_ref[0:1, :] + sb_ref[1:2, :]
        return y * pl.reciprocal(1.0 + jnp.exp(-y), approx=True)

    x = x_ref[0]                                 # (M, C1) bf16
    ri = ri_ref[...]                             # (M, 1) int32 row index
    ci = ci_ref[...]                             # (M, 1) int32 col index

    # cv1 & cv2 in one MXU pass: (M, C1) @ (C1, 2c_)
    y12 = bn_silu(jnp.dot(x, w12_ref[...], preferred_element_type=f32),
                  sb12_ref)                      # (M, 2c_) f32 = [y1 | y2]
    y12_bf = y12.astype(bf16)

    # bottleneck cv1 (1x1): rows of wm1 matching y2 are zero, so only y1 feeds it
    h = bn_silu(jnp.dot(y12_bf, wm1_ref[...], preferred_element_type=f32),
                sbm1_ref)                        # (M, c_) f32

    # bottleneck cv2 (3x3, zero padded): 9 shifted taps via sublane roll + mask,
    # lane-concat (im2col) and a single matmul against the (9c_, c_) stack.
    taps = []
    for i in range(3):
        di = i - 1
        for j in range(3):
            dj = j - 1
            k = di * W + dj
            hs = h if k == 0 else pltpu.roll(h, shift=(-k) % M, axis=0)
            conds = []
            if di < 0:
                conds.append(ri >= 1)            # needs row r-1 to exist
            if di > 0:
                conds.append(ri < H - 1)         # needs row r+1 to exist
            if dj < 0:
                conds.append(ci >= 1)
            if dj > 0:
                conds.append(ci < W - 1)
            if conds:
                ok = conds[0]
                for c in conds[1:]:
                    ok = jnp.logical_and(ok, c)
                hs = jnp.where(ok, hs, 0.0)      # zero padding contribution
            taps.append(hs)
    him = jnp.concatenate(taps, axis=-1).astype(bf16)      # (M, 9c_)
    b = bn_silu(jnp.dot(him, wm2_ref[...], preferred_element_type=f32),
                sbm2_ref)                        # (M, c_) f32

    # cv3 on concat([y1 + b, y2]) == [y1, y2, b] @ [w3a; w3b; w3a]
    zin = jnp.concatenate([y12, b], axis=-1).astype(bf16)  # (M, 3c_)
    z = bn_silu(jnp.dot(zin, w3_ref[...], preferred_element_type=f32),
                sb3_ref)                         # (M, C2) f32
    out_ref[0] = z.astype(out_ref.dtype)


# ----------------------------------------------------------------------------
# Wrapper
# ----------------------------------------------------------------------------
def c3_forward(x_nhwc, kp):
    """x_nhwc: (N, H, W, C1) float32. kp: packed kernel params. -> (N, H, W, C2)."""
    N, H, W, C1 = x_nhwc.shape
    M = H * W
    two_c = kp["w12"].shape[1]
    c_ = two_c // 2
    C2 = kp["sb_cv3"].shape[1]

    # flat spatial layout; bf16 activations for the MXU (in a full network the
    # activations would already be bf16)
    x_flat = x_nhwc.reshape(N, M, C1).astype(jnp.bfloat16)

    # flat row / column indices for the 3x3 border masks (built once, outside)
    ri = (jnp.arange(M, dtype=jnp.int32) // W).reshape(M, 1)
    ci = (jnp.arange(M, dtype=jnp.int32) % W).reshape(M, 1)

    full = lambda s: pl.BlockSpec(s, lambda n: (0,) * len(s))
    kernel = functools.partial(_c3_fused_kernel, H=H, W=W)

    out = pl.pallas_call(
        kernel,
        out_shape=jax.ShapeDtypeStruct((N, M, C2), jnp.float32),
        grid_spec=pltpu.PrefetchScalarGridSpec(
            num_scalar_prefetch=0,
            grid=(N,),
            in_specs=[
                pl.BlockSpec((1, M, C1), lambda n: (n, 0, 0)),
                full((M, 1)), full((M, 1)),
                full((C1, two_c)), full((2, two_c)),
                full((two_c, c_)), full((2, c_)),
                full((9 * c_, c_)), full((2, c_)),
                full((3 * c_, C2)), full((2, C2)),
            ],
            out_specs=pl.BlockSpec((1, M, C2), lambda n: (n, 0, 0))),
        compiler_params=pltpu.CompilerParams(
            dimension_semantics=("parallel",)),
    )(x_flat, ri, ci,
      kp["w12"], kp["sb12"], kp["w_m1p"], kp["sb_m1"],
      kp["w_m2"], kp["sb_m2"], kp["w_cv3s"], kp["sb_cv3"])
    return out.reshape(N, H, W, C2)


# ----------------------------------------------------------------------------
# Parameter construction (synthetic, BN folded) and kernel-side packing
# ----------------------------------------------------------------------------
def _folded_bn(key, c, eps=1e-3):
    k1, k2, k3, k4 = jax.random.split(key, 4)
    gamma = 1.0 + 0.1 * jax.random.normal(k1, (c,), jnp.float32)
    beta = 0.1 * jax.random.normal(k2, (c,), jnp.float32)
    mean = 0.1 * jax.random.normal(k3, (c,), jnp.float32)
    var = 0.5 + jnp.abs(jax.random.normal(k4, (c,), jnp.float32))
    scale = gamma / jnp.sqrt(var + eps)
    bias = beta - mean * scale
    return jnp.stack([scale, bias], axis=0)               # (2, c) f32


def make_c3_params(key, c1, c2, e=0.5):
    """Raw f32 parameters matching the PyTorch module (n=1, shortcut=True, g=1)."""
    c_ = int(c2 * e)
    ks = jax.random.split(key, 10)
    w = lambda k, shp: 0.2 * jax.random.normal(k, shp, jnp.float32)
    return {
        "w_cv1": w(ks[0], (c1, c_)),        "sb_cv1": _folded_bn(ks[1], c_),
        "w_cv2": w(ks[2], (c1, c_)),        "sb_cv2": _folded_bn(ks[3], c_),
        "w_m1":  w(ks[4], (c_, c_)),        "sb_m1":  _folded_bn(ks[5], c_),
        "w_m2":  w(ks[6], (3, 3, c_, c_)),  "sb_m2":  _folded_bn(ks[7], c_),
        "w_cv3": w(ks[8], (2 * c_, c2)),    "sb_cv3": _folded_bn(ks[9], c2),
    }


def pack_c3_params(p):
    """Merge / restack weights for the fused kernel; weights to bf16, BN in f32."""
    bf = lambda a: a.astype(jnp.bfloat16)
    c_ = p["w_cv1"].shape[1]
    w12 = jnp.concatenate([p["w_cv1"], p["w_cv2"]], axis=1)             # (C1, 2c_)
    sb12 = jnp.concatenate([p["sb_cv1"], p["sb_cv2"]], axis=1)          # (2, 2c_)
    w_m1p = jnp.concatenate([p["w_m1"], jnp.zeros_like(p["w_m1"])], 0)  # (2c_, c_)
    w_m2f = p["w_m2"].reshape(9 * c_, c_)                               # (9c_, c_)
    w_cv3s = jnp.concatenate([p["w_cv3"], p["w_cv3"][:c_]], axis=0)     # (3c_, C2)
    return {
        "w12": bf(w12), "sb12": sb12,
        "w_m1p": bf(w_m1p), "sb_m1": p["sb_m1"],
        "w_m2": bf(w_m2f), "sb_m2": p["sb_m2"],
        "w_cv3s": bf(w_cv3s), "sb_cv3": p["sb_cv3"],
    }


# ----------------------------------------------------------------------------
# Pure-JAX reference (same math via lax.conv) for a sanity check
# ----------------------------------------------------------------------------
def _cbs_ref(x, w_hwio, sb):
    y = jax.lax.conv_general_dilated(
        x, w_hwio, (1, 1), "SAME",
        dimension_numbers=("NHWC", "HWIO", "NHWC"),
        precision=jax.lax.Precision.HIGHEST)
    y = y * sb[0] + sb[1]
    return y * jax.nn.sigmoid(y)


def c3_reference(x, p):
    y1 = _cbs_ref(x, p["w_cv1"][None, None], p["sb_cv1"])
    y2 = _cbs_ref(x, p["w_cv2"][None, None], p["sb_cv2"])
    h = _cbs_ref(y1, p["w_m1"][None, None], p["sb_m1"])
    b = _cbs_ref(h, p["w_m2"], p["sb_m2"])
    m = y1 + b
    cat = jnp.concatenate([m, y2], axis=-1)
    return _cbs_ref(cat, p["w_cv3"][None, None], p["sb_cv3"])


if __name__ == "__main__":
    # small shapes consistent with the module: batch=2, c1=c2=8, H=W=16, n=1
    N, C1, C2, H, W = 2, 8, 8, 16, 16
    key = jax.random.PRNGKey(0)
    kx, kp_key = jax.random.split(key)

    x_nchw = jax.random.normal(kx, (N, C1, H, W), jnp.float32)  # PyTorch layout
    x = jnp.transpose(x_nchw, (0, 2, 3, 1))                     # -> NHWC

    raw = make_c3_params(kp_key, C1, C2, e=0.5)
    packed = pack_c3_params(raw)

    out = jax.block_until_ready(jax.jit(c3_forward)(x, packed))

    # reference uses the same bf16-rounded weights / input the kernel sees,
    # so the comparison isolates kernel math from bf16 weight quantisation
    ref_p = {k: (v.astype(jnp.bfloat16).astype(jnp.float32)
                 if k.startswith("w_") else v) for k, v in raw.items()}
    x_q = x.astype(jnp.bfloat16).astype(jnp.float32)
    ref = jax.block_until_ready(c3_reference(x_q, ref_p))

    assert out.shape == (N, H, W, C2)
    max_err = float(jnp.max(jnp.abs(out - ref)))
    assert jnp.allclose(out, ref, rtol=5e-2, atol=5e-2), \
        f"mismatch vs reference, max abs err {max_err}"
    print("KERNEL_OK")
</pallas_src>

<mosaic_0001>
module attributes {stable_mosaic.version = 11 : i64} {
  func.func @_c3_fused_kernel(%arg0: i32, %arg1: memref<1x256x8xbf16, #tpu.memory_space<vmem>>, %arg2: memref<256x1xi32, #tpu.memory_space<vmem>>, %arg3: memref<256x1xi32, #tpu.memory_space<vmem>>, %arg4: memref<8x8xbf16, #tpu.memory_space<vmem>>, %arg5: memref<2x8xf32, #tpu.memory_space<vmem>>, %arg6: memref<8x4xbf16, #tpu.memory_space<vmem>>, %arg7: memref<2x4xf32, #tpu.memory_space<vmem>>, %arg8: memref<36x4xbf16, #tpu.memory_space<vmem>>, %arg9: memref<2x4xf32, #tpu.memory_space<vmem>>, %arg10: memref<12x8xbf16, #tpu.memory_space<vmem>>, %arg11: memref<2x8xf32, #tpu.memory_space<vmem>>, %arg12: memref<1x256x8xf32, #tpu.memory_space<vmem>>) attributes {dimension_semantics = [#tpu.dimension_semantics<parallel>], iteration_bounds = array<i64: 2>, scalar_prefetch = 0 : i64, scratch_operands = 0 : i64, tpu.core_type = #tpu.core_type<tc>, window_params = [{transform_indices = @transform_0, window_bounds = array<i64: 1, 256, 8>}, {pipeline_mode = #tpu.pipeline_mode<synchronous>, transform_indices = @transform_1, window_bounds = array<i64: 256, 1>}, {pipeline_mode = #tpu.pipeline_mode<synchronous>, transform_indices = @transform_2, window_bounds = array<i64: 256, 1>}, {pipeline_mode = #tpu.pipeline_mode<synchronous>, transform_indices = @transform_3, window_bounds = array<i64: 8, 8>}, {pipeline_mode = #tpu.pipeline_mode<synchronous>, transform_indices = @transform_4, window_bounds = array<i64: 2, 8>}, {pipeline_mode = #tpu.pipeline_mode<synchronous>, transform_indices = @transform_5, window_bounds = array<i64: 8, 4>}, {pipeline_mode = #tpu.pipeline_mode<synchronous>, transform_indices = @transform_6, window_bounds = array<i64: 2, 4>}, {pipeline_mode = #tpu.pipeline_mode<synchronous>, transform_indices = @transform_7, window_bounds = array<i64: 36, 4>}, {pipeline_mode = #tpu.pipeline_mode<synchronous>, transform_indices = @transform_8, window_bounds = array<i64: 2, 4>}, {pipeline_mode = #tpu.pipeline_mode<synchronous>, transform_indices = @transform_9, window_bounds = array<i64: 12, 8>}, {pipeline_mode = #tpu.pipeline_mode<synchronous>, transform_indices = @transform_10, window_bounds = array<i64: 2, 8>}, {transform_indices = @transform_11, window_bounds = array<i64: 1, 256, 8>}]} {
    %c0 = arith.constant 0 : index
    %c0_0 = arith.constant 0 : index
    %c0_1 = arith.constant 0 : index
    %0 = vector.load %arg1[%c0, %c0_0, %c0_1] : memref<1x256x8xbf16, #tpu.memory_space<vmem>>, vector<1x256x8xbf16>
    %1 = vector.shape_cast %0 : vector<1x256x8xbf16> to vector<256x8xbf16>
    %c0_2 = arith.constant 0 : index
    %c0_3 = arith.constant 0 : index
    %2 = vector.load %arg2[%c0_2, %c0_3] : memref<256x1xi32, #tpu.memory_space<vmem>>, vector<256x1xi32>
    %c0_4 = arith.constant 0 : index
    %c0_5 = arith.constant 0 : index
    %3 = vector.load %arg3[%c0_4, %c0_5] : memref<256x1xi32, #tpu.memory_space<vmem>>, vector<256x1xi32>
    %c0_6 = arith.constant 0 : index
    %c0_7 = arith.constant 0 : index
    %4 = vector.load %arg4[%c0_6, %c0_7] : memref<8x8xbf16, #tpu.memory_space<vmem>>, vector<8x8xbf16>
    %cst = arith.constant dense<0.000000e+00> : vector<256x8xf32>
    %5 = tpu.matmul %1, %4, %cst {dimension_numbers = #tpu.dot_dimension_numbers<[1], [0], [0], [1], [0, 0, 1, 1], [], []>} : vector<256x8xbf16>, vector<8x8xbf16>, vector<256x8xf32> -> vector<256x8xf32>
    %c0_8 = arith.constant 0 : index
    %c0_9 = arith.constant 0 : index
    %6 = vector.load %arg5[%c0_8, %c0_9] : memref<2x8xf32, #tpu.memory_space<vmem>>, vector<1x8xf32>
    %7 = vector.broadcast %6 : vector<1x8xf32> to vector<256x8xf32>
    %8 = arith.mulf %5, %7 : vector<256x8xf32>
    %c1 = arith.constant 1 : index
    %c0_10 = arith.constant 0 : index
    %9 = vector.load %arg5[%c1, %c0_10] : memref<2x8xf32, #tpu.memory_space<vmem>>, vector<1x8xf32>
    %10 = vector.broadcast %9 : vector<1x8xf32> to vector<256x8xf32>
    %11 = arith.addf %8, %10 : vector<256x8xf32>
    %cst_11 = arith.constant 0.000000e+00 : f32
    %12 = vector.broadcast %cst_11 : f32 to vector<256x8xf32>
    %13 = arith.subf %12, %11 : vector<256x8xf32>
    %14 = math.exp %13 : vector<256x8xf32>
    %cst_12 = arith.constant 1.000000e+00 : f32
    %15 = vector.broadcast %cst_12 : f32 to vector<256x8xf32>
    %16 = arith.addf %15, %14 : vector<256x8xf32>
    %17 = tpu.reciprocal %16 {approx = true} : vector<256x8xf32> -> vector<256x8xf32>
    %18 = arith.mulf %11, %17 : vector<256x8xf32>
    %19 = arith.truncf %18 : vector<256x8xf32> to vector<256x8xbf16>
    %c0_13 = arith.constant 0 : index
    %c0_14 = arith.constant 0 : index
    %20 = vector.load %arg6[%c0_13, %c0_14] : memref<8x4xbf16, #tpu.memory_space<vmem>>, vector<8x4xbf16>
    %cst_15 = arith.constant dense<0.000000e+00> : vector<256x4xf32>
    %21 = tpu.matmul %19, %20, %cst_15 {dimension_numbers = #tpu.dot_dimension_numbers<[1], [0], [0], [1], [0, 0, 1, 1], [], []>} : vector<256x8xbf16>, vector<8x4xbf16>, vector<256x4xf32> -> vector<256x4xf32>
    %c0_16 = arith.constant 0 : index
    %c0_17 = arith.constant 0 : index
    %22 = vector.load %arg7[%c0_16, %c0_17] : memref<2x4xf32, #tpu.memory_space<vmem>>, vector<1x4xf32>
    %23 = vector.broadcast %22 : vector<1x4xf32> to vector<256x4xf32>
    %24 = arith.mulf %21, %23 : vector<256x4xf32>
    %c1_18 = arith.constant 1 : index
    %c0_19 = arith.constant 0 : index
    %25 = vector.load %arg7[%c1_18, %c0_19] : memref<2x4xf32, #tpu.memory_space<vmem>>, vector<1x4xf32>
    %26 = vector.broadcast %25 : vector<1x4xf32> to vector<256x4xf32>
    %27 = arith.addf %24, %26 : vector<256x4xf32>
    %cst_20 = arith.constant 0.000000e+00 : f32
    %28 = vector.broadcast %cst_20 : f32 to vector<256x4xf32>
    %29 = arith.subf %28, %27 : vector<256x4xf32>
    %30 = math.exp %29 : vector<256x4xf32>
    %cst_21 = arith.constant 1.000000e+00 : f32
    %31 = vector.broadcast %cst_21 : f32 to vector<256x4xf32>
    %32 = arith.addf %31, %30 : vector<256x4xf32>
    %33 = tpu.reciprocal %32 {approx = true} : vector<256x4xf32> -> vector<256x4xf32>
    %34 = arith.mulf %27, %33 : vector<256x4xf32>
    %c17_i32 = arith.constant 17 : i32
    %35 = tpu.dynamic_rotate %34 by %c17_i32 dim 0 : vector<256x4xf32>, i32 -> vector<256x4xf32>
    %c1_i32 = arith.constant 1 : i32
    %36 = vector.broadcast %c1_i32 : i32 to vector<256x1xi32>
    %37 = arith.cmpi sge, %2, %36 : vector<256x1xi32>
    %c1_i32_22 = arith.constant 1 : i32
    %38 = vector.broadcast %c1_i32_22 : i32 to vector<256x1xi32>
    %39 = arith.cmpi sge, %3, %38 : vector<256x1xi32>
    %40 = arith.andi %37, %39 : vector<256x1xi1>
    %cst_23 = arith.constant 0.000000e+00 : f32
    %41 = vector.shape_cast %40 : vector<256x1xi1> to vector<256x1xi1>
    %42 = vector.broadcast %41 : vector<256x1xi1> to vector<256x4xi1>
    %43 = vector.broadcast %cst_23 : f32 to vector<256x4xf32>
    %44 = arith.select %42, %35, %43 : vector<256x4xi1>, vector<256x4xf32>
    %c16_i32 = arith.constant 16 : i32
    %45 = tpu.dynamic_rotate %34 by %c16_i32 dim 0 : vector<256x4xf32>, i32 -> vector<256x4xf32>
    %c1_i32_24 = arith.constant 1 : i32
    %46 = vector.broadcast %c1_i32_24 : i32 to vector<256x1xi32>
    %47 = arith.cmpi sge, %2, %46 : vector<256x1xi32>
    %cst_25 = arith.constant 0.000000e+00 : f32
    %48 = vector.shape_cast %47 : vector<256x1xi1> to vector<256x1xi1>
    %49 = vector.broadcast %48 : vector<256x1xi1> to vector<256x4xi1>
    %50 = vector.broadcast %cst_25 : f32 to vector<256x4xf32>
    %51 = arith.select %49, %45, %50 : vector<256x4xi1>, vector<256x4xf32>
    %c15_i32 = arith.constant 15 : i32
    %52 = tpu.dynamic_rotate %34 by %c15_i32 dim 0 : vector<256x4xf32>, i32 -> vector<256x4xf32>
    %c1_i32_26 = arith.constant 1 : i32
    %53 = vector.broadcast %c1_i32_26 : i32 to vector<256x1xi32>
    %54 = arith.cmpi sge, %2, %53 : vector<256x1xi32>
    %c15_i32_27 = arith.constant 15 : i32
    %55 = vector.broadcast %c15_i32_27 : i32 to vector<256x1xi32>
    %56 = arith.cmpi slt, %3, %55 : vector<256x1xi32>
    %57 = arith.andi %54, %56 : vector<256x1xi1>
    %cst_28 = arith.constant 0.000000e+00 : f32
    %58 = vector.shape_cast %57 : vector<256x1xi1> to vector<256x1xi1>
    %59 = vector.broadcast %58 : vector<256x1xi1> to vector<256x4xi1>
    %60 = vector.broadcast %cst_28 : f32 to vector<256x4xf32>
    %61 = arith.select %59, %52, %60 : vector<256x4xi1>, vector<256x4xf32>
    %c1_i32_29 = arith.constant 1 : i32
    %62 = tpu.dynamic_rotate %34 by %c1_i32_29 dim 0 : vector<256x4xf32>, i32 -> vector<256x4xf32>
    %c1_i32_30 = arith.constant 1 : i32
    %63 = vector.broadcast %c1_i32_30 : i32 to vector<256x1xi32>
    %64 = arith.cmpi sge, %3, %63 : vector<256x1xi32>
    %cst_31 = arith.constant 0.000000e+00 : f32
    %65 = vector.shape_cast %64 : vector<256x1xi1> to vector<256x1xi1>
    %66 = vector.broadcast %65 : vector<256x1xi1> to vector<256x4xi1>
    %67 = vector.broadcast %cst_31 : f32 to vector<256x4xf32>
    %68 = arith.select %66, %62, %67 : vector<256x4xi1>, vector<256x4xf32>
    %c255_i32 = arith.constant 255 : i32
    %69 = tpu.dynamic_rotate %34 by %c255_i32 dim 0 : vector<256x4xf32>, i32 -> vector<256x4xf32>
    %c15_i32_32 = arith.constant 15 : i32
    %70 = vector.broadcast %c15_i32_32 : i32 to vector<256x1xi32>
    %71 = arith.cmpi slt, %3, %70 : vector<256x1xi32>
    %cst_33 = arith.constant 0.000000e+00 : f32
    %72 = vector.shape_cast %71 : vector<256x1xi1> to vector<256x1xi1>
    %73 = vector.broadcast %72 : vector<256x1xi1> to vector<256x4xi1>
    %74 = vector.broadcast %cst_33 : f32 to vector<256x4xf32>
    %75 = arith.select %73, %69, %74 : vector<256x4xi1>, vector<256x4xf32>
    %c241_i32 = arith.constant 241 : i32
    %76 = tpu.dynamic_rotate %34 by %c241_i32 dim 0 : vector<256x4xf32>, i32 -> vector<256x4xf32>
    %c15_i32_34 = arith.constant 15 : i32
    %77 = vector.broadcast %c15_i32_34 : i32 to vector<256x1xi32>
    %78 = arith.cmpi slt, %2, %77 : vector<256x1xi32>
    %c1_i32_35 = arith.constant 1 : i32
    %79 = vector.broadcast %c1_i32_35 : i32 to vector<256x1xi32>
    %80 = arith.cmpi sge, %3, %79 : vector<256x1xi32>
    %81 = arith.andi %78, %80 : vector<256x1xi1>
    %cst_36 = arith.constant 0.000000e+00 : f32
    %82 = vector.shape_cast %81 : vector<256x1xi1> to vector<256x1xi1>
    %83 = vector.broadcast %82 : vector<256x1xi1> to vector<256x4xi1>
    %84 = vector.broadcast %cst_36 : f32 to vector<256x4xf32>
    %85 = arith.select %83, %76, %84 : vector<256x4xi1>, vector<256x4xf32>
    %c240_i32 = arith.constant 240 : i32
    %86 = tpu.dynamic_rotate %34 by %c240_i32 dim 0 : vector<256x4xf32>, i32 -> vector<256x4xf32>
    %c15_i32_37 = arith.constant 15 : i32
    %87 = vector.broadcast %c15_i32_37 : i32 to vector<256x1xi32>
    %88 = arith.cmpi slt, %2, %87 : vector<256x1xi32>
    %cst_38 = arith.constant 0.000000e+00 : f32
    %89 = vector.shape_cast %88 : vector<256x1xi1> to vector<256x1xi1>
    %90 = vector.broadcast %89 : vector<256x1xi1> to vector<256x4xi1>
    %91 = vector.broadcast %cst_38 : f32 to vector<256x4xf32>
    %92 = arith.select %90, %86, %91 : vector<256x4xi1>, vector<256x4xf32>
    %c239_i32 = arith.constant 239 : i32
    %93 = tpu.dynamic_rotate %34 by %c239_i32 dim 0 : vector<256x4xf32>, i32 -> vector<256x4xf32>
    %c15_i32_39 = arith.constant 15 : i32
    %94 = vector.broadcast %c15_i32_39 : i32 to vector<256x1xi32>
    %95 = arith.cmpi slt, %2, %94 : vector<256x1xi32>
    %c15_i32_40 = arith.constant 15 : i32
    %96 = vector.broadcast %c15_i32_40 : i32 to vector<256x1xi32>
    %97 = arith.cmpi slt, %3, %96 : vector<256x1xi32>
    %98 = arith.andi %95, %97 : vector<256x1xi1>
    %cst_41 = arith.constant 0.000000e+00 : f32
    %99 = vector.shape_cast %98 : vector<256x1xi1> to vector<256x1xi1>
    %100 = vector.broadcast %99 : vector<256x1xi1> to vector<256x4xi1>
    %101 = vector.broadcast %cst_41 : f32 to vector<256x4xf32>
    %102 = arith.select %100, %93, %101 : vector<256x4xi1>, vector<256x4xf32>
    %103 = tpu.concatenate %44, %51, %61, %68, %34, %75, %85, %92, %102 in 1 : vector<256x4xf32>, vector<256x4xf32>, vector<256x4xf32>, vector<256x4xf32>, vector<256x4xf32>, vector<256x4xf32>, vector<256x4xf32>, vector<256x4xf32>, vector<256x4xf32> -> vector<256x36xf32>
    %104 = arith.truncf %103 : vector<256x36xf32> to vector<256x36xbf16>
    %c0_42 = arith.constant 0 : index
    %c0_43 = arith.constant 0 : index
    %105 = vector.load %arg8[%c0_42, %c0_43] : memref<36x4xbf16, #tpu.memory_space<vmem>>, vector<36x4xbf16>
    %cst_44 = arith.constant dense<0.000000e+00> : vector<256x4xf32>
    %106 = tpu.matmul %104, %105, %cst_44 {dimension_numbers = #tpu.dot_dimension_numbers<[1], [0], [0], [1], [0, 0, 1, 1], [], []>} : vector<256x36xbf16>, vector<36x4xbf16>, vector<256x4xf32> -> vector<256x4xf32>
    %c0_45 = arith.constant 0 : index
    %c0_46 = arith.constant 0 : index
    %107 = vector.load %arg9[%c0_45, %c0_46] : memref<2x4xf32, #tpu.memory_space<vmem>>, vector<1x4xf32>
    %108 = vector.broadcast %107 : vector<1x4xf32> to vector<256x4xf32>
    %109 = arith.mulf %106, %108 : vector<256x4xf32>
    %c1_47 = arith.constant 1 : index
    %c0_48 = arith.constant 0 : index
    %110 = vector.load %arg9[%c1_47, %c0_48] : memref<2x4xf32, #tpu.memory_space<vmem>>, vector<1x4xf32>
    %111 = vector.broadcast %110 : vector<1x4xf32> to vector<256x4xf32>
    %112 = arith.addf %109, %111 : vector<256x4xf32>
    %cst_49 = arith.constant 0.000000e+00 : f32
    %113 = vector.broadcast %cst_49 : f32 to vector<256x4xf32>
    %114 = arith.subf %113, %112 : vector<256x4xf32>
    %115 = math.exp %114 : vector<256x4xf32>
    %cst_50 = arith.constant 1.000000e+00 : f32
    %116 = vector.broadcast %cst_50 : f32 to vector<256x4xf32>
    %117 = arith.addf %116, %115 : vector<256x4xf32>
    %118 = tpu.reciprocal %117 {approx = true} : vector<256x4xf32> -> vector<256x4xf32>
    %119 = arith.mulf %112, %118 : vector<256x4xf32>
    %120 = tpu.concatenate %18, %119 in 1 : vector<256x8xf32>, vector<256x4xf32> -> vector<256x12xf32>
    %121 = arith.truncf %120 : vector<256x12xf32> to vector<256x12xbf16>
    %c0_51 = arith.constant 0 : index
    %c0_52 = arith.constant 0 : index
    %122 = vector.load %arg10[%c0_51, %c0_52] : memref<12x8xbf16, #tpu.memory_space<vmem>>, vector<12x8xbf16>
    %cst_53 = arith.constant dense<0.000000e+00> : vector<256x8xf32>
    %123 = tpu.matmul %121, %122, %cst_53 {dimension_numbers = #tpu.dot_dimension_numbers<[1], [0], [0], [1], [0, 0, 1, 1], [], []>} : vector<256x12xbf16>, vector<12x8xbf16>, vector<256x8xf32> -> vector<256x8xf32>
    %c0_54 = arith.constant 0 : index
    %c0_55 = arith.constant 0 : index
    %124 = vector.load %arg11[%c0_54, %c0_55] : memref<2x8xf32, #tpu.memory_space<vmem>>, vector<1x8xf32>
    %125 = vector.broadcast %124 : vector<1x8xf32> to vector<256x8xf32>
    %126 = arith.mulf %123, %125 : vector<256x8xf32>
    %c1_56 = arith.constant 1 : index
    %c0_57 = arith.constant 0 : index
    %127 = vector.load %arg11[%c1_56, %c0_57] : memref<2x8xf32, #tpu.memory_space<vmem>>, vector<1x8xf32>
    %128 = vector.broadcast %127 : vector<1x8xf32> to vector<256x8xf32>
    %129 = arith.addf %126, %128 : vector<256x8xf32>
    %cst_58 = arith.constant 0.000000e+00 : f32
    %130 = vector.broadcast %cst_58 : f32 to vector<256x8xf32>
    %131 = arith.subf %130, %129 : vector<256x8xf32>
    %132 = math.exp %131 : vector<256x8xf32>
    %cst_59 = arith.constant 1.000000e+00 : f32
    %133 = vector.broadcast %cst_59 : f32 to vector<256x8xf32>
    %134 = arith.addf %133, %132 : vector<256x8xf32>
    %135 = tpu.reciprocal %134 {approx = true} : vector<256x8xf32> -> vector<256x8xf32>
    %136 = arith.mulf %129, %135 : vector<256x8xf32>
    %c0_60 = arith.constant 0 : index
    %c0_61 = arith.constant 0 : index
    %c0_62 = arith.constant 0 : index
    %137 = vector.load %arg12[%c0_60, %c0_61, %c0_62] : memref<1x256x8xf32, #tpu.memory_space<vmem>>, vector<1x256x8xf32>
    %138 = vector.shape_cast %137 : vector<1x256x8xf32> to vector<256x8xf32>
    %139 = vector.shape_cast %136 : vector<256x8xf32> to vector<1x256x8xf32>
    tpu.vector_store %arg12[%c0_60, %c0_61, %c0_62], %139 {strides = array<i32>} : memref<1x256x8xf32, #tpu.memory_space<vmem>>, vector<1x256x8xf32>,
    return
  }
  func.func @transform_0(%arg0: i32) -> (i32, i32, i32) {
    %c0_i32 = arith.constant 0 : i32
    %c0_i32_0 = arith.constant 0 : i32
    %c0_i32_1 = arith.constant 0 : i32
    return %arg0, %c0_i32, %c0_i32_0 : i32, i32, i32
  }
  func.func @transform_1(%arg0: i32) -> (i32, i32) {
    %c0_i32 = arith.constant 0 : i32
    %c0_i32_0 = arith.constant 0 : i32
    %c0_i32_1 = arith.constant 0 : i32
    return %c0_i32, %c0_i32_0 : i32, i32
  }
  func.func @transform_2(%arg0: i32) -> (i32, i32) {
    %c0_i32 = arith.constant 0 : i32
    %c0_i32_0 = arith.constant 0 : i32
    %c0_i32_1 = arith.constant 0 : i32
    return %c0_i32, %c0_i32_0 : i32, i32
  }
  func.func @transform_3(%arg0: i32) -> (i32, i32) {
    %c0_i32 = arith.constant 0 : i32
    %c0_i32_0 = arith.constant 0 : i32
    %c0_i32_1 = arith.constant 0 : i32
    return %c0_i32, %c0_i32_0 : i32, i32
  }
  func.func @transform_4(%arg0: i32) -> (i32, i32) {
    %c0_i32 = arith.constant 0 : i32
    %c0_i32_0 = arith.constant 0 : i32
    %c0_i32_1 = arith.constant 0 : i32
    return %c0_i32, %c0_i32_0 : i32, i32
  }
  func.func @transform_5(%arg0: i32) -> (i32, i32) {
    %c0_i32 = arith.constant 0 : i32
    %c0_i32_0 = arith.constant 0 : i32
    %c0_i32_1 = arith.constant 0 : i32
    return %c0_i32, %c0_i32_0 : i32, i32
  }
  func.func @transform_6(%arg0: i32) -> (i32, i32) {
    %c0_i32 = arith.constant 0 : i32
    %c0_i32_0 = arith.constant 0 : i32
    %c0_i32_1 = arith.constant 0 : i32
    return %c0_i32, %c0_i32_0 : i32, i32
  }
  func.func @transform_7(%arg0: i32) -> (i32, i32) {
    %c0_i32 = arith.constant 0 : i32
    %c0_i32_0 = arith.constant 0 : i32
    %c0_i32_1 = arith.constant 0 : i32
    return %c0_i32, %c0_i32_0 : i32, i32
  }
  func.func @transform_8(%arg0: i32) -> (i32, i32) {
    %c0_i32 = arith.constant 0 : i32
    %c0_i32_0 = arith.constant 0 : i32
    %c0_i32_1 = arith.constant 0 : i32
    return %c0_i32, %c0_i32_0 : i32, i32
  }
  func.func @transform_9(%arg0: i32) -> (i32, i32) {
    %c0_i32 = arith.constant 0 : i32
    %c0_i32_0 = arith.constant 0 : i32
    %c0_i32_1 = arith.constant 0 : i32
    return %c0_i32, %c0_i32_0 : i32, i32
  }
  func.func @transform_10(%arg0: i32) -> (i32, i32) {
    %c0_i32 = arith.constant 0 : i32
    %c0_i32_0 = arith.constant 0 : i32
    %c0_i32_1 = arith.constant 0 : i32
    return %c0_i32, %c0_i32_0 : i32, i32
  }
  func.func @transform_11(%arg0: i32) -> (i32, i32, i32) {
    %c0_i32 = arith.constant 0 : i32
    %c0_i32_0 = arith.constant 0 : i32
    %c0_i32_1 = arith.constant 0 : i32
    return %arg0, %c0_i32, %c0_i32_0 : i32, i32, i32
  }
}

</mosaic_0001>

<llo_original>
// kernel: c3_forward.1
$region0: #{c3_forward.1}
  #allocation0 [shape = 'u32[]', space=smem, size = 0x4, offset = 0x4, fixed_abs, tag = 'smem constant byte address 0x4 - core index']
  #allocation1 [shape = 'u32[144,128]{1,0:T(1,128)}', space=vmem, size = 0x12000, scoped, tag = 'internal scratch']
  %s0 = inlined_call_operand.vmem [shape: bf16[2,256,8], index: 0, kind: input, shape index: {}]
  %s1 = inlined_call_operand.vmem [shape: s32[256,1], index: 1, kind: input, shape index: {}]
  %s2 = inlined_call_operand.vmem [shape: s32[256,1], index: 2, kind: input, shape index: {}]
  %s3 = inlined_call_operand.vmem [shape: bf16[8,8], index: 3, kind: input, shape index: {}]
  %s4 = inlined_call_operand.vmem [shape: f32[2,8], index: 4, kind: input, shape index: {}]
  %s5 = inlined_call_operand.vmem [shape: bf16[8,4], index: 5, kind: input, shape index: {}]
  %s6 = inlined_call_operand.vmem [shape: f32[2,4], index: 6, kind: input, shape index: {}]
  %s7 = inlined_call_operand.vmem [shape: bf16[36,4], index: 7, kind: input, shape index: {}]
  %s8 = inlined_call_operand.vmem [shape: f32[2,4], index: 8, kind: input, shape index: {}]
  %s9 = inlined_call_operand.vmem [shape: bf16[12,8], index: 9, kind: input, shape index: {}]
  %s10 = inlined_call_operand.vmem [shape: f32[2,8], index: 10, kind: input, shape index: {}]
  %s11 = inlined_call_operand.vmem [shape: f32[2,256,8], index: 11, kind: output, shape index: {}]
  %s12 = sld [smem:[#allocation0]]
  $region77: #{c3_forward.1} parent=0
    _
  %s14 = ssub.s32 1, %s12
  %s15 = scalar_select 0, %s14, %s12
  loop: start=0, step=1, limit=4
  $region2: #{c3_forward.1} parent=0 // loop_pre_header
    _
  $region3: #{c3_forward.1} parent=0 // loop_header
    %s17 = sphi 0, %s21
    %p18 = scmp.ge.s32.totalorder %s17, 4
    %s27 = sphi 0, %s29
    %s30 = sphi 0, %s27
    %s31 = sphi 0, %s30
    %s47 = sphi 0, %s31
    %s51 = sphi 0, %s51
    %s53 = sphi 0, %s51
    %s54 = sphi 0, %s53
    %s68 = sphi 0, %s54
    %s72 = sphi 0, %s72
    %s74 = sphi 0, %s72
    %s75 = sphi 0, %s74
    %s89 = sphi 0, %s75
    %s93 = sphi 0, %s93
    %s95 = sphi 0, %s93
    %s96 = sphi 0, %s95
    %s110 = sphi 0, %s96
    %s114 = sphi 0, %s114
    %s116 = sphi 0, %s114
    %s117 = sphi 0, %s116
    %s131 = sphi 0, %s117
    %s135 = sphi 0, %s135
    %s137 = sphi 0, %s135
    %s138 = sphi 0, %s137
    %s152 = sphi 0, %s138
    %s156 = sphi 0, %s156
    %s158 = sphi 0, %s156
    %s159 = sphi 0, %s158
    %s173 = sphi 0, %s159
    %s177 = sphi 0, %s177
    %s179 = sphi 0, %s177
    %s180 = sphi 0, %s179
    %s194 = sphi 0, %s180
    %s198 = sphi 0, %s198
    %s200 = sphi 0, %s198
    %s201 = sphi 0, %s200
    %s215 = sphi 0, %s201
    %s219 = sphi 0, %s219
    %s221 = sphi 0, %s219
    %s222 = sphi 0, %s221
    %s236 = sphi 0, %s222
    %s240 = sphi 0, %s240
    %s242 = sphi 0, %s240
    %s243 = sphi 0, %s242
    %s257 = sphi 0, %s243
    %s263 = sphi 0, %s265
    %s266 = sphi 0, %s263
    %s267 = sphi 0, %s266
    %s283 = sphi 0, %s267
  $region4: #{c3_forward.1} parent=0 // loop_header_branch
    %20 = sbr.rel (%p18) target = $region8
  $region5: #{c3_forward.1} parent=0 // loop_body
    %s22 = ssub.s32 %s17, 1
    %s23 = ssub.s32 %s17, 2
    %s24 = sadd.s32 %s17, 1
    %s25 = ssub.s32 %s17, %s24
    %p26 = scmp.eq.s32.totalorder %s25, 0
    %s28 = sadd.s32 %s27, 1
    %s29 = scalar_select %p26, %s27, %s28
    %p32 = pneg %p26
    %p33 = scmp.eq.s32.totalorder %s17, 1
    %p34 = por %p32, %p33
    %p35 = scmp.ne.s32.totalorder %s27, %s30
    %p36 = scmp.eq.s32.totalorder %s17, 0
    %p37 = por %p35, %p36
    %p38 = scmp.ne.s32.totalorder %s27, %s30
    %p39 = scmp.eq.s32.totalorder %s22, 1
    %p40 = por %p38, %p39
    %p41 = scmp.ne.s32.totalorder %s30, %s31
    %p42 = scmp.eq.s32.totalorder %s22, 0
    %p43 = por %p41, %p42
    %p44 = scmp.ne.s32.totalorder %s30, %s31
    %p45 = scmp.eq.s32.totalorder %s23, 1
    %p46 = por %p44, %p45
    %p48 = scmp.ne.s32.totalorder %s31, %s47
    %p49 = scmp.eq.s32.totalorder %s23, 0
    %p50 = por %p48, %p49
    %s52 = sadd.s32 %s51, 1
    %p55 = scmp.eq.s32.totalorder %s17, 1
    %p56 = scmp.ne.s32.totalorder %s51, %s53
    %p57 = scmp.eq.s32.totalorder %s17, 0
    %p58 = por %p56, %p57
    %p59 = scmp.ne.s32.totalorder %s51, %s53
    %p60 = scmp.eq.s32.totalorder %s22, 1
    %p61 = por %p59, %p60
    %p62 = scmp.ne.s32.totalorder %s53, %s54
    %p63 = scmp.eq.s32.totalorder %s22, 0
    %p64 = por %p62, %p63
    %p65 = scmp.ne.s32.totalorder %s53, %s54
    %p66 = scmp.eq.s32.totalorder %s23, 1
    %p67 = por %p65, %p66
    %p69 = scmp.ne.s32.totalorder %s54, %s68
    %p70 = scmp.eq.s32.totalorder %s23, 0
    %p71 = por %p69, %p70
    %s73 = sadd.s32 %s72, 1
    %p76 = scmp.eq.s32.totalorder %s17, 1
    %p77 = scmp.ne.s32.totalorder %s72, %s74
    %p78 = scmp.eq.s32.totalorder %s17, 0
    %p79 = por %p77, %p78
    %p80 = scmp.ne.s32.totalorder %s72, %s74
    %p81 = scmp.eq.s32.totalorder %s22, 1
    %p82 = por %p80, %p81
    %p83 = scmp.ne.s32.totalorder %s74, %s75
    %p84 = scmp.eq.s32.totalorder %s22, 0
    %p85 = por %p83, %p84
    %p86 = scmp.ne.s32.totalorder %s74, %s75
    %p87 = scmp.eq.s32.totalorder %s23, 1
    %p88 = por %p86, %p87
    %p90 = scmp.ne.s32.totalorder %s75, %s89
    %p91 = scmp.eq.s32.totalorder %s23, 0
    %p92 = por %p90, %p91
    %s94 = sadd.s32 %s93, 1
    %p97 = scmp.eq.s32.totalorder %s17, 1
    %p98 = scmp.ne.s32.totalorder %s93, %s95
    %p99 = scmp.eq.s32.totalorder %s17, 0
    %p100 = por %p98, %p99
    %p101 = scmp.ne.s32.totalorder %s93, %s95
    %p102 = scmp.eq.s32.totalorder %s22, 1
    %p103 = por %p101, %p102
    %p104 = scmp.ne.s32.totalorder %s95, %s96
    %p105 = scmp.eq.s32.totalorder %s22, 0
    %p106 = por %p104, %p105
    %p107 = scmp.ne.s32.totalorder %s95, %s96
    %p108 = scmp.eq.s32.totalorder %s23, 1
    %p109 = por %p107, %p108
    %p111 = scmp.ne.s32.totalorder %s96, %s110
    %p112 = scmp.eq.s32.totalorder %s23, 0
    %p113 = por %p111, %p112
    %s115 = sadd.s32 %s114, 1
    %p118 = scmp.eq.s32.totalorder %s17, 1
    %p119 = scmp.ne.s32.totalorder %s114, %s116
    %p120 = scmp.eq.s32.totalorder %s17, 0
    %p121 = por %p119, %p120
    %p122 = scmp.ne.s32.totalorder %s114, %s116
    %p123 = scmp.eq.s32.totalorder %s22, 1
    %p124 = por %p122, %p123
    %p125 = scmp.ne.s32.totalorder %s116, %s117
    %p126 = scmp.eq.s32.totalorder %s22, 0
    %p127 = por %p125, %p126
    %p128 = scmp.ne.s32.totalorder %s116, %s117
    %p129 = scmp.eq.s32.totalorder %s23, 1
    %p130 = por %p128, %p129
    %p132 = scmp.ne.s32.totalorder %s117, %s131
    %p133 = scmp.eq.s32.totalorder %s23, 0
    %p134 = por %p132, %p133
    %s136 = sadd.s32 %s135, 1
    %p139 = scmp.eq.s32.totalorder %s17, 1
    %p140 = scmp.ne.s32.totalorder %s135, %s137
    %p141 = scmp.eq.s32.totalorder %s17, 0
    %p142 = por %p140, %p141
    %p143 = scmp.ne.s32.totalorder %s135, %s137
    %p144 = scmp.eq.s32.totalorder %s22, 1
    %p145 = por %p143, %p144
    %p146 = scmp.ne.s32.totalorder %s137, %s138
    %p147 = scmp.eq.s32.totalorder %s22, 0
    %p148 = por %p146, %p147
    %p149 = scmp.ne.s32.totalorder %s137, %s138
    %p150 = scmp.eq.s32.totalorder %s23, 1
    %p151 = por %p149, %p150
    %p153 = scmp.ne.s32.totalorder %s138, %s152
    %p154 = scmp.eq.s32.totalorder %s23, 0
    %p155 = por %p153, %p154
    %s157 = sadd.s32 %s156, 1
    %p160 = scmp.eq.s32.totalorder %s17, 1
    %p161 = scmp.ne.s32.totalorder %s156, %s158
    %p162 = scmp.eq.s32.totalorder %s17, 0
    %p163 = por %p161, %p162
    %p164 = scmp.ne.s32.totalorder %s156, %s158
    %p165 = scmp.eq.s32.totalorder %s22, 1
    %p166 = por %p164, %p165
    %p167 = scmp.ne.s32.totalorder %s158, %s159
    %p168 = scmp.eq.s32.totalorder %s22, 0
    %p169 = por %p167, %p168
    %p170 = scmp.ne.s32.totalorder %s158, %s159
    %p171 = scmp.eq.s32.totalorder %s23, 1
    %p172 = por %p170, %p171
    %p174 = scmp.ne.s32.totalorder %s159, %s173
    %p175 = scmp.eq.s32.totalorder %s23, 0
    %p176 = por %p174, %p175
    %s178 = sadd.s32 %s177, 1
    %p181 = scmp.eq.s32.totalorder %s17, 1
    %p182 = scmp.ne.s32.totalorder %s177, %s179
    %p183 = scmp.eq.s32.totalorder %s17, 0
    %p184 = por %p182, %p183
    %p185 = scmp.ne.s32.totalorder %s177, %s179
    %p186 = scmp.eq.s32.totalorder %s22, 1
    %p187 = por %p185, %p186
    %p188 = scmp.ne.s32.totalorder %s179, %s180
    %p189 = scmp.eq.s32.totalorder %s22, 0
    %p190 = por %p188, %p189
    %p191 = scmp.ne.s32.totalorder %s179, %s180
    %p192 = scmp.eq.s32.totalorder %s23, 1
    %p193 = por %p191, %p192
    %p195 = scmp.ne.s32.totalorder %s180, %s194
    %p196 = scmp.eq.s32.totalorder %s23, 0
    %p197 = por %p195, %p196
    %s199 = sadd.s32 %s198, 1
    %p202 = scmp.eq.s32.totalorder %s17, 1
    %p203 = scmp.ne.s32.totalorder %s198, %s200
    %p204 = scmp.eq.s32.totalorder %s17, 0
    %p205 = por %p203, %p204
    %p206 = scmp.ne.s32.totalorder %s198, %s200
    %p207 = scmp.eq.s32.totalorder %s22, 1
    %p208 = por %p206, %p207
    %p209 = scmp.ne.s32.totalorder %s200, %s201
    %p210 = scmp.eq.s32.totalorder %s22, 0
    %p211 = por %p209, %p210
    %p212 = scmp.ne.s32.totalorder %s200, %s201
    %p213 = scmp.eq.s32.totalorder %s23, 1
    %p214 = por %p212, %p213
    %p216 = scmp.ne.s32.totalorder %s201, %s215
    %p217 = scmp.eq.s32.totalorder %s23, 0
    %p218 = por %p216, %p217
    %s220 = sadd.s32 %s219, 1
    %p223 = scmp.eq.s32.totalorder %s17, 1
    %p224 = scmp.ne.s32.totalorder %s219, %s221
    %p225 = scmp.eq.s32.totalorder %s17, 0
    %p226 = por %p224, %p225
    %p227 = scmp.ne.s32.totalorder %s219, %s221
    %p228 = scmp.eq.s32.totalorder %s22, 1
    %p229 = por %p227, %p228
    %p230 = scmp.ne.s32.totalorder %s221, %s222
    %p231 = scmp.eq.s32.totalorder %s22, 0
    %p232 = por %p230, %p231
    %p233 = scmp.ne.s32.totalorder %s221, %s222
    %p234 = scmp.eq.s32.totalorder %s23, 1
    %p235 = por %p233, %p234
    %p237 = scmp.ne.s32.totalorder %s222, %s236
    %p238 = scmp.eq.s32.totalorder %s23, 0
    %p239 = por %p237, %p238
    %s241 = sadd.s32 %s240, 1
    %p244 = scmp.eq.s32.totalorder %s17, 1
    %p245 = scmp.ne.s32.totalorder %s240, %s242
    %p246 = scmp.eq.s32.totalorder %s17, 0
    %p247 = por %p245, %p246
    %p248 = scmp.ne.s32.totalorder %s240, %s242
    %p249 = scmp.eq.s32.totalorder %s22, 1
    %p250 = por %p248, %p249
    %p251 = scmp.ne.s32.totalorder %s242, %s243
    %p252 = scmp.eq.s32.totalorder %s22, 0
    %p253 = por %p251, %p252
    %p254 = scmp.ne.s32.totalorder %s242, %s243
    %p255 = scmp.eq.s32.totalorder %s23, 1
    %p256 = por %p254, %p255
    %p258 = scmp.ne.s32.totalorder %s243, %s257
    %p259 = scmp.eq.s32.totalorder %s23, 0
    %p260 = por %p258, %p259
    %s261 = ssub.s32 %s17, %s24
    %p262 = scmp.eq.s32.totalorder %s261, 0
    %s264 = sadd.s32 %s263, 1
    %s265 = scalar_select %p262, %s263, %s264
    %p268 = pneg %p262
    %p269 = scmp.eq.s32.totalorder %s17, 1
    %p270 = por %p268, %p269
    %p271 = scmp.ne.s32.totalorder %s263, %s266
    %p272 = scmp.eq.s32.totalorder %s17, 0
    %p273 = por %p271, %p272
    %p274 = scmp.ne.s32.totalorder %s263, %s266
    %p275 = scmp.eq.s32.totalorder %s22, 1
    %p276 = por %p274, %p275
    %p277 = scmp.ne.s32.totalorder %s266, %s267
    %p278 = scmp.eq.s32.totalorder %s22, 0
    %p279 = por %p277, %p278
    %p280 = scmp.ne.s32.totalorder %s266, %s267
    %p281 = scmp.eq.s32.totalorder %s23, 1
    %p282 = por %p280, %p281
    %p284 = scmp.ne.s32.totalorder %s267, %s283
    %p285 = scmp.eq.s32.totalorder %s23, 0
    %p286 = por %p284, %p285
    %p287 = scmp.le.s32.totalorder 1, %s17
    %p288 = scmp.lt.s32.totalorder %s17, 3
    %p289 = pnand %p287, %p288
    %p290 = pneg %p289
    // Predicated region
    $region9: #{c3_forward.1} parent=5 // pred_check
      _
    $region10: #{c3_forward.1} parent=5 // pred_check_branch
      %292 = sbr.rel (%p289) target = $region12
    $region11: #{c3_forward.1} parent=5 // pred_region
      %s293 = ssub.s32 %s17, 1
      // Predicated region
      $region13: #{c3_forward.1} parent=11 // pred_check
        %p294 = pneg %p64
      $region14: #{c3_forward.1} parent=11 // pred_check_branch
        %296 = sbr.rel (%p294) target = $region16
      $region15: #{c3_forward.1} parent=11 // pred_region
        _
      $region16: #{c3_forward.1} parent=11 // pred_fallthru
        _
      // Predicated region
      $region17: #{c3_forward.1} parent=11 // pred_check
        %p297 = pneg %p85
      $region18: #{c3_forward.1} parent=11 // pred_check_branch
        %299 = sbr.rel (%p297) target = $region20
      $region19: #{c3_forward.1} parent=11 // pred_region
        _
      $region20: #{c3_forward.1} parent=11 // pred_fallthru
        _
      // Predicated region
      $region21: #{c3_forward.1} parent=11 // pred_check
        %p300 = pneg %p106
      $region22: #{c3_forward.1} parent=11 // pred_check_branch
        %302 = sbr.rel (%p300) target = $region24
      $region23: #{c3_forward.1} parent=11 // pred_region
        _
      $region24: #{c3_forward.1} parent=11 // pred_fallthru
        _
      // Predicated region
      $region25: #{c3_forward.1} parent=11 // pred_check
        %p303 = pneg %p127
      $region26: #{c3_forward.1} parent=11 // pred_check_branch
        %305 = sbr.rel (%p303) target = $region28
      $region27: #{c3_forward.1} parent=11 // pred_region
        _
      $region28: #{c3_forward.1} parent=11 // pred_fallthru
        _
      // Predicated region
      $region29: #{c3_forward.1} parent=11 // pred_check
        %p306 = pneg %p148
      $region30: #{c3_forward.1} parent=11 // pred_check_branch
        %308 = sbr.rel (%p306) target = $region32
      $region31: #{c3_forward.1} parent=11 // pred_region
        _
      $region32: #{c3_forward.1} parent=11 // pred_fallthru
        _
      // Predicated region
      $region33: #{c3_forward.1} parent=11 // pred_check
        %p309 = pneg %p169
      $region34: #{c3_forward.1} parent=11 // pred_check_branch
        %311 = sbr.rel (%p309) target = $region36
      $region35: #{c3_forward.1} parent=11 // pred_region
        _
      $region36: #{c3_forward.1} parent=11 // pred_fallthru
        _
      // Predicated region
      $region37: #{c3_forward.1} parent=11 // pred_check
        %p312 = pneg %p190
      $region38: #{c3_forward.1} parent=11 // pred_check_branch
        %314 = sbr.rel (%p312) target = $region40
      $region39: #{c3_forward.1} parent=11 // pred_region
        _
      $region40: #{c3_forward.1} parent=11 // pred_fallthru
        _
      // Predicated region
      $region41: #{c3_forward.1} parent=11 // pred_check
        %p315 = pneg %p211
      $region42: #{c3_forward.1} parent=11 // pred_check_branch
        %317 = sbr.rel (%p315) target = $region44
      $region43: #{c3_forward.1} parent=11 // pred_region
        _
      $region44: #{c3_forward.1} parent=11 // pred_fallthru
        _
      // Predicated region
      $region45: #{c3_forward.1} parent=11 // pred_check
        %p318 = pneg %p232
      $region46: #{c3_forward.1} parent=11 // pred_check_branch
        %320 = sbr.rel (%p318) target = $region48
      $region47: #{c3_forward.1} parent=11 // pred_region
        _
      $region48: #{c3_forward.1} parent=11 // pred_fallthru
        _
      // Predicated region
      $region49: #{c3_forward.1} parent=11 // pred_check
        %p321 = pneg %p253
      $region50: #{c3_forward.1} parent=11 // pred_check_branch
        %323 = sbr.rel (%p321) target = $region52
      $region51: #{c3_forward.1} parent=11 // pred_region
        _
      $region52: #{c3_forward.1} parent=11 // pred_fallthru
        _
    $region12: #{c3_forward.1} parent=5 // pred_fallthru
      _
    %p324 = scmp.lt.s32.totalorder %s17, 2
    // Predicated region
    $region53: #{c3_forward.1} parent=5 // pred_check
      %p325 = pneg %p324
    $region54: #{c3_forward.1} parent=5 // pred_check_branch
      %327 = sbr.rel (%p325) target = $region56
    $region55: #{c3_forward.1} parent=5 // pred_region
      // Predicated region
      $region57: #{c3_forward.1} parent=55 // pred_check
        %p328 = pneg %p37
      $region58: #{c3_forward.1} parent=55 // pred_check_branch
        %330 = sbr.rel (%p328) target = $region60
      $region59: #{c3_forward.1} parent=55 // pred_region
        %p331 = scmp.lt.s32.totalorder %s17, 1
        %s332 = scalar_select %p331, %s17, 1
        %s333 = smul.addr %s332, 32
        %s334 = smul.addr %s333, 4
        %s335 = scalar_lea.vmem %s0, %s334
      $region60: #{c3_forward.1} parent=55 // pred_fallthru
        _
    $region56: #{c3_forward.1} parent=5 // pred_fallthru
      _
    %p336 = scmp.le.s32.totalorder 1, %s17
    %p337 = scmp.lt.s32.totalorder %s17, 3
    %p338 = pnand %p336, %p337
    %p339 = pneg %p338
    // Predicated region
    $region61: #{c3_forward.1} parent=5 // pred_check
      _
    $region62: #{c3_forward.1} parent=5 // pred_check_branch
      %341 = sbr.rel (%p338) target = $region64
    $region63: #{c3_forward.1} parent=5 // pred_region
      %s342 = ssub.s32 %s17, 1
      %p343 = scmp.lt.s32.totalorder %s22, 1
      %s344 = scalar_select %p343, %s22, 1
      %s345 = smul.addr %s344, 32
      %s346 = smul.addr %s345, 4
      %s347 = scalar_lea.vmem %s0, %s346
      %p348 = pneg %p43
      %p349 = pneg %p40
      %p350 = pneg %p64
      %p351 = pneg %p61
      %p352 = pneg %p85
      %p353 = pneg %p82
      %p354 = pneg %p106
      %p355 = pneg %p103
      %p356 = pneg %p127
      %p357 = pneg %p124
      %p358 = pneg %p148
      %p359 = pneg %p145
      %p360 = pneg %p169
      %p361 = pneg %p166
      %p362 = pneg %p190
      %p363 = pneg %p187
      %p364 = pneg %p211
      %p365 = pneg %p208
      %p366 = pneg %p232
      %p367 = pneg %p229
      %p368 = pneg %p253
      %p369 = pneg %p250
      %p370 = pneg %p279
      %p371 = pneg %p276
      %p372 = scmp.lt.s32.totalorder %s22, 1
      %s373 = scalar_select %p372, %s22, 1
      %s374 = smul.addr %s373, 32
      %s375 = smul.addr %s374, 8
      %s376 = scalar_lea.vmem %s11, %s375
      %p377 = scmp.lt.s32.totalorder %s22, 1
      %s378 = scalar_select %p377, %s22, 1
      %s379 = smul.addr %s378, 32
      %s380 = smul.addr %s379, 4
      %s381 = scalar_lea.vmem %s0, %s380
      %p382 = scmp.lt.s32.totalorder %s22, 1
      %s383 = scalar_select %p382, %s22, 1
      %s384 = smul.addr %s383, 32
      %s385 = smul.addr %s384, 8
      %s386 = scalar_lea.vmem %s11, %s385
      %v388 = vld [vmem:[%s381] sm:$0xf]
      %v389 = vld [vmem:[%s381 + $0x4] sm:$0xf]
      %v390 = vld [vmem:[%s381 + $0x8] sm:$0xf]
      %v391 = vld [vmem:[%s381 + $0xc] sm:$0xf]
      %v392 = vld [vmem:[%s381 + $0x10] sm:$0xf]
      %v393 = vld [vmem:[%s381 + $0x14] sm:$0xf]
      %v394 = vld [vmem:[%s381 + $0x18] sm:$0xf]
      %v395 = vld [vmem:[%s381 + $0x1c] sm:$0xf]
      %v396 = vld [vmem:[%s381 + $0x20] sm:$0xf]
      %v397 = vld [vmem:[%s381 + $0x24] sm:$0xf]
      %v398 = vld [vmem:[%s381 + $0x28] sm:$0xf]
      %v399 = vld [vmem:[%s381 + $0x2c] sm:$0xf]
      %v400 = vld [vmem:[%s381 + $0x30] sm:$0xf]
      %v401 = vld [vmem:[%s381 + $0x34] sm:$0xf]
      %v402 = vld [vmem:[%s381 + $0x38] sm:$0xf]
      %v403 = vld [vmem:[%s381 + $0x3c] sm:$0xf]
      %v404 = vld [vmem:[%s381 + $0x40] sm:$0xf]
      %v405 = vld [vmem:[%s381 + $0x44] sm:$0xf]
      %v406 = vld [vmem:[%s381 + $0x48] sm:$0xf]
      %v407 = vld [vmem:[%s381 + $0x4c] sm:$0xf]
      %v408 = vld [vmem:[%s381 + $0x50] sm:$0xf]
      %v409 = vld [vmem:[%s381 + $0x54] sm:$0xf]
      %v410 = vld [vmem:[%s381 + $0x58] sm:$0xf]
      %v411 = vld [vmem:[%s381 + $0x5c] sm:$0xf]
      %v412 = vld [vmem:[%s381 + $0x60] sm:$0xf]
      %v413 = vld [vmem:[%s381 + $0x64] sm:$0xf]
      %v414 = vld [vmem:[%s381 + $0x68] sm:$0xf]
      %v415 = vld [vmem:[%s381 + $0x6c] sm:$0xf]
      %v416 = vld [vmem:[%s381 + $0x70] sm:$0xf]
      %v417 = vld [vmem:[%s381 + $0x74] sm:$0xf]
      %v418 = vld [vmem:[%s381 + $0x78] sm:$0xf]
      %v419 = vld [vmem:[%s381 + $0x7c] sm:$0xf]
      %v420 = vld [vmem:[%s1] sm:$0xff]
      %v421 = vld [vmem:[%s1 + $0x8] sm:$0xff]
      %v422 = vld [vmem:[%s1 + $0x10] sm:$0xff]
      %v423 = vld [vmem:[%s1 + $0x18] sm:$0xff]
      %v424 = vld [vmem:[%s1 + $0x20] sm:$0xff]
      %v425 = vld [vmem:[%s1 + $0x28] sm:$0xff]
      %v426 = vld [vmem:[%s1 + $0x30] sm:$0xff]
      %v427 = vld [vmem:[%s1 + $0x38] sm:$0xff]
      %v428 = vld [vmem:[%s1 + $0x40] sm:$0xff]
      %v429 = vld [vmem:[%s1 + $0x48] sm:$0xff]
      %v430 = vld [vmem:[%s1 + $0x50] sm:$0xff]
      %v431 = vld [vmem:[%s1 + $0x58] sm:$0xff]
      %v432 = vld [vmem:[%s1 + $0x60] sm:$0xff]
      %v433 = vld [vmem:[%s1 + $0x68] sm:$0xff]
      %v434 = vld [vmem:[%s1 + $0x70] sm:$0xff]
      %v435 = vld [vmem:[%s1 + $0x78] sm:$0xff]
      %v436 = vld [vmem:[%s1 + $0x80] sm:$0xff]
      %v437 = vld [vmem:[%s1 + $0x88] sm:$0xff]
      %v438 = vld [vmem:[%s1 + $0x90] sm:$0xff]
      %v439 = vld [vmem:[%s1 + $0x98] sm:$0xff]
      %v440 = vld [vmem:[%s1 + $0xa0] sm:$0xff]
      %v441 = vld [vmem:[%s1 + $0xa8] sm:$0xff]
      %v442 = vld [vmem:[%s1 + $0xb0] sm:$0xff]
      %v443 = vld [vmem:[%s1 + $0xb8] sm:$0xff]
      %v444 = vld [vmem:[%s1 + $0xc0] sm:$0xff]
      %v445 = vld [vmem:[%s1 + $0xc8] sm:$0xff]
      %v446 = vld [vmem:[%s1 + $0xd0] sm:$0xff]
      %v447 = vld [vmem:[%s1 + $0xd8] sm:$0xff]
      %v448 = vld [vmem:[%s1 + $0xe0] sm:$0xff]
      %v449 = vld [vmem:[%s1 + $0xe8] sm:$0xff]
      %v450 = vld [vmem:[%s1 + $0xf0] sm:$0xff]
      %v451 = vld [vmem:[%s1 + $0xf8] sm:$0xff]
      %v452 = vld [vmem:[%s2] sm:$0xff]
      %v453 = vld [vmem:[%s2 + $0x8] sm:$0xff]
      %v454 = vld [vmem:[%s2 + $0x10] sm:$0xff]
      %v455 = vld [vmem:[%s2 + $0x18] sm:$0xff]
      %v456 = vld [vmem:[%s2 + $0x20] sm:$0xff]
      %v457 = vld [vmem:[%s2 + $0x28] sm:$0xff]
      %v458 = vld [vmem:[%s2 + $0x30] sm:$0xff]
      %v459 = vld [vmem:[%s2 + $0x38] sm:$0xff]
      %v460 = vld [vmem:[%s2 + $0x40] sm:$0xff]
      %v461 = vld [vmem:[%s2 + $0x48] sm:$0xff]
      %v462 = vld [vmem:[%s2 + $0x50] sm:$0xff]
      %v463 = vld [vmem:[%s2 + $0x58] sm:$0xff]
      %v464 = vld [vmem:[%s2 + $0x60] sm:$0xff]
      %v465 = vld [vmem:[%s2 + $0x68] sm:$0xff]
      %v466 = vld [vmem:[%s2 + $0x70] sm:$0xff]
      %v467 = vld [vmem:[%s2 + $0x78] sm:$0xff]
      %v468 = vld [vmem:[%s2 + $0x80] sm:$0xff]
      %v469 = vld [vmem:[%s2 + $0x88] sm:$0xff]
      %v470 = vld [vmem:[%s2 + $0x90] sm:$0xff]
      %v471 = vld [vmem:[%s2 + $0x98] sm:$0xff]
      %v472 = vld [vmem:[%s2 + $0xa0] sm:$0xff]
      %v473 = vld [vmem:[%s2 + $0xa8] sm:$0xff]
      %v474 = vld [vmem:[%s2 + $0xb0] sm:$0xff]
      %v475 = vld [vmem:[%s2 + $0xb8] sm:$0xff]
      %v476 = vld [vmem:[%s2 + $0xc0] sm:$0xff]
      %v477 = vld [vmem:[%s2 + $0xc8] sm:$0xff]
      %v478 = vld [vmem:[%s2 + $0xd0] sm:$0xff]
      %v479 = vld [vmem:[%s2 + $0xd8] sm:$0xff]
      %v480 = vld [vmem:[%s2 + $0xe0] sm:$0xff]
      %v481 = vld [vmem:[%s2 + $0xe8] sm:$0xff]
      %v482 = vld [vmem:[%s2 + $0xf0] sm:$0xff]
      %v483 = vld [vmem:[%s2 + $0xf8] sm:$0xff]
      %v484 = vld [vmem:[%s3] sm:$0xf]
      %v517 = vunpack.c.l.b16 %v388
      %v518 = vunpack.c.l.b16 %v389
      %v519 = vunpack.c.l.b16 %v390
      %v520 = vunpack.c.l.b16 %v391
      %v521 = vunpack.c.l.b16 %v392
      %v522 = vunpack.c.l.b16 %v393
      %v523 = vunpack.c.l.b16 %v394
      %v524 = vunpack.c.l.b16 %v395
      %v525 = vunpack.c.l.b16 %v396
      %v526 = vunpack.c.l.b16 %v397
      %v527 = vunpack.c.l.b16 %v398
      %v528 = vunpack.c.l.b16 %v399
      %v529 = vunpack.c.l.b16 %v400
      %v530 = vunpack.c.l.b16 %v401
      %v531 = vunpack.c.l.b16 %v402
      %v532 = vunpack.c.l.b16 %v403
      %v533 = vunpack.c.l.b16 %v404
      %v534 = vunpack.c.l.b16 %v405
      %v535 = vunpack.c.l.b16 %v406
      %v536 = vunpack.c.l.b16 %v407
      %v537 = vunpack.c.l.b16 %v408
      %v538 = vunpack.c.l.b16 %v409
      %v539 = vunpack.c.l.b16 %v410
      %v540 = vunpack.c.l.b16 %v411
      %v541 = vunpack.c.l.b16 %v412
      %v542 = vunpack.c.l.b16 %v413
      %v543 = vunpack.c.l.b16 %v414
      %v544 = vunpack.c.l.b16 %v415
      %v545 = vunpack.c.l.b16 %v416
      %v546 = vunpack.c.l.b16 %v417
      %v547 = vunpack.c.l.b16 %v418
      %v548 = vunpack.c.l.b16 %v419
      %v549 = vpack.c.b16 %v518, %v517
      %v550 = vpack.c.b16 %v520, %v519
      %v551 = vpack.c.b16 %v522, %v521
      %v552 = vpack.c.b16 %v524, %v523
      %v553 = vpack.c.b16 %v526, %v525
      %v554 = vpack.c.b16 %v528, %v527
      %v555 = vpack.c.b16 %v530, %v529
      %v556 = vpack.c.b16 %v532, %v531
      %v557 = vpack.c.b16 %v534, %v533
      %v558 = vpack.c.b16 %v536, %v535
      %v559 = vpack.c.b16 %v538, %v537
      %v560 = vpack.c.b16 %v540, %v539
      %v561 = vpack.c.b16 %v542, %v541
      %v562 = vpack.c.b16 %v544, %v543
      %v563 = vpack.c.b16 %v546, %v545
      %v564 = vpack.c.b16 %v548, %v547
      %vm565 = vcmask 64512
      %v567 = vsel %vm565, %v549, 0
      %v570 = vsel %vm565, %v550, 0
      %v573 = vsel %vm565, %v551, 0
      %v576 = vsel %vm565, %v552, 0
      %v579 = vsel %vm565, %v553, 0
      %v582 = vsel %vm565, %v554, 0
      %v585 = vsel %vm565, %v555, 0
      %v588 = vsel %vm565, %v556, 0
      %v591 = vsel %vm565, %v557, 0
      %v594 = vsel %vm565, %v558, 0
      %v597 = vsel %vm565, %v559, 0
      %v600 = vsel %vm565, %v560, 0
      %v603 = vsel %vm565, %v561, 0
      %v606 = vsel %vm565, %v562, 0
      %v609 = vsel %vm565, %v563, 0
      %v612 = vsel %vm565, %v564, 0
      %vm614 = vcmask 1043456
      %v616 = vsel %vm614, %v484, 0
      %618 = vmatprep.subr.bf16.mxu0 0
      %619 = vmatpush1.bf16.msra.mxu0 %v616
      %620 = vmatprep.subr.bf16.mxu0 0
      %621 = vmatpush1.bf16.msra.mxu0 0
      %622 = vmatprep.subr.bf16.mxu0 0
      %623 = vmatpush1.bf16.msra.mxu0 0
      %624 = vmatprep.subr.bf16.mxu0 0
      %625 = vmatpush1.bf16.msra.mxu0 0
      %626 = vmatprep.subr.bf16.mxu0 0
      %627 = vmatpush1.bf16.msra.mxu0 0
      %628 = vmatprep.subr.bf16.mxu0 0
      %629 = vmatpush1.bf16.msra.mxu0 0
      %630 = vmatprep.subr.bf16.mxu0 0
      %631 = vmatpush1.bf16.msra.mxu0 0
      %632 = vmatprep.subr.bf16.mxu0 0
      %633 = vmatpush1.bf16.msra.mxu0 0
      %634 = vmatprep.subr.bf16.mxu0 0
      %635 = vmatpush1.bf16.msra.mxu0 0
      %636 = vmatprep.subr.bf16.mxu0 0
      %637 = vmatpush1.bf16.msra.mxu0 0
      %638 = vmatprep.subr.bf16.mxu0 0
      %639 = vmatpush1.bf16.msra.mxu0 0
      %640 = vmatprep.subr.bf16.mxu0 0
      %641 = vmatpush1.bf16.msra.mxu0 0
      %642 = vmatprep.subr.bf16.mxu0 0
      %643 = vmatpush1.bf16.msra.mxu0 0
      %644 = vmatprep.subr.bf16.mxu0 0
      %645 = vmatpush1.bf16.msra.mxu0 0
      %646 = vmatprep.subr.bf16.mxu0 0
      %647 = vmatpush1.bf16.msra.mxu0 0
      %648 = vmatprep.subr.bf16.mxu0 0
      %649 = vmatpush1.bf16.msra.mxu0 0
      %650 = vmatprep.mubr.bf16.mxu0 0
      %651 = vmatmul.mubr.bf16.gmra.mrb[0].mxu0 %v567
      %v652 = vpop.f32.mrb[0].mxu0
      %v653 = vadd.f32 0.0, %v652
      %v654 = vpop.f32.mrb[0].mxu0
      %v655 = vpop.f32.mrb[0].mxu0
      %v656 = vadd.f32 0.0, %v655
      %v657 = vpop.f32.mrb[0].mxu0
      %658 = vmatprep.mubr.bf16.mxu0 0
      %659 = vmatmul.mubr.bf16.gmra.mrb[0].mxu0 %v570
      %v660 = vpop.f32.mrb[0].mxu0
      %v661 = vadd.f32 0.0, %v660
      %v662 = vpop.f32.mrb[0].mxu0
      %v663 = vpop.f32.mrb[0].mxu0
      %v664 = vadd.f32 0.0, %v663
      %v665 = vpop.f32.mrb[0].mxu0
      %666 = vmatprep.mubr.bf16.mxu0 0
      %667 = vmatmul.mubr.bf16.gmra.mrb[0].mxu0 %v573
      %v668 = vpop.f32.mrb[0].mxu0
      %v669 = vadd.f32 0.0, %v668
      %v670 = vpop.f32.mrb[0].mxu0
      %v671 = vpop.f32.mrb[0].mxu0
      %v672 = vadd.f32 0.0, %v671
      %v673 = vpop.f32.mrb[0].mxu0
      %674 = vmatprep.mubr.bf16.mxu0 0
      %675 = vmatmul.mubr.bf16.gmra.mrb[0].mxu0 %v576
      %v676 = vpop.f32.mrb[0].mxu0
      %v677 = vadd.f32 0.0, %v676
      %v678 = vpop.f32.mrb[0].mxu0
      %v679 = vpop.f32.mrb[0].mxu0
      %v680 = vadd.f32 0.0, %v679
      %v681 = vpop.f32.mrb[0].mxu0
      %682 = vmatprep.mubr.bf16.mxu0 0
      %683 = vmatmul.mubr.bf16.gmra.mrb[0].mxu0 %v579
      %v684 = vpop.f32.mrb[0].mxu0
      %v685 = vadd.f32 0.0, %v684
      %v686 = vpop.f32.mrb[0].mxu0
      %v687 = vpop.f32.mrb[0].mxu0
      %v688 = vadd.f32 0.0, %v687
      %v689 = vpop.f32.mrb[0].mxu0
      %690 = vmatprep.mubr.bf16.mxu0 0
      %691 = vmatmul.mubr.bf16.gmra.mrb[0].mxu0 %v582
      %v692 = vpop.f32.mrb[0].mxu0
      %v693 = vadd.f32 0.0, %v692
      %v694 = vpop.f32.mrb[0].mxu0
      %v695 = vpop.f32.mrb[0].mxu0
      %v696 = vadd.f32 0.0, %v695
      %v697 = vpop.f32.mrb[0].mxu0
      %698 = vmatprep.mubr.bf16.mxu0 0
      %699 = vmatmul.mubr.bf16.gmra.mrb[0].mxu0 %v585
      %v700 = vpop.f32.mrb[0].mxu0
      %v701 = vadd.f32 0.0, %v700
      %v702 = vpop.f32.mrb[0].mxu0
      %v703 = vpop.f32.mrb[0].mxu0
      %v704 = vadd.f32 0.0, %v703
      %v705 = vpop.f32.mrb[0].mxu0
      %706 = vmatprep.mubr.bf16.mxu0 0
      %707 = vmatmul.mubr.bf16.gmra.mrb[0].mxu0 %v588
      %v708 = vpop.f32.mrb[0].mxu0
      %v709 = vadd.f32 0.0, %v708
      %v710 = vpop.f32.mrb[0].mxu0
      %v711 = vpop.f32.mrb[0].mxu0
      %v712 = vadd.f32 0.0, %v711
      %v713 = vpop.f32.mrb[0].mxu0
      %714 = vmatprep.mubr.bf16.mxu0 0
      %715 = vmatmul.mubr.bf16.gmra.mrb[0].mxu0 %v591
      %v716 = vpop.f32.mrb[0].mxu0
      %v717 = vadd.f32 0.0, %v716
      %v718 = vpop.f32.mrb[0].mxu0
      %v719 = vpop.f32.mrb[0].mxu0
      %v720 = vadd.f32 0.0, %v719
      %v721 = vpop.f32.mrb[0].mxu0
      %722 = vmatprep.mubr.bf16.mxu0 0
      %723 = vmatmul.mubr.bf16.gmra.mrb[0].mxu0 %v594
      %v724 = vpop.f32.mrb[0].mxu0
      %v725 = vadd.f32 0.0, %v724
      %v726 = vpop.f32.mrb[0].mxu0
      %v727 = vpop.f32.mrb[0].mxu0
      %v728 = vadd.f32 0.0, %v727
      %v729 = vpop.f32.mrb[0].mxu0
      %730 = vmatprep.mubr.bf16.mxu0 0
      %731 = vmatmul.mubr.bf16.gmra.mrb[0].mxu0 %v597
      %v732 = vpop.f32.mrb[0].mxu0
      %v733 = vadd.f32 0.0, %v732
      %v734 = vpop.f32.mrb[0].mxu0
      %v735 = vpop.f32.mrb[0].mxu0
      %v736 = vadd.f32 0.0, %v735
      %v737 = vpop.f32.mrb[0].mxu0
      %738 = vmatprep.mubr.bf16.mxu0 0
      %739 = vmatmul.mubr.bf16.gmra.mrb[0].mxu0 %v600
      %v740 = vpop.f32.mrb[0].mxu0
      %v741 = vadd.f32 0.0, %v740
      %v742 = vpop.f32.mrb[0].mxu0
      %v743 = vpop.f32.mrb[0].mxu0
      %v744 = vadd.f32 0.0, %v743
      %v745 = vpop.f32.mrb[0].mxu0
      %746 = vmatprep.mubr.bf16.mxu0 0
      %747 = vmatmul.mubr.bf16.gmra.mrb[0].mxu0 %v603
      %v748 = vpop.f32.mrb[0].mxu0
      %v749 = vadd.f32 0.0, %v748
      %v750 = vpop.f32.mrb[0].mxu0
      %v751 = vpop.f32.mrb[0].mxu0
      %v752 = vadd.f32 0.0, %v751
      %v753 = vpop.f32.mrb[0].mxu0
      %754 = vmatprep.mubr.bf16.mxu0 0
      %755 = vmatmul.mubr.bf16.gmra.mrb[0].mxu0 %v606
      %v756 = vpop.f32.mrb[0].mxu0
      %v757 = vadd.f32 0.0, %v756
      %v758 = vpop.f32.mrb[0].mxu0
      %v759 = vpop.f32.mrb[0].mxu0
      %v760 = vadd.f32 0.0, %v759
      %v761 = vpop.f32.mrb[0].mxu0
      %762 = vmatprep.mubr.bf16.mxu0 0
      %763 = vmatmul.mubr.bf16.gmra.mrb[0].mxu0 %v609
      %v764 = vpop.f32.mrb[0].mxu0
      %v765 = vadd.f32 0.0, %v764
      %v766 = vpop.f32.mrb[0].mxu0
      %v767 = vpop.f32.mrb[0].mxu0
      %v768 = vadd.f32 0.0, %v767
      %v769 = vpop.f32.mrb[0].mxu0
      %770 = vmatprep.mubr.bf16.mxu0 0
      %771 = vmatmul.mubr.bf16.gmra.mrb[0].mxu0 %v612
      %v772 = vpop.f32.mrb[0].mxu0
      %v773 = vadd.f32 0.0, %v772
      %v774 = vpop.f32.mrb[0].mxu0
      %v775 = vpop.f32.mrb[0].mxu0
      %v776 = vadd.f32 0.0, %v775
      %v777 = vpop.f32.mrb[0].mxu0
      %778 = vdwg.mxu0
      %v779 = vld [vmem:[%s4] sm:$0x1]
      %v780 = vlaneseq
      %v781 = vshrl.u32 %v780, 7
      %v782 = vsub.s32 0, %v781
      %v783 = vrot.slane %v779, %v782
      %v784 = vmul.f32 %v653, %v783
      %v785 = vmul.f32 %v656, %v783
      %v786 = vmul.f32 %v661, %v783
      %v787 = vmul.f32 %v664, %v783
      %v788 = vmul.f32 %v669, %v783
      %v789 = vmul.f32 %v672, %v783
      %v790 = vmul.f32 %v677, %v783
      %v791 = vmul.f32 %v680, %v783
      %v792 = vmul.f32 %v685, %v783
      %v793 = vmul.f32 %v688, %v783
      %v794 = vmul.f32 %v693, %v783
      %v795 = vmul.f32 %v696, %v783
      %v796 = vmul.f32 %v701, %v783
      %v797 = vmul.f32 %v704, %v783
      %v798 = vmul.f32 %v709, %v783
      %v799 = vmul.f32 %v712, %v783
      %v800 = vmul.f32 %v717, %v783
      %v801 = vmul.f32 %v720, %v783
      %v802 = vmul.f32 %v725, %v783
      %v803 = vmul.f32 %v728, %v783
      %v804 = vmul.f32 %v733, %v783
      %v805 = vmul.f32 %v736, %v783
      %v806 = vmul.f32 %v741, %v783
      %v807 = vmul.f32 %v744, %v783
      %v808 = vmul.f32 %v749, %v783
      %v809 = vmul.f32 %v752, %v783
      %v810 = vmul.f32 %v757, %v783
      %v811 = vmul.f32 %v760, %v783
      %v812 = vmul.f32 %v765, %v783
      %v813 = vmul.f32 %v768, %v783
      %v814 = vmul.f32 %v773, %v783
      %v815 = vmul.f32 %v776, %v783
      %v816 = vld [vmem:[%s4 + $0x1] sm:$0x1]
      %v817 = vlaneseq
      %v818 = vshrl.u32 %v817, 7
      %v819 = vsub.s32 0, %v818
      %v820 = vrot.slane %v816, %v819
      %v821 = vadd.f32 %v784, %v820
      %v822 = vadd.f32 %v785, %v820
      %v823 = vadd.f32 %v786, %v820
      %v824 = vadd.f32 %v787, %v820
      %v825 = vadd.f32 %v788, %v820
      %v826 = vadd.f32 %v789, %v820
      %v827 = vadd.f32 %v790, %v820
      %v828 = vadd.f32 %v791, %v820
      %v829 = vadd.f32 %v792, %v820
      %v830 = vadd.f32 %v793, %v820
      %v831 = vadd.f32 %v794, %v820
      %v832 = vadd.f32 %v795, %v820
      %v833 = vadd.f32 %v796, %v820
      %v834 = vadd.f32 %v797, %v820
      %v835 = vadd.f32 %v798, %v820
      %v836 = vadd.f32 %v799, %v820
      %v837 = vadd.f32 %v800, %v820
      %v838 = vadd.f32 %v801, %v820
      %v839 = vadd.f32 %v802, %v820
      %v840 = vadd.f32 %v803, %v820
      %v841 = vadd.f32 %v804, %v820
      %v842 = vadd.f32 %v805, %v820
      %v843 = vadd.f32 %v806, %v820
      %v844 = vadd.f32 %v807, %v820
      %v845 = vadd.f32 %v808, %v820
      %v846 = vadd.f32 %v809, %v820
      %v847 = vadd.f32 %v810, %v820
      %v848 = vadd.f32 %v811, %v820
      %v849 = vadd.f32 %v812, %v820
      %v850 = vadd.f32 %v813, %v820
      %v851 = vadd.f32 %v814, %v820
      %v852 = vadd.f32 %v815, %v820
      %v853 = vsub.f32 0.0, %v821
      %v854 = vsub.f32 0.0, %v822
      %v855 = vsub.f32 0.0, %v823
      %v856 = vsub.f32 0.0, %v824
      %v857 = vsub.f32 0.0, %v825
      %v858 = vsub.f32 0.0, %v826
      %v859 = vsub.f32 0.0, %v827
      %v860 = vsub.f32 0.0, %v828
      %v861 = vsub.f32 0.0, %v829
      %v862 = vsub.f32 0.0, %v830
      %v863 = vsub.f32 0.0, %v831
      %v864 = vsub.f32 0.0, %v832
      %v865 = vsub.f32 0.0, %v833
      %v866 = vsub.f32 0.0, %v834
      %v867 = vsub.f32 0.0, %v835
      %v868 = vsub.f32 0.0, %v836
      %v869 = vsub.f32 0.0, %v837
      %v870 = vsub.f32 0.0, %v838
      %v871 = vsub.f32 0.0, %v839
      %v872 = vsub.f32 0.0, %v840
      %v873 = vsub.f32 0.0, %v841
      %v874 = vsub.f32 0.0, %v842
      %v875 = vsub.f32 0.0, %v843
      %v876 = vsub.f32 0.0, %v844
      %v877 = vsub.f32 0.0, %v845
      %v878 = vsub.f32 0.0, %v846
      %v879 = vsub.f32 0.0, %v847
      %v880 = vsub.f32 0.0, %v848
      %v881 = vsub.f32 0.0, %v849
      %v882 = vsub.f32 0.0, %v850
      %v883 = vsub.f32 0.0, %v851
      %v884 = vsub.f32 0.0, %v852
      %v885 = vmul.f32 %v853, 1.442695
      %v886 = vpow.pop %v885
      %v887 = vmul.f32 %v854, 1.442695
      %v888 = vpow.pop %v887
      %v889 = vmul.f32 %v855, 1.442695
      %v890 = vpow.pop %v889
      %v891 = vmul.f32 %v856, 1.442695
      %v892 = vpow.pop %v891
      %v893 = vmul.f32 %v857, 1.442695
      %v894 = vpow.pop %v893
      %v895 = vmul.f32 %v858, 1.442695
      %v896 = vpow.pop %v895
      %v897 = vmul.f32 %v859, 1.442695
      %v898 = vpow.pop %v897
      %v899 = vmul.f32 %v860, 1.442695
      %v900 = vpow.pop %v899
      %v901 = vmul.f32 %v861, 1.442695
      %v902 = vpow.pop %v901
      %v903 = vmul.f32 %v862, 1.442695
      %v904 = vpow.pop %v903
      %v905 = vmul.f32 %v863, 1.442695
      %v906 = vpow.pop %v905
      %v907 = vmul.f32 %v864, 1.442695
      %v908 = vpow.pop %v907
      %v909 = vmul.f32 %v865, 1.442695
      %v910 = vpow.pop %v909
      %v911 = vmul.f32 %v866, 1.442695
      %v912 = vpow.pop %v911
      %v913 = vmul.f32 %v867, 1.442695
      %v914 = vpow.pop %v913
      %v915 = vmul.f32 %v868, 1.442695
      %v916 = vpow.pop %v915
      %v917 = vmul.f32 %v869, 1.442695
      %v918 = vpow.pop %v917
      %v919 = vmul.f32 %v870, 1.442695
      %v920 = vpow.pop %v919
      %v921 = vmul.f32 %v871, 1.442695
      %v922 = vpow.pop %v921
      %v923 = vmul.f32 %v872, 1.442695
      %v924 = vpow.pop %v923
      %v925 = vmul.f32 %v873, 1.442695
      %v926 = vpow.pop %v925
      %v927 = vmul.f32 %v874, 1.442695
      %v928 = vpow.pop %v927
      %v929 = vmul.f32 %v875, 1.442695
      %v930 = vpow.pop %v929
      %v931 = vmul.f32 %v876, 1.442695
      %v932 = vpow.pop %v931
      %v933 = vmul.f32 %v877, 1.442695
      %v934 = vpow.pop %v933
      %v935 = vmul.f32 %v878, 1.442695
      %v936 = vpow.pop %v935
      %v937 = vmul.f32 %v879, 1.442695
      %v938 = vpow.pop %v937
      %v939 = vmul.f32 %v880, 1.442695
      %v940 = vpow.pop %v939
      %v941 = vmul.f32 %v881, 1.442695
      %v942 = vpow.pop %v941
      %v943 = vmul.f32 %v882, 1.442695
      %v944 = vpow.pop %v943
      %v945 = vmul.f32 %v883, 1.442695
      %v946 = vpow.pop %v945
      %v947 = vmul.f32 %v884, 1.442695
      %v948 = vpow.pop %v947
      %v949 = vadd.f32 %v886, 1.0
      %v950 = vadd.f32 %v888, 1.0
      %v951 = vadd.f32 %v890, 1.0
      %v952 = vadd.f32 %v892, 1.0
      %v953 = vadd.f32 %v894, 1.0
      %v954 = vadd.f32 %v896, 1.0
      %v955 = vadd.f32 %v898, 1.0
      %v956 = vadd.f32 %v900, 1.0
      %v957 = vadd.f32 %v902, 1.0
      %v958 = vadd.f32 %v904, 1.0
      %v959 = vadd.f32 %v906, 1.0
      %v960 = vadd.f32 %v908, 1.0
      %v961 = vadd.f32 %v910, 1.0
      %v962 = vadd.f32 %v912, 1.0
      %v963 = vadd.f32 %v914, 1.0
      %v964 = vadd.f32 %v916, 1.0
      %v965 = vadd.f32 %v918, 1.0
      %v966 = vadd.f32 %v920, 1.0
      %v967 = vadd.f32 %v922, 1.0
      %v968 = vadd.f32 %v924, 1.0
      %v969 = vadd.f32 %v926, 1.0
      %v970 = vadd.f32 %v928, 1.0
      %v971 = vadd.f32 %v930, 1.0
      %v972 = vadd.f32 %v932, 1.0
      %v973 = vadd.f32 %v934, 1.0
      %v974 = vadd.f32 %v936, 1.0
      %v975 = vadd.f32 %v938, 1.0
      %v976 = vadd.f32 %v940, 1.0
      %v977 = vadd.f32 %v942, 1.0
      %v978 = vadd.f32 %v944, 1.0
      %v979 = vadd.f32 %v946, 1.0
      %v980 = vadd.f32 %v948, 1.0
      %v981 = vrcp.pop %v949
      %v982 = vrcp.pop %v950
      %v983 = vrcp.pop %v951
      %v984 = vrcp.pop %v952
      %v985 = vrcp.pop %v953
      %v986 = vrcp.pop %v954
      %v987 = vrcp.pop %v955
      %v988 = vrcp.pop %v956
      %v989 = vrcp.pop %v957
      %v990 = vrcp.pop %v958
      %v991 = vrcp.pop %v959
      %v992 = vrcp.pop %v960
      %v993 = vrcp.pop %v961
      %v994 = vrcp.pop %v962
      %v995 = vrcp.pop %v963
      %v996 = vrcp.pop %v964
      %v997 = vrcp.pop %v965
      %v998 = vrcp.pop %v966
      %v999 = vrcp.pop %v967
      %v1000 = vrcp.pop %v968
      %v1001 = vrcp.pop %v969
      %v1002 = vrcp.pop %v970
      %v1003 = vrcp.pop %v971
      %v1004 = vrcp.pop %v972
      %v1005 = vrcp.pop %v973
      %v1006 = vrcp.pop %v974
      %v1007 = vrcp.pop %v975
      %v1008 = vrcp.pop %v976
      %v1009 = vrcp.pop %v977
      %v1010 = vrcp.pop %v978
      %v1011 = vrcp.pop %v979
      %v1012 = vrcp.pop %v980
      %v1013 = vmul.f32 %v821, %v981
      %v1014 = vmul.f32 %v822, %v982
      %v1015 = vmul.f32 %v823, %v983
      %v1016 = vmul.f32 %v824, %v984
      %v1017 = vmul.f32 %v825, %v985
      %v1018 = vmul.f32 %v826, %v986
      %v1019 = vmul.f32 %v827, %v987
      %v1020 = vmul.f32 %v828, %v988
      %v1021 = vmul.f32 %v829, %v989
      %v1022 = vmul.f32 %v830, %v990
      %v1023 = vmul.f32 %v831, %v991
      %v1024 = vmul.f32 %v832, %v992
      %v1025 = vmul.f32 %v833, %v993
      %v1026 = vmul.f32 %v834, %v994
      %v1027 = vmul.f32 %v835, %v995
      %v1028 = vmul.f32 %v836, %v996
      %v1029 = vmul.f32 %v837, %v997
      %v1030 = vmul.f32 %v838, %v998
      %v1031 = vmul.f32 %v839, %v999
      %v1032 = vmul.f32 %v840, %v1000
      %v1033 = vmul.f32 %v841, %v1001
      %v1034 = vmul.f32 %v842, %v1002
      %v1035 = vmul.f32 %v843, %v1003
      %v1036 = vmul.f32 %v844, %v1004
      %v1037 = vmul.f32 %v845, %v1005
      %v1038 = vmul.f32 %v846, %v1006
      %v1039 = vmul.f32 %v847, %v1007
      %v1040 = vmul.f32 %v848, %v1008
      %v1041 = vmul.f32 %v849, %v1009
      %v1042 = vmul.f32 %v850, %v1010
      %v1043 = vmul.f32 %v851, %v1011
      %v1044 = vmul.f32 %v852, %v1012
      %v1045 = vpack.c.bf16 %v1014, %v1013
      %v1046 = vpack.c.bf16 %v1016, %v1015
      %v1047 = vpack.c.bf16 %v1018, %v1017
      %v1048 = vpack.c.bf16 %v1020, %v1019
      %v1049 = vpack.c.bf16 %v1022, %v1021
      %v1050 = vpack.c.bf16 %v1024, %v1023
      %v1051 = vpack.c.bf16 %v1026, %v1025
      %v1052 = vpack.c.bf16 %v1028, %v1027
      %v1053 = vpack.c.bf16 %v1030, %v1029
      %v1054 = vpack.c.bf16 %v1032, %v1031
      %v1055 = vpack.c.bf16 %v1034, %v1033
      %v1056 = vpack.c.bf16 %v1036, %v1035
      %v1057 = vpack.c.bf16 %v1038, %v1037
      %v1058 = vpack.c.bf16 %v1040, %v1039
      %v1059 = vpack.c.bf16 %v1042, %v1041
      %v1060 = vpack.c.bf16 %v1044, %v1043
      %v1061 = vld [vmem:[%s5] sm:$0xf]
      %v1063 = vsel %vm565, %v1045, 0
      %v1066 = vsel %vm565, %v1046, 0
      %v1069 = vsel %vm565, %v1047, 0
      %v1072 = vsel %vm565, %v1048, 0
      %v1075 = vsel %vm565, %v1049, 0
      %v1078 = vsel %vm565, %v1050, 0
      %v1081 = vsel %vm565, %v1051, 0
      %v1084 = vsel %vm565, %v1052, 0
      %v1087 = vsel %vm565, %v1053, 0
      %v1090 = vsel %vm565, %v1054, 0
      %v1093 = vsel %vm565, %v1055, 0
      %v1096 = vsel %vm565, %v1056, 0
      %v1099 = vsel %vm565, %v1057, 0
      %v1102 = vsel %vm565, %v1058, 0
      %v1105 = vsel %vm565, %v1059, 0
      %v1108 = vsel %vm565, %v1060, 0
      %v1111 = vsel %vm614, %v1061, 0
      %1113 = vmatprep.subr.bf16.mxu0 0
      %1114 = vmatpush1.bf16.msra.mxu0 %v1111
      %1115 = vmatprep.subr.bf16.mxu0 0
      %1116 = vmatpush1.bf16.msra.mxu0 0
      %1117 = vmatprep.subr.bf16.mxu0 0
      %1118 = vmatpush1.bf16.msra.mxu0 0
      %1119 = vmatprep.subr.bf16.mxu0 0
      %1120 = vmatpush1.bf16.msra.mxu0 0
      %1121 = vmatprep.subr.bf16.mxu0 0
      %1122 = vmatpush1.bf16.msra.mxu0 0
      %1123 = vmatprep.subr.bf16.mxu0 0
      %1124 = vmatpush1.bf16.msra.mxu0 0
      %1125 = vmatprep.subr.bf16.mxu0 0
      %1126 = vmatpush1.bf16.msra.mxu0 0
      %1127 = vmatprep.subr.bf16.mxu0 0
      %1128 = vmatpush1.bf16.msra.mxu0 0
      %1129 = vmatprep.subr.bf16.mxu0 0
      %1130 = vmatpush1.bf16.msra.mxu0 0
      %1131 = vmatprep.subr.bf16.mxu0 0
      %1132 = vmatpush1.bf16.msra.mxu0 0
      %1133 = vmatprep.subr.bf16.mxu0 0
      %1134 = vmatpush1.bf16.msra.mxu0 0
      %1135 = vmatprep.subr.bf16.mxu0 0
      %1136 = vmatpush1.bf16.msra.mxu0 0
      %1137 = vmatprep.subr.bf16.mxu0 0
      %1138 = vmatpush1.bf16.msra.mxu0 0
      %1139 = vmatprep.subr.bf16.mxu0 0
      %1140 = vmatpush1.bf16.msra.mxu0 0
      %1141 = vmatprep.subr.bf16.mxu0 0
      %1142 = vmatpush1.bf16.msra.mxu0 0
      %1143 = vmatprep.subr.bf16.mxu0 0
      %1144 = vmatpush1.bf16.msra.mxu0 0
      %1145 = vmatprep.mubr.bf16.mxu0 0
      %1146 = vmatmul.mubr.bf16.gmra.mrb[0].mxu0 %v1063
      %v1147 = vpop.f32.mrb[0].mxu0
      %v1148 = vadd.f32 0.0, %v1147
      %v1149 = vpop.f32.mrb[0].mxu0
      %v1150 = vpop.f32.mrb[0].mxu0
      %v1151 = vadd.f32 0.0, %v1150
      %v1152 = vpop.f32.mrb[0].mxu0
      %1153 = vmatprep.mubr.bf16.mxu0 0
      %1154 = vmatmul.mubr.bf16.gmra.mrb[0].mxu0 %v1066
      %v1155 = vpop.f32.mrb[0].mxu0
      %v1156 = vadd.f32 0.0, %v1155
      %v1157 = vpop.f32.mrb[0].mxu0
      %v1158 = vpop.f32.mrb[0].mxu0
      %v1159 = vadd.f32 0.0, %v1158
      %v1160 = vpop.f32.mrb[0].mxu0
      %1161 = vmatprep.mubr.bf16.mxu0 0
      %1162 = vmatmul.mubr.bf16.gmra.mrb[0].mxu0 %v1069
      %v1163 = vpop.f32.mrb[0].mxu0
      %v1164 = vadd.f32 0.0, %v1163
      %v1165 = vpop.f32.mrb[0].mxu0
      %v1166 = vpop.f32.mrb[0].mxu0
      %v1167 = vadd.f32 0.0, %v1166
      %v1168 = vpop.f32.mrb[0].mxu0
      %1169 = vmatprep.mubr.bf16.mxu0 0
      %1170 = vmatmul.mubr.bf16.gmra.mrb[0].mxu0 %v1072
      %v1171 = vpop.f32.mrb[0].mxu0
      %v1172 = vadd.f32 0.0, %v1171
      %v1173 = vpop.f32.mrb[0].mxu0
      %v1174 = vpop.f32.mrb[0].mxu0
      %v1175 = vadd.f32 0.0, %v1174
      %v1176 = vpop.f32.mrb[0].mxu0
      %1177 = vmatprep.mubr.bf16.mxu0 0
      %1178 = vmatmul.mubr.bf16.gmra.mrb[0].mxu0 %v1075
      %v1179 = vpop.f32.mrb[0].mxu0
      %v1180 = vadd.f32 0.0, %v1179
      %v1181 = vpop.f32.mrb[0].mxu0
      %v1182 = vpop.f32.mrb[0].mxu0
      %v1183 = vadd.f32 0.0, %v1182
      %v1184 = vpop.f32.mrb[0].mxu0
      %1185 = vmatprep.mubr.bf16.mxu0 0
      %1186 = vmatmul.mubr.bf16.gmra.mrb[0].mxu0 %v1078
      %v1187 = vpop.f32.mrb[0].mxu0
      %v1188 = vadd.f32 0.0, %v1187
      %v1189 = vpop.f32.mrb[0].mxu0
      %v1190 = vpop.f32.mrb[0].mxu0
      %v1191 = vadd.f32 0.0, %v1190
      %v1192 = vpop.f32.mrb[0].mxu0
      %1193 = vmatprep.mubr.bf16.mxu0 0
      %1194 = vmatmul.mubr.bf16.gmra.mrb[0].mxu0 %v1081
      %v1195 = vpop.f32.mrb[0].mxu0
      %v1196 = vadd.f32 0.0, %v1195
      %v1197 = vpop.f32.mrb[0].mxu0
      %v1198 = vpop.f32.mrb[0].mxu0
      %v1199 = vadd.f32 0.0, %v1198
      %v1200 = vpop.f32.mrb[0].mxu0
      %1201 = vmatprep.mubr.bf16.mxu0 0
      %1202 = vmatmul.mubr.bf16.gmra.mrb[0].mxu0 %v1084
      %v1203 = vpop.f32.mrb[0].mxu0
      %v1204 = vadd.f32 0.0, %v1203
      %v1205 = vpop.f32.mrb[0].mxu0
      %v1206 = vpop.f32.mrb[0].mxu0
      %v1207 = vadd.f32 0.0, %v1206
      %v1208 = vpop.f32.mrb[0].mxu0
      %1209 = vmatprep.mubr.bf16.mxu0 0
      %1210 = vmatmul.mubr.bf16.gmra.mrb[0].mxu0 %v1087
      %v1211 = vpop.f32.mrb[0].mxu0
      %v1212 = vadd.f32 0.0, %v1211
      %v1213 = vpop.f32.mrb[0].mxu0
      %v1214 = vpop.f32.mrb[0].mxu0
      %v1215 = vadd.f32 0.0, %v1214
      %v1216 = vpop.f32.mrb[0].mxu0
      %1217 = vmatprep.mubr.bf16.mxu0 0
      %1218 = vmatmul.mubr.bf16.gmra.mrb[0].mxu0 %v1090
      %v1219 = vpop.f32.mrb[0].mxu0
      %v1220 = vadd.f32 0.0, %v1219
      %v1221 = vpop.f32.mrb[0].mxu0
      %v1222 = vpop.f32.mrb[0].mxu0
      %v1223 = vadd.f32 0.0, %v1222
      %v1224 = vpop.f32.mrb[0].mxu0
      %1225 = vmatprep.mubr.bf16.mxu0 0
      %1226 = vmatmul.mubr.bf16.gmra.mrb[0].mxu0 %v1093
      %v1227 = vpop.f32.mrb[0].mxu0
      %v1228 = vadd.f32 0.0, %v1227
      %v1229 = vpop.f32.mrb[0].mxu0
      %v1230 = vpop.f32.mrb[0].mxu0
      %v1231 = vadd.f32 0.0, %v1230
      %v1232 = vpop.f32.mrb[0].mxu0
      %1233 = vmatprep.mubr.bf16.mxu0 0
      %1234 = vmatmul.mubr.bf16.gmra.mrb[0].mxu0 %v1096
      %v1235 = vpop.f32.mrb[0].mxu0
      %v1236 = vadd.f32 0.0, %v1235
      %v1237 = vpop.f32.mrb[0].mxu0
      %v1238 = vpop.f32.mrb[0].mxu0
      %v1239 = vadd.f32 0.0, %v1238
      %v1240 = vpop.f32.mrb[0].mxu0
      %1241 = vmatprep.mubr.bf16.mxu0 0
      %1242 = vmatmul.mubr.bf16.gmra.mrb[0].mxu0 %v1099
      %v1243 = vpop.f32.mrb[0].mxu0
      %v1244 = vadd.f32 0.0, %v1243
      %v1245 = vpop.f32.mrb[0].mxu0
      %v1246 = vpop.f32.mrb[0].mxu0
      %v1247 = vadd.f32 0.0, %v1246
      %v1248 = vpop.f32.mrb[0].mxu0
      %1249 = vmatprep.mubr.bf16.mxu0 0
      %1250 = vmatmul.mubr.bf16.gmra.mrb[0].mxu0 %v1102
      %v1251 = vpop.f32.mrb[0].mxu0
      %v1252 = vadd.f32 0.0, %v1251
      %v1253 = vpop.f32.mrb[0].mxu0
      %v1254 = vpop.f32.mrb[0].mxu0
      %v1255 = vadd.f32 0.0, %v1254
      %v1256 = vpop.f32.mrb[0].mxu0
      %1257 = vmatprep.mubr.bf16.mxu0 0
      %1258 = vmatmul.mubr.bf16.gmra.mrb[0].mxu0 %v1105
      %v1259 = vpop.f32.mrb[0].mxu0
      %v1260 = vadd.f32 0.0, %v1259
      %v1261 = vpop.f32.mrb[0].mxu0
      %v1262 = vpop.f32.mrb[0].mxu0
      %v1263 = vadd.f32 0.0, %v1262
      %v1264 = vpop.f32.mrb[0].mxu0
      %1265 = vmatprep.mubr.bf16.mxu0 0
      %1266 = vmatmul.mubr.bf16.gmra.mrb[0].mxu0 %v1108
      %v1267 = vpop.f32.mrb[0].mxu0
      %v1268 = vadd.f32 0.0, %v1267
      %v1269 = vpop.f32.mrb[0].mxu0
      %v1270 = vpop.f32.mrb[0].mxu0
      %v1271 = vadd.f32 0.0, %v1270
      %v1272 = vpop.f32.mrb[0].mxu0
      %1273 = vdwg.mxu0
      %v1274 = vld [vmem:[%s6] sm:$0x1]
      %v1275 = vlaneseq
      %v1276 = vshrl.u32 %v1275, 7
      %v1277 = vsub.s32 0, %v1276
      %v1278 = vrot.slane %v1274, %v1277
      %v1279 = vmul.f32 %v1148, %v1278
      %v1280 = vmul.f32 %v1151, %v1278
      %v1281 = vmul.f32 %v1156, %v1278
      %v1282 = vmul.f32 %v1159, %v1278
      %v1283 = vmul.f32 %v1164, %v1278
      %v1284 = vmul.f32 %v1167, %v1278
      %v1285 = vmul.f32 %v1172, %v1278
      %v1286 = vmul.f32 %v1175, %v1278
      %v1287 = vmul.f32 %v1180, %v1278
      %v1288 = vmul.f32 %v1183, %v1278
      %v1289 = vmul.f32 %v1188, %v1278
      %v1290 = vmul.f32 %v1191, %v1278
      %v1291 = vmul.f32 %v1196, %v1278
      %v1292 = vmul.f32 %v1199, %v1278
      %v1293 = vmul.f32 %v1204, %v1278
      %v1294 = vmul.f32 %v1207, %v1278
      %v1295 = vmul.f32 %v1212, %v1278
      %v1296 = vmul.f32 %v1215, %v1278
      %v1297 = vmul.f32 %v1220, %v1278
      %v1298 = vmul.f32 %v1223, %v1278
      %v1299 = vmul.f32 %v1228, %v1278
      %v1300 = vmul.f32 %v1231, %v1278
      %v1301 = vmul.f32 %v1236, %v1278
      %v1302 = vmul.f32 %v1239, %v1278
      %v1303 = vmul.f32 %v1244, %v1278
      %v1304 = vmul.f32 %v1247, %v1278
      %v1305 = vmul.f32 %v1252, %v1278
      %v1306 = vmul.f32 %v1255, %v1278
      %v1307 = vmul.f32 %v1260, %v1278
      %v1308 = vmul.f32 %v1263, %v1278
      %v1309 = vmul.f32 %v1268, %v1278
      %v1310 = vmul.f32 %v1271, %v1278
      %v1311 = vld [vmem:[%s6 + $0x1] sm:$0x1]
      %v1312 = vlaneseq
      %v1313 = vshrl.u32 %v1312, 7
      %v1314 = vsub.s32 0, %v1313
      %v1315 = vrot.slane %v1311, %v1314
      %v1316 = vadd.f32 %v1279, %v1315
      %v1317 = vadd.f32 %v1280, %v1315
      %v1318 = vadd.f32 %v1281, %v1315
      %v1319 = vadd.f32 %v1282, %v1315
      %v1320 = vadd.f32 %v1283, %v1315
      %v1321 = vadd.f32 %v1284, %v1315
      %v1322 = vadd.f32 %v1285, %v1315
      %v1323 = vadd.f32 %v1286, %v1315
      %v1324 = vadd.f32 %v1287, %v1315
      %v1325 = vadd.f32 %v1288, %v1315
      %v1326 = vadd.f32 %v1289, %v1315
      %v1327 = vadd.f32 %v1290, %v1315
      %v1328 = vadd.f32 %v1291, %v1315
      %v1329 = vadd.f32 %v1292, %v1315
      %v1330 = vadd.f32 %v1293, %v1315
      %v1331 = vadd.f32 %v1294, %v1315
      %v1332 = vadd.f32 %v1295, %v1315
      %v1333 = vadd.f32 %v1296, %v1315
      %v1334 = vadd.f32 %v1297, %v1315
      %v1335 = vadd.f32 %v1298, %v1315
      %v1336 = vadd.f32 %v1299, %v1315
      %v1337 = vadd.f32 %v1300, %v1315
      %v1338 = vadd.f32 %v1301, %v1315
      %v1339 = vadd.f32 %v1302, %v1315
      %v1340 = vadd.f32 %v1303, %v1315
      %v1341 = vadd.f32 %v1304, %v1315
      %v1342 = vadd.f32 %v1305, %v1315
      %v1343 = vadd.f32 %v1306, %v1315
      %v1344 = vadd.f32 %v1307, %v1315
      %v1345 = vadd.f32 %v1308, %v1315
      %v1346 = vadd.f32 %v1309, %v1315
      %v1347 = vadd.f32 %v1310, %v1315
      %v1348 = vsub.f32 0.0, %v1316
      %v1349 = vsub.f32 0.0, %v1317
      %v1350 = vsub.f32 0.0, %v1318
      %v1351 = vsub.f32 0.0, %v1319
      %v1352 = vsub.f32 0.0, %v1320
      %v1353 = vsub.f32 0.0, %v1321
      %v1354 = vsub.f32 0.0, %v1322
      %v1355 = vsub.f32 0.0, %v1323
      %v1356 = vsub.f32 0.0, %v1324
      %v1357 = vsub.f32 0.0, %v1325
      %v1358 = vsub.f32 0.0, %v1326
      %v1359 = vsub.f32 0.0, %v1327
      %v1360 = vsub.f32 0.0, %v1328
      %v1361 = vsub.f32 0.0, %v1329
      %v1362 = vsub.f32 0.0, %v1330
      %v1363 = vsub.f32 0.0, %v1331
      %v1364 = vsub.f32 0.0, %v1332
      %v1365 = vsub.f32 0.0, %v1333
      %v1366 = vsub.f32 0.0, %v1334
      %v1367 = vsub.f32 0.0, %v1335
      %v1368 = vsub.f32 0.0, %v1336
      %v1369 = vsub.f32 0.0, %v1337
      %v1370 = vsub.f32 0.0, %v1338
      %v1371 = vsub.f32 0.0, %v1339
      %v1372 = vsub.f32 0.0, %v1340
      %v1373 = vsub.f32 0.0, %v1341
      %v1374 = vsub.f32 0.0, %v1342
      %v1375 = vsub.f32 0.0, %v1343
      %v1376 = vsub.f32 0.0, %v1344
      %v1377 = vsub.f32 0.0, %v1345
      %v1378 = vsub.f32 0.0, %v1346
      %v1379 = vsub.f32 0.0, %v1347
      %v1380 = vmul.f32 %v1348, 1.442695
      %v1381 = vpow.pop %v1380
      %v1382 = vmul.f32 %v1349, 1.442695
      %v1383 = vpow.pop %v1382
      %v1384 = vmul.f32 %v1350, 1.442695
      %v1385 = vpow.pop %v1384
      %v1386 = vmul.f32 %v1351, 1.442695
      %v1387 = vpow.pop %v1386
      %v1388 = vmul.f32 %v1352, 1.442695
      %v1389 = vpow.pop %v1388
      %v1390 = vmul.f32 %v1353, 1.442695
      %v1391 = vpow.pop %v1390
      %v1392 = vmul.f32 %v1354, 1.442695
      %v1393 = vpow.pop %v1392
      %v1394 = vmul.f32 %v1355, 1.442695
      %v1395 = vpow.pop %v1394
      %v1396 = vmul.f32 %v1356, 1.442695
      %v1397 = vpow.pop %v1396
      %v1398 = vmul.f32 %v1357, 1.442695
      %v1399 = vpow.pop %v1398
      %v1400 = vmul.f32 %v1358, 1.442695
      %v1401 = vpow.pop %v1400
      %v1402 = vmul.f32 %v1359, 1.442695
      %v1403 = vpow.pop %v1402
      %v1404 = vmul.f32 %v1360, 1.442695
      %v1405 = vpow.pop %v1404
      %v1406 = vmul.f32 %v1361, 1.442695
      %v1407 = vpow.pop %v1406
      %v1408 = vmul.f32 %v1362, 1.442695
      %v1409 = vpow.pop %v1408
      %v1410 = vmul.f32 %v1363, 1.442695
      %v1411 = vpow.pop %v1410
      %v1412 = vmul.f32 %v1364, 1.442695
      %v1413 = vpow.pop %v1412
      %v1414 = vmul.f32 %v1365, 1.442695
      %v1415 = vpow.pop %v1414
      %v1416 = vmul.f32 %v1366, 1.442695
      %v1417 = vpow.pop %v1416
      %v1418 = vmul.f32 %v1367, 1.442695
      %v1419 = vpow.pop %v1418
      %v1420 = vmul.f32 %v1368, 1.442695
      %v1421 = vpow.pop %v1420
      %v1422 = vmul.f32 %v1369, 1.442695
      %v1423 = vpow.pop %v1422
      %v1424 = vmul.f32 %v1370, 1.442695
      %v1425 = vpow.pop %v1424
      %v1426 = vmul.f32 %v1371, 1.442695
      %v1427 = vpow.pop %v1426
      %v1428 = vmul.f32 %v1372, 1.442695
      %v1429 = vpow.pop %v1428
      %v1430 = vmul.f32 %v1373, 1.442695
      %v1431 = vpow.pop %v1430
      %v1432 = vmul.f32 %v1374, 1.442695
      %v1433 = vpow.pop %v1432
      %v1434 = vmul.f32 %v1375, 1.442695
      %v1435 = vpow.pop %v1434
      %v1436 = vmul.f32 %v1376, 1.442695
      %v1437 = vpow.pop %v1436
      %v1438 = vmul.f32 %v1377, 1.442695
      %v1439 = vpow.pop %v1438
      %v1440 = vmul.f32 %v1378, 1.442695
      %v1441 = vpow.pop %v1440
      %v1442 = vmul.f32 %v1379, 1.442695
      %v1443 = vpow.pop %v1442
      %v1444 = vadd.f32 %v1381, 1.0
      %v1445 = vadd.f32 %v1383, 1.0
      %v1446 = vadd.f32 %v1385, 1.0
      %v1447 = vadd.f32 %v1387, 1.0
      %v1448 = vadd.f32 %v1389, 1.0
      %v1449 = vadd.f32 %v1391, 1.0
      %v1450 = vadd.f32 %v1393, 1.0
      %v1451 = vadd.f32 %v1395, 1.0
      %v1452 = vadd.f32 %v1397, 1.0
      %v1453 = vadd.f32 %v1399, 1.0
      %v1454 = vadd.f32 %v1401, 1.0
      %v1455 = vadd.f32 %v1403, 1.0
      %v1456 = vadd.f32 %v1405, 1.0
      %v1457 = vadd.f32 %v1407, 1.0
      %v1458 = vadd.f32 %v1409, 1.0
      %v1459 = vadd.f32 %v1411, 1.0
      %v1460 = vadd.f32 %v1413, 1.0
      %v1461 = vadd.f32 %v1415, 1.0
      %v1462 = vadd.f32 %v1417, 1.0
      %v1463 = vadd.f32 %v1419, 1.0
      %v1464 = vadd.f32 %v1421, 1.0
      %v1465 = vadd.f32 %v1423, 1.0
      %v1466 = vadd.f32 %v1425, 1.0
      %v1467 = vadd.f32 %v1427, 1.0
      %v1468 = vadd.f32 %v1429, 1.0
      %v1469 = vadd.f32 %v1431, 1.0
      %v1470 = vadd.f32 %v1433, 1.0
      %v1471 = vadd.f32 %v1435, 1.0
      %v1472 = vadd.f32 %v1437, 1.0
      %v1473 = vadd.f32 %v1439, 1.0
      %v1474 = vadd.f32 %v1441, 1.0
      %v1475 = vadd.f32 %v1443, 1.0
      %v1476 = vrcp.pop %v1444
      %v1477 = vrcp.pop %v1445
      %v1478 = vrcp.pop %v1446
      %v1479 = vrcp.pop %v1447
      %v1480 = vrcp.pop %v1448
      %v1481 = vrcp.pop %v1449
      %v1482 = vrcp.pop %v1450
      %v1483 = vrcp.pop %v1451
      %v1484 = vrcp.pop %v1452
      %v1485 = vrcp.pop %v1453
      %v1486 = vrcp.pop %v1454
      %v1487 = vrcp.pop %v1455
      %v1488 = vrcp.pop %v1456
      %v1489 = vrcp.pop %v1457
      %v1490 = vrcp.pop %v1458
      %v1491 = vrcp.pop %v1459
      %v1492 = vrcp.pop %v1460
      %v1493 = vrcp.pop %v1461
      %v1494 = vrcp.pop %v1462
      %v1495 = vrcp.pop %v1463
      %v1496 = vrcp.pop %v1464
      %v1497 = vrcp.pop %v1465
      %v1498 = vrcp.pop %v1466
      %v1499 = vrcp.pop %v1467
      %v1500 = vrcp.pop %v1468
      %v1501 = vrcp.pop %v1469
      %v1502 = vrcp.pop %v1470
      %v1503 = vrcp.pop %v1471
      %v1504 = vrcp.pop %v1472
      %v1505 = vrcp.pop %v1473
      %v1506 = vrcp.pop %v1474
      %v1507 = vrcp.pop %v1475
      %v1508 = vmul.f32 %v1316, %v1476
      %v1509 = vmul.f32 %v1317, %v1477
      %v1510 = vmul.f32 %v1318, %v1478
      %v1511 = vmul.f32 %v1319, %v1479
      %v1512 = vmul.f32 %v1320, %v1480
      %v1513 = vmul.f32 %v1321, %v1481
      %v1514 = vmul.f32 %v1322, %v1482
      %v1515 = vmul.f32 %v1323, %v1483
      %v1516 = vmul.f32 %v1324, %v1484
      %v1517 = vmul.f32 %v1325, %v1485
      %v1518 = vmul.f32 %v1326, %v1486
      %v1519 = vmul.f32 %v1327, %v1487
      %v1520 = vmul.f32 %v1328, %v1488
      %v1521 = vmul.f32 %v1329, %v1489
      %v1522 = vmul.f32 %v1330, %v1490
      %v1523 = vmul.f32 %v1331, %v1491
      %v1524 = vmul.f32 %v1332, %v1492
      %v1525 = vmul.f32 %v1333, %v1493
      %v1526 = vmul.f32 %v1334, %v1494
      %v1527 = vmul.f32 %v1335, %v1495
      %v1528 = vmul.f32 %v1336, %v1496
      %v1529 = vmul.f32 %v1337, %v1497
      %v1530 = vmul.f32 %v1338, %v1498
      %v1531 = vmul.f32 %v1339, %v1499
      %v1532 = vmul.f32 %v1340, %v1500
      %v1533 = vmul.f32 %v1341, %v1501
      %v1534 = vmul.f32 %v1342, %v1502
      %v1535 = vmul.f32 %v1343, %v1503
      %v1536 = vmul.f32 %v1344, %v1504
      %v1537 = vmul.f32 %v1345, %v1505
      %v1538 = vmul.f32 %v1346, %v1506
      %v1539 = vmul.f32 %v1347, %v1507
      %v1540 = vrot.slane %v1508, 7
      %v1541 = vrot.slane %v1509, 7
      %v1542 = vrot.slane %v1510, 7
      %v1543 = vrot.slane %v1511, 7
      %v1544 = vrot.slane %v1512, 7
      %v1545 = vrot.slane %v1513, 7
      %v1546 = vrot.slane %v1514, 7
      %v1547 = vrot.slane %v1515, 7
      %v1548 = vrot.slane %v1516, 7
      %v1549 = vrot.slane %v1517, 7
      %v1550 = vrot.slane %v1518, 7
      %v1551 = vrot.slane %v1519, 7
      %v1552 = vrot.slane %v1520, 7
      %v1553 = vrot.slane %v1521, 7
      %v1554 = vrot.slane %v1522, 7
      %v1555 = vrot.slane %v1523, 7
      %v1556 = vrot.slane %v1524, 7
      %v1557 = vrot.slane %v1525, 7
      %v1558 = vrot.slane %v1526, 7
      %v1559 = vrot.slane %v1527, 7
      %v1560 = vrot.slane %v1528, 7
      %v1561 = vrot.slane %v1529, 7
      %v1562 = vrot.slane %v1530, 7
      %v1563 = vrot.slane %v1531, 7
      %v1564 = vrot.slane %v1532, 7
      %v1565 = vrot.slane %v1533, 7
      %v1566 = vrot.slane %v1534, 7
      %v1567 = vrot.slane %v1535, 7
      %v1568 = vrot.slane %v1536, 7
      %v1569 = vrot.slane %v1537, 7
      %v1570 = vrot.slane %v1538, 7
      %v1571 = vrot.slane %v1539, 7
      %v1572 = vlaneseq
      %v1573 = vshrl.u32 %v1572, 7
      %vm1574 = vcmp.lt.s32.totalorder %v1573, 1
      %v1575 = vsel %vm1574, %v1570, %v1571
      %v1576 = vsel %vm1574, %v1569, %v1570
      %v1577 = vsel %vm1574, %v1568, %v1569
      %v1578 = vsel %vm1574, %v1567, %v1568
      %v1579 = vsel %vm1574, %v1566, %v1567
      %v1580 = vsel %vm1574, %v1565, %v1566
      %v1581 = vsel %vm1574, %v1564, %v1565
      %v1582 = vsel %vm1574, %v1563, %v1564
      %v1583 = vsel %vm1574, %v1562, %v1563
      %v1584 = vsel %vm1574, %v1561, %v1562
      %v1585 = vsel %vm1574, %v1560, %v1561
      %v1586 = vsel %vm1574, %v1559, %v1560
      %v1587 = vsel %vm1574, %v1558, %v1559
      %v1588 = vsel %vm1574, %v1557, %v1558
      %v1589 = vsel %vm1574, %v1556, %v1557
      %v1590 = vsel %vm1574, %v1555, %v1556
      %v1591 = vsel %vm1574, %v1554, %v1555
      %v1592 = vsel %vm1574, %v1553, %v1554
      %v1593 = vsel %vm1574, %v1552, %v1553
      %v1594 = vsel %vm1574, %v1551, %v1552
      %v1595 = vsel %vm1574, %v1550, %v1551
      %v1596 = vsel %vm1574, %v1549, %v1550
      %v1597 = vsel %vm1574, %v1548, %v1549
      %v1598 = vsel %vm1574, %v1547, %v1548
      %v1599 = vsel %vm1574, %v1546, %v1547
      %v1600 = vsel %vm1574, %v1545, %v1546
      %v1601 = vsel %vm1574, %v1544, %v1545
      %v1602 = vsel %vm1574, %v1543, %v1544
      %v1603 = vsel %vm1574, %v1542, %v1543
      %v1604 = vsel %vm1574, %v1541, %v1542
      %v1605 = vsel %vm1574, %v1540, %v1541
      %v1606 = vsel %vm1574, %v1571, %v1540
      %vm1607 = vcmp.ge.s32.totalorder %v420, 1
      %vm1608 = vcmp.ge.s32.totalorder %v421, 1
      %vm1609 = vcmp.ge.s32.totalorder %v422, 1
      %vm1610 = vcmp.ge.s32.totalorder %v423, 1
      %vm1611 = vcmp.ge.s32.totalorder %v424, 1
      %vm1612 = vcmp.ge.s32.totalorder %v425, 1
      %vm1613 = vcmp.ge.s32.totalorder %v426, 1
      %vm1614 = vcmp.ge.s32.totalorder %v427, 1
      %vm1615 = vcmp.ge.s32.totalorder %v428, 1
      %vm1616 = vcmp.ge.s32.totalorder %v429, 1
      %vm1617 = vcmp.ge.s32.totalorder %v430, 1
      %vm1618 = vcmp.ge.s32.totalorder %v431, 1
      %vm1619 = vcmp.ge.s32.totalorder %v432, 1
      %vm1620 = vcmp.ge.s32.totalorder %v433, 1
      %vm1621 = vcmp.ge.s32.totalorder %v434, 1
      %vm1622 = vcmp.ge.s32.totalorder %v435, 1
      %vm1623 = vcmp.ge.s32.totalorder %v436, 1
      %vm1624 = vcmp.ge.s32.totalorder %v437, 1
      %vm1625 = vcmp.ge.s32.totalorder %v438, 1
      %vm1626 = vcmp.ge.s32.totalorder %v439, 1
      %vm1627 = vcmp.ge.s32.totalorder %v440, 1
      %vm1628 = vcmp.ge.s32.totalorder %v441, 1
      %vm1629 = vcmp.ge.s32.totalorder %v442, 1
      %vm1630 = vcmp.ge.s32.totalorder %v443, 1
      %vm1631 = vcmp.ge.s32.totalorder %v444, 1
      %vm1632 = vcmp.ge.s32.totalorder %v445, 1
      %vm1633 = vcmp.ge.s32.totalorder %v446, 1
      %vm1634 = vcmp.ge.s32.totalorder %v447, 1
      %vm1635 = vcmp.ge.s32.totalorder %v448, 1
      %vm1636 = vcmp.ge.s32.totalorder %v449, 1
      %vm1637 = vcmp.ge.s32.totalorder %v450, 1
      %vm1638 = vcmp.ge.s32.totalorder %v451, 1
      %vm1639 = vcmp.ge.s32.totalorder %v452, 1
      %vm1640 = vcmp.ge.s32.totalorder %v453, 1
      %vm1641 = vcmp.ge.s32.totalorder %v454, 1
      %vm1642 = vcmp.ge.s32.totalorder %v455, 1
      %vm1643 = vcmp.ge.s32.totalorder %v456, 1
      %vm1644 = vcmp.ge.s32.totalorder %v457, 1
      %vm1645 = vcmp.ge.s32.totalorder %v458, 1
      %vm1646 = vcmp.ge.s32.totalorder %v459, 1
      %vm1647 = vcmp.ge.s32.totalorder %v460, 1
      %vm1648 = vcmp.ge.s32.totalorder %v461, 1
      %vm1649 = vcmp.ge.s32.totalorder %v462, 1
      %vm1650 = vcmp.ge.s32.totalorder %v463, 1
      %vm1651 = vcmp.ge.s32.totalorder %v464, 1
      %vm1652 = vcmp.ge.s32.totalorder %v465, 1
      %vm1653 = vcmp.ge.s32.totalorder %v466, 1
      %vm1654 = vcmp.ge.s32.totalorder %v467, 1
      %vm1655 = vcmp.ge.s32.totalorder %v468, 1
      %vm1656 = vcmp.ge.s32.totalorder %v469, 1
      %vm1657 = vcmp.ge.s32.totalorder %v470, 1
      %vm1658 = vcmp.ge.s32.totalorder %v471, 1
      %vm1659 = vcmp.ge.s32.totalorder %v472, 1
      %vm1660 = vcmp.ge.s32.totalorder %v473, 1
      %vm1661 = vcmp.ge.s32.totalorder %v474, 1
      %vm1662 = vcmp.ge.s32.totalorder %v475, 1
      %vm1663 = vcmp.ge.s32.totalorder %v476, 1
      %vm1664 = vcmp.ge.s32.totalorder %v477, 1
      %vm1665 = vcmp.ge.s32.totalorder %v478, 1
      %vm1666 = vcmp.ge.s32.totalorder %v479, 1
      %vm1667 = vcmp.ge.s32.totalorder %v480, 1
      %vm1668 = vcmp.ge.s32.totalorder %v481, 1
      %vm1669 = vcmp.ge.s32.totalorder %v482, 1
      %vm1670 = vcmp.ge.s32.totalorder %v483, 1
      %vm1671 = vmand %vm1607, %vm1639
      %vm1672 = vmand %vm1608, %vm1640
      %vm1673 = vmand %vm1609, %vm1641
      %vm1674 = vmand %vm1610, %vm1642
      %vm1675 = vmand %vm1611, %vm1643
      %vm1676 = vmand %vm1612, %vm1644
      %vm1677 = vmand %vm1613, %vm1645
      %vm1678 = vmand %vm1614, %vm1646
      %vm1679 = vmand %vm1615, %vm1647
      %vm1680 = vmand %vm1616, %vm1648
      %vm1681 = vmand %vm1617, %vm1649
      %vm1682 = vmand %vm1618, %vm1650
      %vm1683 = vmand %vm1619, %vm1651
      %vm1684 = vmand %vm1620, %vm1652
      %vm1685 = vmand %vm1621, %vm1653
      %vm1686 = vmand %vm1622, %vm1654
      %vm1687 = vmand %vm1623, %vm1655
      %vm1688 = vmand %vm1624, %vm1656
      %vm1689 = vmand %vm1625, %vm1657
      %vm1690 = vmand %vm1626, %vm1658
      %vm1691 = vmand %vm1627, %vm1659
      %vm1692 = vmand %vm1628, %vm1660
      %vm1693 = vmand %vm1629, %vm1661
      %vm1694 = vmand %vm1630, %vm1662
      %vm1695 = vmand %vm1631, %vm1663
      %vm1696 = vmand %vm1632, %vm1664
      %vm1697 = vmand %vm1633, %vm1665
      %vm1698 = vmand %vm1634, %vm1666
      %vm1699 = vmand %vm1635, %vm1667
      %vm1700 = vmand %vm1636, %vm1668
      %vm1701 = vmand %vm1637, %vm1669
      %vm1702 = vmand %vm1638, %vm1670
      %v1703 = vsel %vm1671, 1, 0
      %v1704 = vsel %vm1672, 1, 0
      %v1705 = vsel %vm1673, 1, 0
      %v1706 = vsel %vm1674, 1, 0
      %v1707 = vsel %vm1675, 1, 0
      %v1708 = vsel %vm1676, 1, 0
      %v1709 = vsel %vm1677, 1, 0
      %v1710 = vsel %vm1678, 1, 0
      %v1711 = vsel %vm1679, 1, 0
      %v1712 = vsel %vm1680, 1, 0
      %v1713 = vsel %vm1681, 1, 0
      %v1714 = vsel %vm1682, 1, 0
      %v1715 = vsel %vm1683, 1, 0
      %v1716 = vsel %vm1684, 1, 0
      %v1717 = vsel %vm1685, 1, 0
      %v1718 = vsel %vm1686, 1, 0
      %v1719 = vsel %vm1687, 1, 0
      %v1720 = vsel %vm1688, 1, 0
      %v1721 = vsel %vm1689, 1, 0
      %v1722 = vsel %vm1690, 1, 0
      %v1723 = vsel %vm1691, 1, 0
      %v1724 = vsel %vm1692, 1, 0
      %v1725 = vsel %vm1693, 1, 0
      %v1726 = vsel %vm1694, 1, 0
      %v1727 = vsel %vm1695, 1, 0
      %v1728 = vsel %vm1696, 1, 0
      %v1729 = vsel %vm1697, 1, 0
      %v1730 = vsel %vm1698, 1, 0
      %v1731 = vsel %vm1699, 1, 0
      %v1732 = vsel %vm1700, 1, 0
      %v1733 = vsel %vm1701, 1, 0
      %v1734 = vsel %vm1702, 1, 0
      %1735 = vset.pattern.permute.xlu0 0
      %1736 = vperm.xlu0 %1735, %v1703
      %v1737 = vpop.permute.xlu0 %1736
      %1738 = vset.pattern.permute.xlu0 0
      %1739 = vperm.xlu0 %1738, %v1704
      %v1740 = vpop.permute.xlu0 %1739
      %1741 = vset.pattern.permute.xlu0 0
      %1742 = vperm.xlu0 %1741, %v1705
      %v1743 = vpop.permute.xlu0 %1742
      %1744 = vset.pattern.permute.xlu0 0
      %1745 = vperm.xlu0 %1744, %v1706
      %v1746 = vpop.permute.xlu0 %1745
      %1747 = vset.pattern.permute.xlu0 0
      %1748 = vperm.xlu0 %1747, %v1707
      %v1749 = vpop.permute.xlu0 %1748
      %1750 = vset.pattern.permute.xlu0 0
      %1751 = vperm.xlu0 %1750, %v1708
      %v1752 = vpop.permute.xlu0 %1751
      %1753 = vset.pattern.permute.xlu0 0
      %1754 = vperm.xlu0 %1753, %v1709
      %v1755 = vpop.permute.xlu0 %1754
      %1756 = vset.pattern.permute.xlu0 0
      %1757 = vperm.xlu0 %1756, %v1710
      %v1758 = vpop.permute.xlu0 %1757
      %1759 = vset.pattern.permute.xlu0 0
      %1760 = vperm.xlu0 %1759, %v1711
      %v1761 = vpop.permute.xlu0 %1760
      %1762 = vset.pattern.permute.xlu0 0
      %1763 = vperm.xlu0 %1762, %v1712
      %v1764 = vpop.permute.xlu0 %1763
      %1765 = vset.pattern.permute.xlu0 0
      %1766 = vperm.xlu0 %1765, %v1713
      %v1767 = vpop.permute.xlu0 %1766
      %1768 = vset.pattern.permute.xlu0 0
      %1769 = vperm.xlu0 %1768, %v1714
      %v1770 = vpop.permute.xlu0 %1769
      %1771 = vset.pattern.permute.xlu0 0
      %1772 = vperm.xlu0 %1771, %v1715
      %v1773 = vpop.permute.xlu0 %1772
      %1774 = vset.pattern.permute.xlu0 0
      %1775 = vperm.xlu0 %1774, %v1716
      %v1776 = vpop.permute.xlu0 %1775
      %1777 = vset.pattern.permute.xlu0 0
      %1778 = vperm.xlu0 %1777, %v1717
      %v1779 = vpop.permute.xlu0 %1778
      %1780 = vset.pattern.permute.xlu0 0
      %1781 = vperm.xlu0 %1780, %v1718
      %v1782 = vpop.permute.xlu0 %1781
      %1783 = vset.pattern.permute.xlu0 0
      %1784 = vperm.xlu0 %1783, %v1719
      %v1785 = vpop.permute.xlu0 %1784
      %1786 = vset.pattern.permute.xlu0 0
      %1787 = vperm.xlu0 %1786, %v1720
      %v1788 = vpop.permute.xlu0 %1787
      %1789 = vset.pattern.permute.xlu0 0
      %1790 = vperm.xlu0 %1789, %v1721
      %v1791 = vpop.permute.xlu0 %1790
      %1792 = vset.pattern.permute.xlu0 0
      %1793 = vperm.xlu0 %1792, %v1722
      %v1794 = vpop.permute.xlu0 %1793
      %1795 = vset.pattern.permute.xlu0 0
      %1796 = vperm.xlu0 %1795, %v1723
      %v1797 = vpop.permute.xlu0 %1796
      %1798 = vset.pattern.permute.xlu0 0
      %1799 = vperm.xlu0 %1798, %v1724
      %v1800 = vpop.permute.xlu0 %1799
      %1801 = vset.pattern.permute.xlu0 0
      %1802 = vperm.xlu0 %1801, %v1725
      %v1803 = vpop.permute.xlu0 %1802
      %1804 = vset.pattern.permute.xlu0 0
      %1805 = vperm.xlu0 %1804, %v1726
      %v1806 = vpop.permute.xlu0 %1805
      %1807 = vset.pattern.permute.xlu0 0
      %1808 = vperm.xlu0 %1807, %v1727
      %v1809 = vpop.permute.xlu0 %1808
      %1810 = vset.pattern.permute.xlu0 0
      %1811 = vperm.xlu0 %1810, %v1728
      %v1812 = vpop.permute.xlu0 %1811
      %1813 = vset.pattern.permute.xlu0 0
      %1814 = vperm.xlu0 %1813, %v1729
      %v1815 = vpop.permute.xlu0 %1814
      %1816 = vset.pattern.permute.xlu0 0
      %1817 = vperm.xlu0 %1816, %v1730
      %v1818 = vpop.permute.xlu0 %1817
      %1819 = vset.pattern.permute.xlu0 0
      %1820 = vperm.xlu0 %1819, %v1731
      %v1821 = vpop.permute.xlu0 %1820
      %1822 = vset.pattern.permute.xlu0 0
      %1823 = vperm.xlu0 %1822, %v1732
      %v1824 = vpop.permute.xlu0 %1823
      %1825 = vset.pattern.permute.xlu0 0
      %1826 = vperm.xlu0 %1825, %v1733
      %v1827 = vpop.permute.xlu0 %1826
      %1828 = vset.pattern.permute.xlu0 0
      %1829 = vperm.xlu0 %1828, %v1734
      %v1830 = vpop.permute.xlu0 %1829
      %vm1831 = vcmp.eq.s32.totalorder %v1737, 1
      %vm1832 = vcmp.eq.s32.totalorder %v1740, 1
      %vm1833 = vcmp.eq.s32.totalorder %v1743, 1
      %vm1834 = vcmp.eq.s32.totalorder %v1746, 1
      %vm1835 = vcmp.eq.s32.totalorder %v1749, 1
      %vm1836 = vcmp.eq.s32.totalorder %v1752, 1
      %vm1837 = vcmp.eq.s32.totalorder %v1755, 1
      %vm1838 = vcmp.eq.s32.totalorder %v1758, 1
      %vm1839 = vcmp.eq.s32.totalorder %v1761, 1
      %vm1840 = vcmp.eq.s32.totalorder %v1764, 1
      %vm1841 = vcmp.eq.s32.totalorder %v1767, 1
      %vm1842 = vcmp.eq.s32.totalorder %v1770, 1
      %vm1843 = vcmp.eq.s32.totalorder %v1773, 1
      %vm1844 = vcmp.eq.s32.totalorder %v1776, 1
      %vm1845 = vcmp.eq.s32.totalorder %v1779, 1
      %vm1846 = vcmp.eq.s32.totalorder %v1782, 1
      %vm1847 = vcmp.eq.s32.totalorder %v1785, 1
      %vm1848 = vcmp.eq.s32.totalorder %v1788, 1
      %vm1849 = vcmp.eq.s32.totalorder %v1791, 1
      %vm1850 = vcmp.eq.s32.totalorder %v1794, 1
      %vm1851 = vcmp.eq.s32.totalorder %v1797, 1
      %vm1852 = vcmp.eq.s32.totalorder %v1800, 1
      %vm1853 = vcmp.eq.s32.totalorder %v1803, 1
      %vm1854 = vcmp.eq.s32.totalorder %v1806, 1
      %vm1855 = vcmp.eq.s32.totalorder %v1809, 1
      %vm1856 = vcmp.eq.s32.totalorder %v1812, 1
      %vm1857 = vcmp.eq.s32.totalorder %v1815, 1
      %vm1858 = vcmp.eq.s32.totalorder %v1818, 1
      %vm1859 = vcmp.eq.s32.totalorder %v1821, 1
      %vm1860 = vcmp.eq.s32.totalorder %v1824, 1
      %vm1861 = vcmp.eq.s32.totalorder %v1827, 1
      %vm1862 = vcmp.eq.s32.totalorder %v1830, 1
      %v1863 = vsel %vm1831, %v1576, 0.0
      %v1864 = vsel %vm1832, %v1575, 0.0
      %v1865 = vsel %vm1833, %v1606, 0.0
      %v1866 = vsel %vm1834, %v1605, 0.0
      %v1867 = vsel %vm1835, %v1604, 0.0
      %v1868 = vsel %vm1836, %v1603, 0.0
      %v1869 = vsel %vm1837, %v1602, 0.0
      %v1870 = vsel %vm1838, %v1601, 0.0
      %v1871 = vsel %vm1839, %v1600, 0.0
      %v1872 = vsel %vm1840, %v1599, 0.0
      %v1873 = vsel %vm1841, %v1598, 0.0
      %v1874 = vsel %vm1842, %v1597, 0.0
      %v1875 = vsel %vm1843, %v1596, 0.0
      %v1876 = vsel %vm1844, %v1595, 0.0
      %v1877 = vsel %vm1845, %v1594, 0.0
      %v1878 = vsel %vm1846, %v1593, 0.0
      %v1879 = vsel %vm1847, %v1592, 0.0
      %v1880 = vsel %vm1848, %v1591, 0.0
      %v1881 = vsel %vm1849, %v1590, 0.0
      %v1882 = vsel %vm1850, %v1589, 0.0
      %v1883 = vsel %vm1851, %v1588, 0.0
      %v1884 = vsel %vm1852, %v1587, 0.0
      %v1885 = vsel %vm1853, %v1586, 0.0
      %v1886 = vsel %vm1854, %v1585, 0.0
      %v1887 = vsel %vm1855, %v1584, 0.0
      %v1888 = vsel %vm1856, %v1583, 0.0
      %v1889 = vsel %vm1857, %v1582, 0.0
      %v1890 = vsel %vm1858, %v1581, 0.0
      %v1891 = vsel %vm1859, %v1580, 0.0
      %v1892 = vsel %vm1860, %v1579, 0.0
      %v1893 = vsel %vm1861, %v1578, 0.0
      %v1894 = vsel %vm1862, %v1577, 0.0
      %v1895 = vsel %vm1607, 1, 0
      %v1896 = vsel %vm1608, 1, 0
      %v1897 = vsel %vm1609, 1, 0
      %v1898 = vsel %vm1610, 1, 0
      %v1899 = vsel %vm1611, 1, 0
      %v1900 = vsel %vm1612, 1, 0
      %v1901 = vsel %vm1613, 1, 0
      %v1902 = vsel %vm1614, 1, 0
      %v1903 = vsel %vm1615, 1, 0
      %v1904 = vsel %vm1616, 1, 0
      %v1905 = vsel %vm1617, 1, 0
      %v1906 = vsel %vm1618, 1, 0
      %v1907 = vsel %vm1619, 1, 0
      %v1908 = vsel %vm1620, 1, 0
      %v1909 = vsel %vm1621, 1, 0
      %v1910 = vsel %vm1622, 1, 0
      %v1911 = vsel %vm1623, 1, 0
      %v1912 = vsel %vm1624, 1, 0
      %v1913 = vsel %vm1625, 1, 0
      %v1914 = vsel %vm1626, 1, 0
      %v1915 = vsel %vm1627, 1, 0
      %v1916 = vsel %vm1628, 1, 0
      %v1917 = vsel %vm1629, 1, 0
      %v1918 = vsel %vm1630, 1, 0
      %v1919 = vsel %vm1631, 1, 0
      %v1920 = vsel %vm1632, 1, 0
      %v1921 = vsel %vm1633, 1, 0
      %v1922 = vsel %vm1634, 1, 0
      %v1923 = vsel %vm1635, 1, 0
      %v1924 = vsel %vm1636, 1, 0
      %v1925 = vsel %vm1637, 1, 0
      %v1926 = vsel %vm1638, 1, 0
      %1927 = vset.pattern.permute.xlu0 0
      %1928 = vperm.xlu0 %1927, %v1895
      %v1929 = vpop.permute.xlu0 %1928
      %1930 = vset.pattern.permute.xlu0 0
      %1931 = vperm.xlu0 %1930, %v1896
      %v1932 = vpop.permute.xlu0 %1931
      %1933 = vset.pattern.permute.xlu0 0
      %1934 = vperm.xlu0 %1933, %v1897
      %v1935 = vpop.permute.xlu0 %1934
      %1936 = vset.pattern.permute.xlu0 0
      %1937 = vperm.xlu0 %1936, %v1898
      %v1938 = vpop.permute.xlu0 %1937
      %1939 = vset.pattern.permute.xlu0 0
      %1940 = vperm.xlu0 %1939, %v1899
      %v1941 = vpop.permute.xlu0 %1940
      %1942 = vset.pattern.permute.xlu0 0
      %1943 = vperm.xlu0 %1942, %v1900
      %v1944 = vpop.permute.xlu0 %1943
      %1945 = vset.pattern.permute.xlu0 0
      %1946 = vperm.xlu0 %1945, %v1901
      %v1947 = vpop.permute.xlu0 %1946
      %1948 = vset.pattern.permute.xlu0 0
      %1949 = vperm.xlu0 %1948, %v1902
      %v1950 = vpop.permute.xlu0 %1949
      %1951 = vset.pattern.permute.xlu0 0
      %1952 = vperm.xlu0 %1951, %v1903
      %v1953 = vpop.permute.xlu0 %1952
      %1954 = vset.pattern.permute.xlu0 0
      %1955 = vperm.xlu0 %1954, %v1904
      %v1956 = vpop.permute.xlu0 %1955
      %1957 = vset.pattern.permute.xlu0 0
      %1958 = vperm.xlu0 %1957, %v1905
      %v1959 = vpop.permute.xlu0 %1958
      %1960 = vset.pattern.permute.xlu0 0
      %1961 = vperm.xlu0 %1960, %v1906
      %v1962 = vpop.permute.xlu0 %1961
      %1963 = vset.pattern.permute.xlu0 0
      %1964 = vperm.xlu0 %1963, %v1907
      %v1965 = vpop.permute.xlu0 %1964
      %1966 = vset.pattern.permute.xlu0 0
      %1967 = vperm.xlu0 %1966, %v1908
      %v1968 = vpop.permute.xlu0 %1967
      %1969 = vset.pattern.permute.xlu0 0
      %1970 = vperm.xlu0 %1969, %v1909
      %v1971 = vpop.permute.xlu0 %1970
      %1972 = vset.pattern.permute.xlu0 0
      %1973 = vperm.xlu0 %1972, %v1910
      %v1974 = vpop.permute.xlu0 %1973
      %1975 = vset.pattern.permute.xlu0 0
      %1976 = vperm.xlu0 %1975, %v1911
      %v1977 = vpop.permute.xlu0 %1976
      %1978 = vset.pattern.permute.xlu0 0
      %1979 = vperm.xlu0 %1978, %v1912
      %v1980 = vpop.permute.xlu0 %1979
      %1981 = vset.pattern.permute.xlu0 0
      %1982 = vperm.xlu0 %1981, %v1913
      %v1983 = vpop.permute.xlu0 %1982
      %1984 = vset.pattern.permute.xlu0 0
      %1985 = vperm.xlu0 %1984, %v1914
      %v1986 = vpop.permute.xlu0 %1985
      %1987 = vset.pattern.permute.xlu0 0
      %1988 = vperm.xlu0 %1987, %v1915
      %v1989 = vpop.permute.xlu0 %1988
      %1990 = vset.pattern.permute.xlu0 0
      %1991 = vperm.xlu0 %1990, %v1916
      %v1992 = vpop.permute.xlu0 %1991
      %1993 = vset.pattern.permute.xlu0 0
      %1994 = vperm.xlu0 %1993, %v1917
      %v1995 = vpop.permute.xlu0 %1994
      %1996 = vset.pattern.permute.xlu0 0
      %1997 = vperm.xlu0 %1996, %v1918
      %v1998 = vpop.permute.xlu0 %1997
      %1999 = vset.pattern.permute.xlu0 0
      %2000 = vperm.xlu0 %1999, %v1919
      %v2001 = vpop.permute.xlu0 %2000
      %2002 = vset.pattern.permute.xlu0 0
      %2003 = vperm.xlu0 %2002, %v1920
      %v2004 = vpop.permute.xlu0 %2003
      %2005 = vset.pattern.permute.xlu0 0
      %2006 = vperm.xlu0 %2005, %v1921
      %v2007 = vpop.permute.xlu0 %2006
      %2008 = vset.pattern.permute.xlu0 0
      %2009 = vperm.xlu0 %2008, %v1922
      %v2010 = vpop.permute.xlu0 %2009
      %2011 = vset.pattern.permute.xlu0 0
      %2012 = vperm.xlu0 %2011, %v1923
      %v2013 = vpop.permute.xlu0 %2012
      %2014 = vset.pattern.permute.xlu0 0
      %2015 = vperm.xlu0 %2014, %v1924
      %v2016 = vpop.permute.xlu0 %2015
      %2017 = vset.pattern.permute.xlu0 0
      %2018 = vperm.xlu0 %2017, %v1925
      %v2019 = vpop.permute.xlu0 %2018
      %2020 = vset.pattern.permute.xlu0 0
      %2021 = vperm.xlu0 %2020, %v1926
      %v2022 = vpop.permute.xlu0 %2021
      %vm2023 = vcmp.eq.s32.totalorder %v1929, 1
      %vm2024 = vcmp.eq.s32.totalorder %v1932, 1
      %vm2025 = vcmp.eq.s32.totalorder %v1935, 1
      %vm2026 = vcmp.eq.s32.totalorder %v1938, 1
      %vm2027 = vcmp.eq.s32.totalorder %v1941, 1
      %vm2028 = vcmp.eq.s32.totalorder %v1944, 1
      %vm2029 = vcmp.eq.s32.totalorder %v1947, 1
      %vm2030 = vcmp.eq.s32.totalorder %v1950, 1
      %vm2031 = vcmp.eq.s32.totalorder %v1953, 1
      %vm2032 = vcmp.eq.s32.totalorder %v1956, 1
      %vm2033 = vcmp.eq.s32.totalorder %v1959, 1
      %vm2034 = vcmp.eq.s32.totalorder %v1962, 1
      %vm2035 = vcmp.eq.s32.totalorder %v1965, 1
      %vm2036 = vcmp.eq.s32.totalorder %v1968, 1
      %vm2037 = vcmp.eq.s32.totalorder %v1971, 1
      %vm2038 = vcmp.eq.s32.totalorder %v1974, 1
      %vm2039 = vcmp.eq.s32.totalorder %v1977, 1
      %vm2040 = vcmp.eq.s32.totalorder %v1980, 1
      %vm2041 = vcmp.eq.s32.totalorder %v1983, 1
      %vm2042 = vcmp.eq.s32.totalorder %v1986, 1
      %vm2043 = vcmp.eq.s32.totalorder %v1989, 1
      %vm2044 = vcmp.eq.s32.totalorder %v1992, 1
      %vm2045 = vcmp.eq.s32.totalorder %v1995, 1
      %vm2046 = vcmp.eq.s32.totalorder %v1998, 1
      %vm2047 = vcmp.eq.s32.totalorder %v2001, 1
      %vm2048 = vcmp.eq.s32.totalorder %v2004, 1
      %vm2049 = vcmp.eq.s32.totalorder %v2007, 1
      %vm2050 = vcmp.eq.s32.totalorder %v2010, 1
      %vm2051 = vcmp.eq.s32.totalorder %v2013, 1
      %vm2052 = vcmp.eq.s32.totalorder %v2016, 1
      %vm2053 = vcmp.eq.s32.totalorder %v2019, 1
      %vm2054 = vcmp.eq.s32.totalorder %v2022, 1
      %v2055 = vsel %vm2023, %v1538, 0.0
      %v2056 = vsel %vm2024, %v1539, 0.0
      %v2057 = vsel %vm2025, %v1508, 0.0
      %v2058 = vsel %vm2026, %v1509, 0.0
      %v2059 = vsel %vm2027, %v1510, 0.0
      %v2060 = vsel %vm2028, %v1511, 0.0
      %v2061 = vsel %vm2029, %v1512, 0.0
      %v2062 = vsel %vm2030, %v1513, 0.0
      %v2063 = vsel %vm2031, %v1514, 0.0
      %v2064 = vsel %vm2032, %v1515, 0.0
      %v2065 = vsel %vm2033, %v1516, 0.0
      %v2066 = vsel %vm2034, %v1517, 0.0
      %v2067 = vsel %vm2035, %v1518, 0.0
      %v2068 = vsel %vm2036, %v1519, 0.0
      %v2069 = vsel %vm2037, %v1520, 0.0
      %v2070 = vsel %vm2038, %v1521, 0.0
      %v2071 = vsel %vm2039, %v1522, 0.0
      %v2072 = vsel %vm2040, %v1523, 0.0
      %v2073 = vsel %vm2041, %v1524, 0.0
      %v2074 = vsel %vm2042, %v1525, 0.0
      %v2075 = vsel %vm2043, %v1526, 0.0
      %v2076 = vsel %vm2044, %v1527, 0.0
      %v2077 = vsel %vm2045, %v1528, 0.0
      %v2078 = vsel %vm2046, %v1529, 0.0
      %v2079 = vsel %vm2047, %v1530, 0.0
      %v2080 = vsel %vm2048, %v1531, 0.0
      %v2081 = vsel %vm2049, %v1532, 0.0
      %v2082 = vsel %vm2050, %v1533, 0.0
      %v2083 = vsel %vm2051, %v1534, 0.0
      %v2084 = vsel %vm2052, %v1535, 0.0
      %v2085 = vsel %vm2053, %v1536, 0.0
      %v2086 = vsel %vm2054, %v1537, 0.0
      %v2087 = vrot.slane %v1508, 1
      %v2088 = vrot.slane %v1509, 1
      %v2089 = vrot.slane %v1510, 1
      %v2090 = vrot.slane %v1511, 1
      %v2091 = vrot.slane %v1512, 1
      %v2092 = vrot.slane %v1513, 1
      %v2093 = vrot.slane %v1514, 1
      %v2094 = vrot.slane %v1515, 1
      %v2095 = vrot.slane %v1516, 1
      %v2096 = vrot.slane %v1517, 1
      %v2097 = vrot.slane %v1518, 1
      %v2098 = vrot.slane %v1519, 1
      %v2099 = vrot.slane %v1520, 1
      %v2100 = vrot.slane %v1521, 1
      %v2101 = vrot.slane %v1522, 1
      %v2102 = vrot.slane %v1523, 1
      %v2103 = vrot.slane %v1524, 1
      %v2104 = vrot.slane %v1525, 1
      %v2105 = vrot.slane %v1526, 1
      %v2106 = vrot.slane %v1527, 1
      %v2107 = vrot.slane %v1528, 1
      %v2108 = vrot.slane %v1529, 1
      %v2109 = vrot.slane %v1530, 1
      %v2110 = vrot.slane %v1531, 1
      %v2111 = vrot.slane %v1532, 1
      %v2112 = vrot.slane %v1533, 1
      %v2113 = vrot.slane %v1534, 1
      %v2114 = vrot.slane %v1535, 1
      %v2115 = vrot.slane %v1536, 1
      %v2116 = vrot.slane %v1537, 1
      %v2117 = vrot.slane %v1538, 1
      %v2118 = vrot.slane %v1539, 1
      %vm2119 = vcmp.lt.s32.totalorder %v1573, 7
      %v2120 = vsel %vm2119, %v2117, %v2118
      %v2121 = vsel %vm2119, %v2116, %v2117
      %v2122 = vsel %vm2119, %v2115, %v2116
      %v2123 = vsel %vm2119, %v2114, %v2115
      %v2124 = vsel %vm2119, %v2113, %v2114
      %v2125 = vsel %vm2119, %v2112, %v2113
      %v2126 = vsel %vm2119, %v2111, %v2112
      %v2127 = vsel %vm2119, %v2110, %v2111
      %v2128 = vsel %vm2119, %v2109, %v2110
      %v2129 = vsel %vm2119, %v2108, %v2109
      %v2130 = vsel %vm2119, %v2107, %v2108
      %v2131 = vsel %vm2119, %v2106, %v2107
      %v2132 = vsel %vm2119, %v2105, %v2106
      %v2133 = vsel %vm2119, %v2104, %v2105
      %v2134 = vsel %vm2119, %v2103, %v2104
      %v2135 = vsel %vm2119, %v2102, %v2103
      %v2136 = vsel %vm2119, %v2101, %v2102
      %v2137 = vsel %vm2119, %v2100, %v2101
      %v2138 = vsel %vm2119, %v2099, %v2100
      %v2139 = vsel %vm2119, %v2098, %v2099
      %v2140 = vsel %vm2119, %v2097, %v2098
      %v2141 = vsel %vm2119, %v2096, %v2097
      %v2142 = vsel %vm2119, %v2095, %v2096
      %v2143 = vsel %vm2119, %v2094, %v2095
      %v2144 = vsel %vm2119, %v2093, %v2094
      %v2145 = vsel %vm2119, %v2092, %v2093
      %v2146 = vsel %vm2119, %v2091, %v2092
      %v2147 = vsel %vm2119, %v2090, %v2091
      %v2148 = vsel %vm2119, %v2089, %v2090
      %v2149 = vsel %vm2119, %v2088, %v2089
      %v2150 = vsel %vm2119, %v2087, %v2088
      %v2151 = vsel %vm2119, %v2118, %v2087
      %vm2152 = vcmp.lt.s32.totalorder %v452, 15
      %vm2153 = vcmp.lt.s32.totalorder %v453, 15
      %vm2154 = vcmp.lt.s32.totalorder %v454, 15
      %vm2155 = vcmp.lt.s32.totalorder %v455, 15
      %vm2156 = vcmp.lt.s32.totalorder %v456, 15
      %vm2157 = vcmp.lt.s32.totalorder %v457, 15
      %vm2158 = vcmp.lt.s32.totalorder %v458, 15
      %vm2159 = vcmp.lt.s32.totalorder %v459, 15
      %vm2160 = vcmp.lt.s32.totalorder %v460, 15
      %vm2161 = vcmp.lt.s32.totalorder %v461, 15
      %vm2162 = vcmp.lt.s32.totalorder %v462, 15
      %vm2163 = vcmp.lt.s32.totalorder %v463, 15
      %vm2164 = vcmp.lt.s32.totalorder %v464, 15
      %vm2165 = vcmp.lt.s32.totalorder %v465, 15
      %vm2166 = vcmp.lt.s32.totalorder %v466, 15
      %vm2167 = vcmp.lt.s32.totalorder %v467, 15
      %vm2168 = vcmp.lt.s32.totalorder %v468, 15
      %vm2169 = vcmp.lt.s32.totalorder %v469, 15
      %vm2170 = vcmp.lt.s32.totalorder %v470, 15
      %vm2171 = vcmp.lt.s32.totalorder %v471, 15
      %vm2172 = vcmp.lt.s32.totalorder %v472, 15
      %vm2173 = vcmp.lt.s32.totalorder %v473, 15
      %vm2174 = vcmp.lt.s32.totalorder %v474, 15
      %vm2175 = vcmp.lt.s32.totalorder %v475, 15
      %vm2176 = vcmp.lt.s32.totalorder %v476, 15
      %vm2177 = vcmp.lt.s32.totalorder %v477, 15
      %vm2178 = vcmp.lt.s32.totalorder %v478, 15
      %vm2179 = vcmp.lt.s32.totalorder %v479, 15
      %vm2180 = vcmp.lt.s32.totalorder %v480, 15
      %vm2181 = vcmp.lt.s32.totalorder %v481, 15
      %vm2182 = vcmp.lt.s32.totalorder %v482, 15
      %vm2183 = vcmp.lt.s32.totalorder %v483, 15
      %vm2184 = vmand %vm1607, %vm2152
      %vm2185 = vmand %vm1608, %vm2153
      %vm2186 = vmand %vm1609, %vm2154
      %vm2187 = vmand %vm1610, %vm2155
      %vm2188 = vmand %vm1611, %vm2156
      %vm2189 = vmand %vm1612, %vm2157
      %vm2190 = vmand %vm1613, %vm2158
      %vm2191 = vmand %vm1614, %vm2159
      %vm2192 = vmand %vm1615, %vm2160
      %vm2193 = vmand %vm1616, %vm2161
      %vm2194 = vmand %vm1617, %vm2162
      %vm2195 = vmand %vm1618, %vm2163
      %vm2196 = vmand %vm1619, %vm2164
      %vm2197 = vmand %vm1620, %vm2165
      %vm2198 = vmand %vm1621, %vm2166
      %vm2199 = vmand %vm1622, %vm2167
      %vm2200 = vmand %vm1623, %vm2168
      %vm2201 = vmand %vm1624, %vm2169
      %vm2202 = vmand %vm1625, %vm2170
      %vm2203 = vmand %vm1626, %vm2171
      %vm2204 = vmand %vm1627, %vm2172
      %vm2205 = vmand %vm1628, %vm2173
      %vm2206 = vmand %vm1629, %vm2174
      %vm2207 = vmand %vm1630, %vm2175
      %vm2208 = vmand %vm1631, %vm2176
      %vm2209 = vmand %vm1632, %vm2177
      %vm2210 = vmand %vm1633, %vm2178
      %vm2211 = vmand %vm1634, %vm2179
      %vm2212 = vmand %vm1635, %vm2180
      %vm2213 = vmand %vm1636, %vm2181
      %vm2214 = vmand %vm1637, %vm2182
      %vm2215 = vmand %vm1638, %vm2183
      %v2216 = vsel %vm2184, 1, 0
      %v2217 = vsel %vm2185, 1, 0
      %v2218 = vsel %vm2186, 1, 0
      %v2219 = vsel %vm2187, 1, 0
      %v2220 = vsel %vm2188, 1, 0
      %v2221 = vsel %vm2189, 1, 0
      %v2222 = vsel %vm2190, 1, 0
      %v2223 = vsel %vm2191, 1, 0
      %v2224 = vsel %vm2192, 1, 0
      %v2225 = vsel %vm2193, 1, 0
      %v2226 = vsel %vm2194, 1, 0
      %v2227 = vsel %vm2195, 1, 0
      %v2228 = vsel %vm2196, 1, 0
      %v2229 = vsel %vm2197, 1, 0
      %v2230 = vsel %vm2198, 1, 0
      %v2231 = vsel %vm2199, 1, 0
      %v2232 = vsel %vm2200, 1, 0
      %v2233 = vsel %vm2201, 1, 0
      %v2234 = vsel %vm2202, 1, 0
      %v2235 = vsel %vm2203, 1, 0
      %v2236 = vsel %vm2204, 1, 0
      %v2237 = vsel %vm2205, 1, 0
      %v2238 = vsel %vm2206, 1, 0
      %v2239 = vsel %vm2207, 1, 0
      %v2240 = vsel %vm2208, 1, 0
      %v2241 = vsel %vm2209, 1, 0
      %v2242 = vsel %vm2210, 1, 0
      %v2243 = vsel %vm2211, 1, 0
      %v2244 = vsel %vm2212, 1, 0
      %v2245 = vsel %vm2213, 1, 0
      %v2246 = vsel %vm2214, 1, 0
      %v2247 = vsel %vm2215, 1, 0
      %2248 = vset.pattern.permute.xlu0 0
      %2249 = vperm.xlu0 %2248, %v2216
      %v2250 = vpop.permute.xlu0 %2249
      %2251 = vset.pattern.permute.xlu0 0
      %2252 = vperm.xlu0 %2251, %v2217
      %v2253 = vpop.permute.xlu0 %2252
      %2254 = vset.pattern.permute.xlu0 0
      %2255 = vperm.xlu0 %2254, %v2218
      %v2256 = vpop.permute.xlu0 %2255
      %2257 = vset.pattern.permute.xlu0 0
      %2258 = vperm.xlu0 %2257, %v2219
      %v2259 = vpop.permute.xlu0 %2258
      %2260 = vset.pattern.permute.xlu0 0
      %2261 = vperm.xlu0 %2260, %v2220
      %v2262 = vpop.permute.xlu0 %2261
      %2263 = vset.pattern.permute.xlu0 0
      %2264 = vperm.xlu0 %2263, %v2221
      %v2265 = vpop.permute.xlu0 %2264
      %2266 = vset.pattern.permute.xlu0 0
      %2267 = vperm.xlu0 %2266, %v2222
      %v2268 = vpop.permute.xlu0 %2267
      %2269 = vset.pattern.permute.xlu0 0
      %2270 = vperm.xlu0 %2269, %v2223
      %v2271 = vpop.permute.xlu0 %2270
      %2272 = vset.pattern.permute.xlu0 0
      %2273 = vperm.xlu0 %2272, %v2224
      %v2274 = vpop.permute.xlu0 %2273
      %2275 = vset.pattern.permute.xlu0 0
      %2276 = vperm.xlu0 %2275, %v2225
      %v2277 = vpop.permute.xlu0 %2276
      %2278 = vset.pattern.permute.xlu0 0
      %2279 = vperm.xlu0 %2278, %v2226
      %v2280 = vpop.permute.xlu0 %2279
      %2281 = vset.pattern.permute.xlu0 0
      %2282 = vperm.xlu0 %2281, %v2227
      %v2283 = vpop.permute.xlu0 %2282
      %2284 = vset.pattern.permute.xlu0 0
      %2285 = vperm.xlu0 %2284, %v2228
      %v2286 = vpop.permute.xlu0 %2285
      %2287 = vset.pattern.permute.xlu0 0
      %2288 = vperm.xlu0 %2287, %v2229
      %v2289 = vpop.permute.xlu0 %2288
      %2290 = vset.pattern.permute.xlu0 0
      %2291 = vperm.xlu0 %2290, %v2230
      %v2292 = vpop.permute.xlu0 %2291
      %2293 = vset.pattern.permute.xlu0 0
      %2294 = vperm.xlu0 %2293, %v2231
      %v2295 = vpop.permute.xlu0 %2294
      %2296 = vset.pattern.permute.xlu0 0
      %2297 = vperm.xlu0 %2296, %v2232
      %v2298 = vpop.permute.xlu0 %2297
      %2299 = vset.pattern.permute.xlu0 0
      %2300 = vperm.xlu0 %2299, %v2233
      %v2301 = vpop.permute.xlu0 %2300
      %2302 = vset.pattern.permute.xlu0 0
      %2303 = vperm.xlu0 %2302, %v2234
      %v2304 = vpop.permute.xlu0 %2303
      %2305 = vset.pattern.permute.xlu0 0
      %2306 = vperm.xlu0 %2305, %v2235
      %v2307 = vpop.permute.xlu0 %2306
      %2308 = vset.pattern.permute.xlu0 0
      %2309 = vperm.xlu0 %2308, %v2236
      %v2310 = vpop.permute.xlu0 %2309
      %2311 = vset.pattern.permute.xlu0 0
      %2312 = vperm.xlu0 %2311, %v2237
      %v2313 = vpop.permute.xlu0 %2312
      %2314 = vset.pattern.permute.xlu0 0
      %2315 = vperm.xlu0 %2314, %v2238
      %v2316 = vpop.permute.xlu0 %2315
      %2317 = vset.pattern.permute.xlu0 0
      %2318 = vperm.xlu0 %2317, %v2239
      %v2319 = vpop.permute.xlu0 %2318
      %2320 = vset.pattern.permute.xlu0 0
      %2321 = vperm.xlu0 %2320, %v2240
      %v2322 = vpop.permute.xlu0 %2321
      %2323 = vset.pattern.permute.xlu0 0
      %2324 = vperm.xlu0 %2323, %v2241
      %v2325 = vpop.permute.xlu0 %2324
      %2326 = vset.pattern.permute.xlu0 0
      %2327 = vperm.xlu0 %2326, %v2242
      %v2328 = vpop.permute.xlu0 %2327
      %2329 = vset.pattern.permute.xlu0 0
      %2330 = vperm.xlu0 %2329, %v2243
      %v2331 = vpop.permute.xlu0 %2330
      %2332 = vset.pattern.permute.xlu0 0
      %2333 = vperm.xlu0 %2332, %v2244
      %v2334 = vpop.permute.xlu0 %2333
      %2335 = vset.pattern.permute.xlu0 0
      %2336 = vperm.xlu0 %2335, %v2245
      %v2337 = vpop.permute.xlu0 %2336
      %2338 = vset.pattern.permute.xlu0 0
      %2339 = vperm.xlu0 %2338, %v2246
      %v2340 = vpop.permute.xlu0 %2339
      %2341 = vset.pattern.permute.xlu0 0
      %2342 = vperm.xlu0 %2341, %v2247
      %v2343 = vpop.permute.xlu0 %2342
      %vm2344 = vcmp.eq.s32.totalorder %v2250, 1
      %vm2345 = vcmp.eq.s32.totalorder %v2253, 1
      %vm2346 = vcmp.eq.s32.totalorder %v2256, 1
      %vm2347 = vcmp.eq.s32.totalorder %v2259, 1
      %vm2348 = vcmp.eq.s32.totalorder %v2262, 1
      %vm2349 = vcmp.eq.s32.totalorder %v2265, 1
      %vm2350 = vcmp.eq.s32.totalorder %v2268, 1
      %vm2351 = vcmp.eq.s32.totalorder %v2271, 1
      %vm2352 = vcmp.eq.s32.totalorder %v2274, 1
      %vm2353 = vcmp.eq.s32.totalorder %v2277, 1
      %vm2354 = vcmp.eq.s32.totalorder %v2280, 1
      %vm2355 = vcmp.eq.s32.totalorder %v2283, 1
      %vm2356 = vcmp.eq.s32.totalorder %v2286, 1
      %vm2357 = vcmp.eq.s32.totalorder %v2289, 1
      %vm2358 = vcmp.eq.s32.totalorder %v2292, 1
      %vm2359 = vcmp.eq.s32.totalorder %v2295, 1
      %vm2360 = vcmp.eq.s32.totalorder %v2298, 1
      %vm2361 = vcmp.eq.s32.totalorder %v2301, 1
      %vm2362 = vcmp.eq.s32.totalorder %v2304, 1
      %vm2363 = vcmp.eq.s32.totalorder %v2307, 1
      %vm2364 = vcmp.eq.s32.totalorder %v2310, 1
      %vm2365 = vcmp.eq.s32.totalorder %v2313, 1
      %vm2366 = vcmp.eq.s32.totalorder %v2316, 1
      %vm2367 = vcmp.eq.s32.totalorder %v2319, 1
      %vm2368 = vcmp.eq.s32.totalorder %v2322, 1
      %vm2369 = vcmp.eq.s32.totalorder %v2325, 1
      %vm2370 = vcmp.eq.s32.totalorder %v2328, 1
      %vm2371 = vcmp.eq.s32.totalorder %v2331, 1
      %vm2372 = vcmp.eq.s32.totalorder %v2334, 1
      %vm2373 = vcmp.eq.s32.totalorder %v2337, 1
      %vm2374 = vcmp.eq.s32.totalorder %v2340, 1
      %vm2375 = vcmp.eq.s32.totalorder %v2343, 1
      %v2376 = vsel %vm2344, %v2120, 0.0
      %v2377 = vsel %vm2345, %v2151, 0.0
      %v2378 = vsel %vm2346, %v2150, 0.0
      %v2379 = vsel %vm2347, %v2149, 0.0
      %v2380 = vsel %vm2348, %v2148, 0.0
      %v2381 = vsel %vm2349, %v2147, 0.0
      %v2382 = vsel %vm2350, %v2146, 0.0
      %v2383 = vsel %vm2351, %v2145, 0.0
      %v2384 = vsel %vm2352, %v2144, 0.0
      %v2385 = vsel %vm2353, %v2143, 0.0
      %v2386 = vsel %vm2354, %v2142, 0.0
      %v2387 = vsel %vm2355, %v2141, 0.0
      %v2388 = vsel %vm2356, %v2140, 0.0
      %v2389 = vsel %vm2357, %v2139, 0.0
      %v2390 = vsel %vm2358, %v2138, 0.0
      %v2391 = vsel %vm2359, %v2137, 0.0
      %v2392 = vsel %vm2360, %v2136, 0.0
      %v2393 = vsel %vm2361, %v2135, 0.0
      %v2394 = vsel %vm2362, %v2134, 0.0
      %v2395 = vsel %vm2363, %v2133, 0.0
      %v2396 = vsel %vm2364, %v2132, 0.0
      %v2397 = vsel %vm2365, %v2131, 0.0
      %v2398 = vsel %vm2366, %v2130, 0.0
      %v2399 = vsel %vm2367, %v2129, 0.0
      %v2400 = vsel %vm2368, %v2128, 0.0
      %v2401 = vsel %vm2369, %v2127, 0.0
      %v2402 = vsel %vm2370, %v2126, 0.0
      %v2403 = vsel %vm2371, %v2125, 0.0
      %v2404 = vsel %vm2372, %v2124, 0.0
      %v2405 = vsel %vm2373, %v2123, 0.0
      %v2406 = vsel %vm2374, %v2122, 0.0
      %v2407 = vsel %vm2375, %v2121, 0.0
      %v2408 = vsel %vm1639, 1, 0
      %v2409 = vsel %vm1640, 1, 0
      %v2410 = vsel %vm1641, 1, 0
      %v2411 = vsel %vm1642, 1, 0
      %v2412 = vsel %vm1643, 1, 0
      %v2413 = vsel %vm1644, 1, 0
      %v2414 = vsel %vm1645, 1, 0
      %v2415 = vsel %vm1646, 1, 0
      %v2416 = vsel %vm1647, 1, 0
      %v2417 = vsel %vm1648, 1, 0
      %v2418 = vsel %vm1649, 1, 0
      %v2419 = vsel %vm1650, 1, 0
      %v2420 = vsel %vm1651, 1, 0
      %v2421 = vsel %vm1652, 1, 0
      %v2422 = vsel %vm1653, 1, 0
      %v2423 = vsel %vm1654, 1, 0
      %v2424 = vsel %vm1655, 1, 0
      %v2425 = vsel %vm1656, 1, 0
      %v2426 = vsel %vm1657, 1, 0
      %v2427 = vsel %vm1658, 1, 0
      %v2428 = vsel %vm1659, 1, 0
      %v2429 = vsel %vm1660, 1, 0
      %v2430 = vsel %vm1661, 1, 0
      %v2431 = vsel %vm1662, 1, 0
      %v2432 = vsel %vm1663, 1, 0
      %v2433 = vsel %vm1664, 1, 0
      %v2434 = vsel %vm1665, 1, 0
      %v2435 = vsel %vm1666, 1, 0
      %v2436 = vsel %vm1667, 1, 0
      %v2437 = vsel %vm1668, 1, 0
      %v2438 = vsel %vm1669, 1, 0
      %v2439 = vsel %vm1670, 1, 0
      %2440 = vset.pattern.permute.xlu0 0
      %2441 = vperm.xlu0 %2440, %v2408
      %v2442 = vpop.permute.xlu0 %2441
      %2443 = vset.pattern.permute.xlu0 0
      %2444 = vperm.xlu0 %2443, %v2409
      %v2445 = vpop.permute.xlu0 %2444
      %2446 = vset.pattern.permute.xlu0 0
      %2447 = vperm.xlu0 %2446, %v2410
      %v2448 = vpop.permute.xlu0 %2447
      %2449 = vset.pattern.permute.xlu0 0
      %2450 = vperm.xlu0 %2449, %v2411
      %v2451 = vpop.permute.xlu0 %2450
      %2452 = vset.pattern.permute.xlu0 0
      %2453 = vperm.xlu0 %2452, %v2412
      %v2454 = vpop.permute.xlu0 %2453
      %2455 = vset.pattern.permute.xlu0 0
      %2456 = vperm.xlu0 %2455, %v2413
      %v2457 = vpop.permute.xlu0 %2456
      %2458 = vset.pattern.permute.xlu0 0
      %2459 = vperm.xlu0 %2458, %v2414
      %v2460 = vpop.permute.xlu0 %2459
      %2461 = vset.pattern.permute.xlu0 0
      %2462 = vperm.xlu0 %2461, %v2415
      %v2463 = vpop.permute.xlu0 %2462
      %2464 = vset.pattern.permute.xlu0 0
      %2465 = vperm.xlu0 %2464, %v2416
      %v2466 = vpop.permute.xlu0 %2465
      %2467 = vset.pattern.permute.xlu0 0
      %2468 = vperm.xlu0 %2467, %v2417
      %v2469 = vpop.permute.xlu0 %2468
      %2470 = vset.pattern.permute.xlu0 0
      %2471 = vperm.xlu0 %2470, %v2418
      %v2472 = vpop.permute.xlu0 %2471
      %2473 = vset.pattern.permute.xlu0 0
      %2474 = vperm.xlu0 %2473, %v2419
      %v2475 = vpop.permute.xlu0 %2474
      %2476 = vset.pattern.permute.xlu0 0
      %2477 = vperm.xlu0 %2476, %v2420
      %v2478 = vpop.permute.xlu0 %2477
      %2479 = vset.pattern.permute.xlu0 0
      %2480 = vperm.xlu0 %2479, %v2421
      %v2481 = vpop.permute.xlu0 %2480
      %2482 = vset.pattern.permute.xlu0 0
      %2483 = vperm.xlu0 %2482, %v2422
      %v2484 = vpop.permute.xlu0 %2483
      %2485 = vset.pattern.permute.xlu0 0
      %2486 = vperm.xlu0 %2485, %v2423
      %v2487 = vpop.permute.xlu0 %2486
      %2488 = vset.pattern.permute.xlu0 0
      %2489 = vperm.xlu0 %2488, %v2424
      %v2490 = vpop.permute.xlu0 %2489
      %2491 = vset.pattern.permute.xlu0 0
      %2492 = vperm.xlu0 %2491, %v2425
      %v2493 = vpop.permute.xlu0 %2492
      %2494 = vset.pattern.permute.xlu0 0
      %2495 = vperm.xlu0 %2494, %v2426
      %v2496 = vpop.permute.xlu0 %2495
      %2497 = vset.pattern.permute.xlu0 0
      %2498 = vperm.xlu0 %2497, %v2427
      %v2499 = vpop.permute.xlu0 %2498
      %2500 = vset.pattern.permute.xlu0 0
      %2501 = vperm.xlu0 %2500, %v2428
      %v2502 = vpop.permute.xlu0 %2501
      %2503 = vset.pattern.permute.xlu0 0
      %2504 = vperm.xlu0 %2503, %v2429
      %v2505 = vpop.permute.xlu0 %2504
      %2506 = vset.pattern.permute.xlu0 0
      %2507 = vperm.xlu0 %2506, %v2430
      %v2508 = vpop.permute.xlu0 %2507
      %2509 = vset.pattern.permute.xlu0 0
      %2510 = vperm.xlu0 %2509, %v2431
      %v2511 = vpop.permute.xlu0 %2510
      %2512 = vset.pattern.permute.xlu0 0
      %2513 = vperm.xlu0 %2512, %v2432
      %v2514 = vpop.permute.xlu0 %2513
      %2515 = vset.pattern.permute.xlu0 0
      %2516 = vperm.xlu0 %2515, %v2433
      %v2517 = vpop.permute.xlu0 %2516
      %2518 = vset.pattern.permute.xlu0 0
      %2519 = vperm.xlu0 %2518, %v2434
      %v2520 = vpop.permute.xlu0 %2519
      %2521 = vset.pattern.permute.xlu0 0
      %2522 = vperm.xlu0 %2521, %v2435
      %v2523 = vpop.permute.xlu0 %2522
      %2524 = vset.pattern.permute.xlu0 0
      %2525 = vperm.xlu0 %2524, %v2436
      %v2526 = vpop.permute.xlu0 %2525
      %2527 = vset.pattern.permute.xlu0 0
      %2528 = vperm.xlu0 %2527, %v2437
      %v2529 = vpop.permute.xlu0 %2528
      %2530 = vset.pattern.permute.xlu0 0
      %2531 = vperm.xlu0 %2530, %v2438
      %v2532 = vpop.permute.xlu0 %2531
      %2533 = vset.pattern.permute.xlu0 0
      %2534 = vperm.xlu0 %2533, %v2439
      %v2535 = vpop.permute.xlu0 %2534
      %vm2536 = vcmp.eq.s32.totalorder %v2442, 1
      %vm2537 = vcmp.eq.s32.totalorder %v2445, 1
      %vm2538 = vcmp.eq.s32.totalorder %v2448, 1
      %vm2539 = vcmp.eq.s32.totalorder %v2451, 1
      %vm2540 = vcmp.eq.s32.totalorder %v2454, 1
      %vm2541 = vcmp.eq.s32.totalorder %v2457, 1
      %vm2542 = vcmp.eq.s32.totalorder %v2460, 1
      %vm2543 = vcmp.eq.s32.totalorder %v2463, 1
      %vm2544 = vcmp.eq.s32.totalorder %v2466, 1
      %vm2545 = vcmp.eq.s32.totalorder %v2469, 1
      %vm2546 = vcmp.eq.s32.totalorder %v2472, 1
      %vm2547 = vcmp.eq.s32.totalorder %v2475, 1
      %vm2548 = vcmp.eq.s32.totalorder %v2478, 1
      %vm2549 = vcmp.eq.s32.totalorder %v2481, 1
      %vm2550 = vcmp.eq.s32.totalorder %v2484, 1
      %vm2551 = vcmp.eq.s32.totalorder %v2487, 1
      %vm2552 = vcmp.eq.s32.totalorder %v2490, 1
      %vm2553 = vcmp.eq.s32.totalorder %v2493, 1
      %vm2554 = vcmp.eq.s32.totalorder %v2496, 1
      %vm2555 = vcmp.eq.s32.totalorder %v2499, 1
      %vm2556 = vcmp.eq.s32.totalorder %v2502, 1
      %vm2557 = vcmp.eq.s32.totalorder %v2505, 1
      %vm2558 = vcmp.eq.s32.totalorder %v2508, 1
      %vm2559 = vcmp.eq.s32.totalorder %v2511, 1
      %vm2560 = vcmp.eq.s32.totalorder %v2514, 1
      %vm2561 = vcmp.eq.s32.totalorder %v2517, 1
      %vm2562 = vcmp.eq.s32.totalorder %v2520, 1
      %vm2563 = vcmp.eq.s32.totalorder %v2523, 1
      %vm2564 = vcmp.eq.s32.totalorder %v2526, 1
      %vm2565 = vcmp.eq.s32.totalorder %v2529, 1
      %vm2566 = vcmp.eq.s32.totalorder %v2532, 1
      %vm2567 = vcmp.eq.s32.totalorder %v2535, 1
      %v2568 = vsel %vm2536, %v1606, 0.0
      %v2569 = vsel %vm2537, %v1605, 0.0
      %v2570 = vsel %vm2538, %v1604, 0.0
      %v2571 = vsel %vm2539, %v1603, 0.0
      %v2572 = vsel %vm2540, %v1602, 0.0
      %v2573 = vsel %vm2541, %v1601, 0.0
      %v2574 = vsel %vm2542, %v1600, 0.0
      %v2575 = vsel %vm2543, %v1599, 0.0
      %v2576 = vsel %vm2544, %v1598, 0.0
      %v2577 = vsel %vm2545, %v1597, 0.0
      %v2578 = vsel %vm2546, %v1596, 0.0
      %v2579 = vsel %vm2547, %v1595, 0.0
      %v2580 = vsel %vm2548, %v1594, 0.0
      %v2581 = vsel %vm2549, %v1593, 0.0
      %v2582 = vsel %vm2550, %v1592, 0.0
      %v2583 = vsel %vm2551, %v1591, 0.0
      %v2584 = vsel %vm2552, %v1590, 0.0
      %v2585 = vsel %vm2553, %v1589, 0.0
      %v2586 = vsel %vm2554, %v1588, 0.0
      %v2587 = vsel %vm2555, %v1587, 0.0
      %v2588 = vsel %vm2556, %v1586, 0.0
      %v2589 = vsel %vm2557, %v1585, 0.0
      %v2590 = vsel %vm2558, %v1584, 0.0
      %v2591 = vsel %vm2559, %v1583, 0.0
      %v2592 = vsel %vm2560, %v1582, 0.0
      %v2593 = vsel %vm2561, %v1581, 0.0
      %v2594 = vsel %vm2562, %v1580, 0.0
      %v2595 = vsel %vm2563, %v1579, 0.0
      %v2596 = vsel %vm2564, %v1578, 0.0
      %v2597 = vsel %vm2565, %v1577, 0.0
      %v2598 = vsel %vm2566, %v1576, 0.0
      %v2599 = vsel %vm2567, %v1575, 0.0
      %v2600 = vsel %vm2152, 1, 0
      %v2601 = vsel %vm2153, 1, 0
      %v2602 = vsel %vm2154, 1, 0
      %v2603 = vsel %vm2155, 1, 0
      %v2604 = vsel %vm2156, 1, 0
      %v2605 = vsel %vm2157, 1, 0
      %v2606 = vsel %vm2158, 1, 0
      %v2607 = vsel %vm2159, 1, 0
      %v2608 = vsel %vm2160, 1, 0
      %v2609 = vsel %vm2161, 1, 0
      %v2610 = vsel %vm2162, 1, 0
      %v2611 = vsel %vm2163, 1, 0
      %v2612 = vsel %vm2164, 1, 0
      %v2613 = vsel %vm2165, 1, 0
      %v2614 = vsel %vm2166, 1, 0
      %v2615 = vsel %vm2167, 1, 0
      %v2616 = vsel %vm2168, 1, 0
      %v2617 = vsel %vm2169, 1, 0
      %v2618 = vsel %vm2170, 1, 0
      %v2619 = vsel %vm2171, 1, 0
      %v2620 = vsel %vm2172, 1, 0
      %v2621 = vsel %vm2173, 1, 0
      %v2622 = vsel %vm2174, 1, 0
      %v2623 = vsel %vm2175, 1, 0
      %v2624 = vsel %vm2176, 1, 0
      %v2625 = vsel %vm2177, 1, 0
      %v2626 = vsel %vm2178, 1, 0
      %v2627 = vsel %vm2179, 1, 0
      %v2628 = vsel %vm2180, 1, 0
      %v2629 = vsel %vm2181, 1, 0
      %v2630 = vsel %vm2182, 1, 0
      %v2631 = vsel %vm2183, 1, 0
      %2632 = vset.pattern.permute.xlu0 0
      %2633 = vperm.xlu0 %2632, %v2600
      %v2634 = vpop.permute.xlu0 %2633
      %2635 = vset.pattern.permute.xlu0 0
      %2636 = vperm.xlu0 %2635, %v2601
      %v2637 = vpop.permute.xlu0 %2636
      %2638 = vset.pattern.permute.xlu0 0
      %2639 = vperm.xlu0 %2638, %v2602
      %v2640 = vpop.permute.xlu0 %2639
      %2641 = vset.pattern.permute.xlu0 0
      %2642 = vperm.xlu0 %2641, %v2603
      %v2643 = vpop.permute.xlu0 %2642
      %2644 = vset.pattern.permute.xlu0 0
      %2645 = vperm.xlu0 %2644, %v2604
      %v2646 = vpop.permute.xlu0 %2645
      %2647 = vset.pattern.permute.xlu0 0
      %2648 = vperm.xlu0 %2647, %v2605
      %v2649 = vpop.permute.xlu0 %2648
      %2650 = vset.pattern.permute.xlu0 0
      %2651 = vperm.xlu0 %2650, %v2606
      %v2652 = vpop.permute.xlu0 %2651
      %2653 = vset.pattern.permute.xlu0 0
      %2654 = vperm.xlu0 %2653, %v2607
      %v2655 = vpop.permute.xlu0 %2654
      %2656 = vset.pattern.permute.xlu0 0
      %2657 = vperm.xlu0 %2656, %v2608
      %v2658 = vpop.permute.xlu0 %2657
      %2659 = vset.pattern.permute.xlu0 0
      %2660 = vperm.xlu0 %2659, %v2609
      %v2661 = vpop.permute.xlu0 %2660
      %2662 = vset.pattern.permute.xlu0 0
      %2663 = vperm.xlu0 %2662, %v2610
      %v2664 = vpop.permute.xlu0 %2663
      %2665 = vset.pattern.permute.xlu0 0
      %2666 = vperm.xlu0 %2665, %v2611
      %v2667 = vpop.permute.xlu0 %2666
      %2668 = vset.pattern.permute.xlu0 0
      %2669 = vperm.xlu0 %2668, %v2612
      %v2670 = vpop.permute.xlu0 %2669
      %2671 = vset.pattern.permute.xlu0 0
      %2672 = vperm.xlu0 %2671, %v2613
      %v2673 = vpop.permute.xlu0 %2672
      %2674 = vset.pattern.permute.xlu0 0
      %2675 = vperm.xlu0 %2674, %v2614
      %v2676 = vpop.permute.xlu0 %2675
      %2677 = vset.pattern.permute.xlu0 0
      %2678 = vperm.xlu0 %2677, %v2615
      %v2679 = vpop.permute.xlu0 %2678
      %2680 = vset.pattern.permute.xlu0 0
      %2681 = vperm.xlu0 %2680, %v2616
      %v2682 = vpop.permute.xlu0 %2681
      %2683 = vset.pattern.permute.xlu0 0
      %2684 = vperm.xlu0 %2683, %v2617
      %v2685 = vpop.permute.xlu0 %2684
      %2686 = vset.pattern.permute.xlu0 0
      %2687 = vperm.xlu0 %2686, %v2618
      %v2688 = vpop.permute.xlu0 %2687
      %2689 = vset.pattern.permute.xlu0 0
      %2690 = vperm.xlu0 %2689, %v2619
      %v2691 = vpop.permute.xlu0 %2690
      %2692 = vset.pattern.permute.xlu0 0
      %2693 = vperm.xlu0 %2692, %v2620
      %v2694 = vpop.permute.xlu0 %2693
      %2695 = vset.pattern.permute.xlu0 0
      %2696 = vperm.xlu0 %2695, %v2621
      %v2697 = vpop.permute.xlu0 %2696
      %2698 = vset.pattern.permute.xlu0 0
      %2699 = vperm.xlu0 %2698, %v2622
      %v2700 = vpop.permute.xlu0 %2699
      %2701 = vset.pattern.permute.xlu0 0
      %2702 = vperm.xlu0 %2701, %v2623
      %v2703 = vpop.permute.xlu0 %2702
      %2704 = vset.pattern.permute.xlu0 0
      %2705 = vperm.xlu0 %2704, %v2624
      %v2706 = vpop.permute.xlu0 %2705
      %2707 = vset.pattern.permute.xlu0 0
      %2708 = vperm.xlu0 %2707, %v2625
      %v2709 = vpop.permute.xlu0 %2708
      %2710 = vset.pattern.permute.xlu0 0
      %2711 = vperm.xlu0 %2710, %v2626
      %v2712 = vpop.permute.xlu0 %2711
      %2713 = vset.pattern.permute.xlu0 0
      %2714 = vperm.xlu0 %2713, %v2627
      %v2715 = vpop.permute.xlu0 %2714
      %2716 = vset.pattern.permute.xlu0 0
      %2717 = vperm.xlu0 %2716, %v2628
      %v2718 = vpop.permute.xlu0 %2717
      %2719 = vset.pattern.permute.xlu0 0
      %2720 = vperm.xlu0 %2719, %v2629
      %v2721 = vpop.permute.xlu0 %2720
      %2722 = vset.pattern.permute.xlu0 0
      %2723 = vperm.xlu0 %2722, %v2630
      %v2724 = vpop.permute.xlu0 %2723
      %2725 = vset.pattern.permute.xlu0 0
      %2726 = vperm.xlu0 %2725, %v2631
      %v2727 = vpop.permute.xlu0 %2726
      %vm2728 = vcmp.eq.s32.totalorder %v2634, 1
      %vm2729 = vcmp.eq.s32.totalorder %v2637, 1
      %vm2730 = vcmp.eq.s32.totalorder %v2640, 1
      %vm2731 = vcmp.eq.s32.totalorder %v2643, 1
      %vm2732 = vcmp.eq.s32.totalorder %v2646, 1
      %vm2733 = vcmp.eq.s32.totalorder %v2649, 1
      %vm2734 = vcmp.eq.s32.totalorder %v2652, 1
      %vm2735 = vcmp.eq.s32.totalorder %v2655, 1
      %vm2736 = vcmp.eq.s32.totalorder %v2658, 1
      %vm2737 = vcmp.eq.s32.totalorder %v2661, 1
      %vm2738 = vcmp.eq.s32.totalorder %v2664, 1
      %vm2739 = vcmp.eq.s32.totalorder %v2667, 1
      %vm2740 = vcmp.eq.s32.totalorder %v2670, 1
      %vm2741 = vcmp.eq.s32.totalorder %v2673, 1
      %vm2742 = vcmp.eq.s32.totalorder %v2676, 1
      %vm2743 = vcmp.eq.s32.totalorder %v2679, 1
      %vm2744 = vcmp.eq.s32.totalorder %v2682, 1
      %vm2745 = vcmp.eq.s32.totalorder %v2685, 1
      %vm2746 = vcmp.eq.s32.totalorder %v2688, 1
      %vm2747 = vcmp.eq.s32.totalorder %v2691, 1
      %vm2748 = vcmp.eq.s32.totalorder %v2694, 1
      %vm2749 = vcmp.eq.s32.totalorder %v2697, 1
      %vm2750 = vcmp.eq.s32.totalorder %v2700, 1
      %vm2751 = vcmp.eq.s32.totalorder %v2703, 1
      %vm2752 = vcmp.eq.s32.totalorder %v2706, 1
      %vm2753 = vcmp.eq.s32.totalorder %v2709, 1
      %vm2754 = vcmp.eq.s32.totalorder %v2712, 1
      %vm2755 = vcmp.eq.s32.totalorder %v2715, 1
      %vm2756 = vcmp.eq.s32.totalorder %v2718, 1
      %vm2757 = vcmp.eq.s32.totalorder %v2721, 1
      %vm2758 = vcmp.eq.s32.totalorder %v2724, 1
      %vm2759 = vcmp.eq.s32.totalorder %v2727, 1
      %v2760 = vsel %vm2728, %v2150, 0.0
      %v2761 = vsel %vm2729, %v2149, 0.0
      %v2762 = vsel %vm2730, %v2148, 0.0
      %v2763 = vsel %vm2731, %v2147, 0.0
      %v2764 = vsel %vm2732, %v2146, 0.0
      %v2765 = vsel %vm2733, %v2145, 0.0
      %v2766 = vsel %vm2734, %v2144, 0.0
      %v2767 = vsel %vm2735, %v2143, 0.0
      %v2768 = vsel %vm2736, %v2142, 0.0
      %v2769 = vsel %vm2737, %v2141, 0.0
      %v2770 = vsel %vm2738, %v2140, 0.0
      %v2771 = vsel %vm2739, %v2139, 0.0
      %v2772 = vsel %vm2740, %v2138, 0.0
      %v2773 = vsel %vm2741, %v2137, 0.0
      %v2774 = vsel %vm2742, %v2136, 0.0
      %v2775 = vsel %vm2743, %v2135, 0.0
      %v2776 = vsel %vm2744, %v2134, 0.0
      %v2777 = vsel %vm2745, %v2133, 0.0
      %v2778 = vsel %vm2746, %v2132, 0.0
      %v2779 = vsel %vm2747, %v2131, 0.0
      %v2780 = vsel %vm2748, %v2130, 0.0
      %v2781 = vsel %vm2749, %v2129, 0.0
      %v2782 = vsel %vm2750, %v2128, 0.0
      %v2783 = vsel %vm2751, %v2127, 0.0
      %v2784 = vsel %vm2752, %v2126, 0.0
      %v2785 = vsel %vm2753, %v2125, 0.0
      %v2786 = vsel %vm2754, %v2124, 0.0
      %v2787 = vsel %vm2755, %v2123, 0.0
      %v2788 = vsel %vm2756, %v2122, 0.0
      %v2789 = vsel %vm2757, %v2121, 0.0
      %v2790 = vsel %vm2758, %v2120, 0.0
      %v2791 = vsel %vm2759, %v2151, 0.0
      %vm2792 = vcmp.lt.s32.totalorder %v420, 15
      %vm2793 = vcmp.lt.s32.totalorder %v421, 15
      %vm2794 = vcmp.lt.s32.totalorder %v422, 15
      %vm2795 = vcmp.lt.s32.totalorder %v423, 15
      %vm2796 = vcmp.lt.s32.totalorder %v424, 15
      %vm2797 = vcmp.lt.s32.totalorder %v425, 15
      %vm2798 = vcmp.lt.s32.totalorder %v426, 15
      %vm2799 = vcmp.lt.s32.totalorder %v427, 15
      %vm2800 = vcmp.lt.s32.totalorder %v428, 15
      %vm2801 = vcmp.lt.s32.totalorder %v429, 15
      %vm2802 = vcmp.lt.s32.totalorder %v430, 15
      %vm2803 = vcmp.lt.s32.totalorder %v431, 15
      %vm2804 = vcmp.lt.s32.totalorder %v432, 15
      %vm2805 = vcmp.lt.s32.totalorder %v433, 15
      %vm2806 = vcmp.lt.s32.totalorder %v434, 15
      %vm2807 = vcmp.lt.s32.totalorder %v435, 15
      %vm2808 = vcmp.lt.s32.totalorder %v436, 15
      %vm2809 = vcmp.lt.s32.totalorder %v437, 15
      %vm2810 = vcmp.lt.s32.totalorder %v438, 15
      %vm2811 = vcmp.lt.s32.totalorder %v439, 15
      %vm2812 = vcmp.lt.s32.totalorder %v440, 15
      %vm2813 = vcmp.lt.s32.totalorder %v441, 15
      %vm2814 = vcmp.lt.s32.totalorder %v442, 15
      %vm2815 = vcmp.lt.s32.totalorder %v443, 15
      %vm2816 = vcmp.lt.s32.totalorder %v444, 15
      %vm2817 = vcmp.lt.s32.totalorder %v445, 15
      %vm2818 = vcmp.lt.s32.totalorder %v446, 15
      %vm2819 = vcmp.lt.s32.totalorder %v447, 15
      %vm2820 = vcmp.lt.s32.totalorder %v448, 15
      %vm2821 = vcmp.lt.s32.totalorder %v449, 15
      %vm2822 = vcmp.lt.s32.totalorder %v450, 15
      %vm2823 = vcmp.lt.s32.totalorder %v451, 15
      %vm2824 = vmand %vm2792, %vm1639
      %vm2825 = vmand %vm2793, %vm1640
      %vm2826 = vmand %vm2794, %vm1641
      %vm2827 = vmand %vm2795, %vm1642
      %vm2828 = vmand %vm2796, %vm1643
      %vm2829 = vmand %vm2797, %vm1644
      %vm2830 = vmand %vm2798, %vm1645
      %vm2831 = vmand %vm2799, %vm1646
      %vm2832 = vmand %vm2800, %vm1647
      %vm2833 = vmand %vm2801, %vm1648
      %vm2834 = vmand %vm2802, %vm1649
      %vm2835 = vmand %vm2803, %vm1650
      %vm2836 = vmand %vm2804, %vm1651
      %vm2837 = vmand %vm2805, %vm1652
      %vm2838 = vmand %vm2806, %vm1653
      %vm2839 = vmand %vm2807, %vm1654
      %vm2840 = vmand %vm2808, %vm1655
      %vm2841 = vmand %vm2809, %vm1656
      %vm2842 = vmand %vm2810, %vm1657
      %vm2843 = vmand %vm2811, %vm1658
      %vm2844 = vmand %vm2812, %vm1659
      %vm2845 = vmand %vm2813, %vm1660
      %vm2846 = vmand %vm2814, %vm1661
      %vm2847 = vmand %vm2815, %vm1662
      %vm2848 = vmand %vm2816, %vm1663
      %vm2849 = vmand %vm2817, %vm1664
      %vm2850 = vmand %vm2818, %vm1665
      %vm2851 = vmand %vm2819, %vm1666
      %vm2852 = vmand %vm2820, %vm1667
      %vm2853 = vmand %vm2821, %vm1668
      %vm2854 = vmand %vm2822, %vm1669
      %vm2855 = vmand %vm2823, %vm1670
      %v2856 = vsel %vm2824, 1, 0
      %v2857 = vsel %vm2825, 1, 0
      %v2858 = vsel %vm2826, 1, 0
      %v2859 = vsel %vm2827, 1, 0
      %v2860 = vsel %vm2828, 1, 0
      %v2861 = vsel %vm2829, 1, 0
      %v2862 = vsel %vm2830, 1, 0
      %v2863 = vsel %vm2831, 1, 0
      %v2864 = vsel %vm2832, 1, 0
      %v2865 = vsel %vm2833, 1, 0
      %v2866 = vsel %vm2834, 1, 0
      %v2867 = vsel %vm2835, 1, 0
      %v2868 = vsel %vm2836, 1, 0
      %v2869 = vsel %vm2837, 1, 0
      %v2870 = vsel %vm2838, 1, 0
      %v2871 = vsel %vm2839, 1, 0
      %v2872 = vsel %vm2840, 1, 0
      %v2873 = vsel %vm2841, 1, 0
      %v2874 = vsel %vm2842, 1, 0
      %v2875 = vsel %vm2843, 1, 0
      %v2876 = vsel %vm2844, 1, 0
      %v2877 = vsel %vm2845, 1, 0
      %v2878 = vsel %vm2846, 1, 0
      %v2879 = vsel %vm2847, 1, 0
      %v2880 = vsel %vm2848, 1, 0
      %v2881 = vsel %vm2849, 1, 0
      %v2882 = vsel %vm2850, 1, 0
      %v2883 = vsel %vm2851, 1, 0
      %v2884 = vsel %vm2852, 1, 0
      %v2885 = vsel %vm2853, 1, 0
      %v2886 = vsel %vm2854, 1, 0
      %v2887 = vsel %vm2855, 1, 0
      %2888 = vset.pattern.permute.xlu0 0
      %2889 = vperm.xlu0 %2888, %v2856
      %v2890 = vpop.permute.xlu0 %2889
      %2891 = vset.pattern.permute.xlu0 0
      %2892 = vperm.xlu0 %2891, %v2857
      %v2893 = vpop.permute.xlu0 %2892
      %2894 = vset.pattern.permute.xlu0 0
      %2895 = vperm.xlu0 %2894, %v2858
      %v2896 = vpop.permute.xlu0 %2895
      %2897 = vset.pattern.permute.xlu0 0
      %2898 = vperm.xlu0 %2897, %v2859
      %v2899 = vpop.permute.xlu0 %2898
      %2900 = vset.pattern.permute.xlu0 0
      %2901 = vperm.xlu0 %2900, %v2860
      %v2902 = vpop.permute.xlu0 %2901
      %2903 = vset.pattern.permute.xlu0 0
      %2904 = vperm.xlu0 %2903, %v2861
      %v2905 = vpop.permute.xlu0 %2904
      %2906 = vset.pattern.permute.xlu0 0
      %2907 = vperm.xlu0 %2906, %v2862
      %v2908 = vpop.permute.xlu0 %2907
      %2909 = vset.pattern.permute.xlu0 0
      %2910 = vperm.xlu0 %2909, %v2863
      %v2911 = vpop.permute.xlu0 %2910
      %2912 = vset.pattern.permute.xlu0 0
      %2913 = vperm.xlu0 %2912, %v2864
      %v2914 = vpop.permute.xlu0 %2913
      %2915 = vset.pattern.permute.xlu0 0
      %2916 = vperm.xlu0 %2915, %v2865
      %v2917 = vpop.permute.xlu0 %2916
      %2918 = vset.pattern.permute.xlu0 0
      %2919 = vperm.xlu0 %2918, %v2866
      %v2920 = vpop.permute.xlu0 %2919
      %2921 = vset.pattern.permute.xlu0 0
      %2922 = vperm.xlu0 %2921, %v2867
      %v2923 = vpop.permute.xlu0 %2922
      %2924 = vset.pattern.permute.xlu0 0
      %2925 = vperm.xlu0 %2924, %v2868
      %v2926 = vpop.permute.xlu0 %2925
      %2927 = vset.pattern.permute.xlu0 0
      %2928 = vperm.xlu0 %2927, %v2869
      %v2929 = vpop.permute.xlu0 %2928
      %2930 = vset.pattern.permute.xlu0 0
      %2931 = vperm.xlu0 %2930, %v2870
      %v2932 = vpop.permute.xlu0 %2931
      %2933 = vset.pattern.permute.xlu0 0
      %2934 = vperm.xlu0 %2933, %v2871
      %v2935 = vpop.permute.xlu0 %2934
      %2936 = vset.pattern.permute.xlu0 0
      %2937 = vperm.xlu0 %2936, %v2872
      %v2938 = vpop.permute.xlu0 %2937
      %2939 = vset.pattern.permute.xlu0 0
      %2940 = vperm.xlu0 %2939, %v2873
      %v2941 = vpop.permute.xlu0 %2940
      %2942 = vset.pattern.permute.xlu0 0
      %2943 = vperm.xlu0 %2942, %v2874
      %v2944 = vpop.permute.xlu0 %2943
      %2945 = vset.pattern.permute.xlu0 0
      %2946 = vperm.xlu0 %2945, %v2875
      %v2947 = vpop.permute.xlu0 %2946
      %2948 = vset.pattern.permute.xlu0 0
      %2949 = vperm.xlu0 %2948, %v2876
      %v2950 = vpop.permute.xlu0 %2949
      %2951 = vset.pattern.permute.xlu0 0
      %2952 = vperm.xlu0 %2951, %v2877
      %v2953 = vpop.permute.xlu0 %2952
      %2954 = vset.pattern.permute.xlu0 0
      %2955 = vperm.xlu0 %2954, %v2878
      %v2956 = vpop.permute.xlu0 %2955
      %2957 = vset.pattern.permute.xlu0 0
      %2958 = vperm.xlu0 %2957, %v2879
      %v2959 = vpop.permute.xlu0 %2958
      %2960 = vset.pattern.permute.xlu0 0
      %2961 = vperm.xlu0 %2960, %v2880
      %v2962 = vpop.permute.xlu0 %2961
      %2963 = vset.pattern.permute.xlu0 0
      %2964 = vperm.xlu0 %2963, %v2881
      %v2965 = vpop.permute.xlu0 %2964
      %2966 = vset.pattern.permute.xlu0 0
      %2967 = vperm.xlu0 %2966, %v2882
      %v2968 = vpop.permute.xlu0 %2967
      %2969 = vset.pattern.permute.xlu0 0
      %2970 = vperm.xlu0 %2969, %v2883
      %v2971 = vpop.permute.xlu0 %2970
      %2972 = vset.pattern.permute.xlu0 0
      %2973 = vperm.xlu0 %2972, %v2884
      %v2974 = vpop.permute.xlu0 %2973
      %2975 = vset.pattern.permute.xlu0 0
      %2976 = vperm.xlu0 %2975, %v2885
      %v2977 = vpop.permute.xlu0 %2976
      %2978 = vset.pattern.permute.xlu0 0
      %2979 = vperm.xlu0 %2978, %v2886
      %v2980 = vpop.permute.xlu0 %2979
      %2981 = vset.pattern.permute.xlu0 0
      %2982 = vperm.xlu0 %2981, %v2887
      %v2983 = vpop.permute.xlu0 %2982
      %vm2984 = vcmp.eq.s32.totalorder %v2890, 1
      %vm2985 = vcmp.eq.s32.totalorder %v2893, 1
      %vm2986 = vcmp.eq.s32.totalorder %v2896, 1
      %vm2987 = vcmp.eq.s32.totalorder %v2899, 1
      %vm2988 = vcmp.eq.s32.totalorder %v2902, 1
      %vm2989 = vcmp.eq.s32.totalorder %v2905, 1
      %vm2990 = vcmp.eq.s32.totalorder %v2908, 1
      %vm2991 = vcmp.eq.s32.totalorder %v2911, 1
      %vm2992 = vcmp.eq.s32.totalorder %v2914, 1
      %vm2993 = vcmp.eq.s32.totalorder %v2917, 1
      %vm2994 = vcmp.eq.s32.totalorder %v2920, 1
      %vm2995 = vcmp.eq.s32.totalorder %v2923, 1
      %vm2996 = vcmp.eq.s32.totalorder %v2926, 1
      %vm2997 = vcmp.eq.s32.totalorder %v2929, 1
      %vm2998 = vcmp.eq.s32.totalorder %v2932, 1
      %vm2999 = vcmp.eq.s32.totalorder %v2935, 1
      %vm3000 = vcmp.eq.s32.totalorder %v2938, 1
      %vm3001 = vcmp.eq.s32.totalorder %v2941, 1
      %vm3002 = vcmp.eq.s32.totalorder %v2944, 1
      %vm3003 = vcmp.eq.s32.totalorder %v2947, 1
      %vm3004 = vcmp.eq.s32.totalorder %v2950, 1
      %vm3005 = vcmp.eq.s32.totalorder %v2953, 1
      %vm3006 = vcmp.eq.s32.totalorder %v2956, 1
      %vm3007 = vcmp.eq.s32.totalorder %v2959, 1
      %vm3008 = vcmp.eq.s32.totalorder %v2962, 1
      %vm3009 = vcmp.eq.s32.totalorder %v2965, 1
      %vm3010 = vcmp.eq.s32.totalorder %v2968, 1
      %vm3011 = vcmp.eq.s32.totalorder %v2971, 1
      %vm3012 = vcmp.eq.s32.totalorder %v2974, 1
      %vm3013 = vcmp.eq.s32.totalorder %v2977, 1
      %vm3014 = vcmp.eq.s32.totalorder %v2980, 1
      %vm3015 = vcmp.eq.s32.totalorder %v2983, 1
      %v3016 = vsel %vm2984, %v1604, 0.0
      %v3017 = vsel %vm2985, %v1603, 0.0
      %v3018 = vsel %vm2986, %v1602, 0.0
      %v3019 = vsel %vm2987, %v1601, 0.0
      %v3020 = vsel %vm2988, %v1600, 0.0
      %v3021 = vsel %vm2989, %v1599, 0.0
      %v3022 = vsel %vm2990, %v1598, 0.0
      %v3023 = vsel %vm2991, %v1597, 0.0
      %v3024 = vsel %vm2992, %v1596, 0.0
      %v3025 = vsel %vm2993, %v1595, 0.0
      %v3026 = vsel %vm2994, %v1594, 0.0
      %v3027 = vsel %vm2995, %v1593, 0.0
      %v3028 = vsel %vm2996, %v1592, 0.0
      %v3029 = vsel %vm2997, %v1591, 0.0
      %v3030 = vsel %vm2998, %v1590, 0.0
      %v3031 = vsel %vm2999, %v1589, 0.0
      %v3032 = vsel %vm3000, %v1588, 0.0
      %v3033 = vsel %vm3001, %v1587, 0.0
      %v3034 = vsel %vm3002, %v1586, 0.0
      %v3035 = vsel %vm3003, %v1585, 0.0
      %v3036 = vsel %vm3004, %v1584, 0.0
      %v3037 = vsel %vm3005, %v1583, 0.0
      %v3038 = vsel %vm3006, %v1582, 0.0
      %v3039 = vsel %vm3007, %v1581, 0.0
      %v3040 = vsel %vm3008, %v1580, 0.0
      %v3041 = vsel %vm3009, %v1579, 0.0
      %v3042 = vsel %vm3010, %v1578, 0.0
      %v3043 = vsel %vm3011, %v1577, 0.0
      %v3044 = vsel %vm3012, %v1576, 0.0
      %v3045 = vsel %vm3013, %v1575, 0.0
      %v3046 = vsel %vm3014, %v1606, 0.0
      %v3047 = vsel %vm3015, %v1605, 0.0
      %v3048 = vsel %vm2792, 1, 0
      %v3049 = vsel %vm2793, 1, 0
      %v3050 = vsel %vm2794, 1, 0
      %v3051 = vsel %vm2795, 1, 0
      %v3052 = vsel %vm2796, 1, 0
      %v3053 = vsel %vm2797, 1, 0
      %v3054 = vsel %vm2798, 1, 0
      %v3055 = vsel %vm2799, 1, 0
      %v3056 = vsel %vm2800, 1, 0
      %v3057 = vsel %vm2801, 1, 0
      %v3058 = vsel %vm2802, 1, 0
      %v3059 = vsel %vm2803, 1, 0
      %v3060 = vsel %vm2804, 1, 0
      %v3061 = vsel %vm2805, 1, 0
      %v3062 = vsel %vm2806, 1, 0
      %v3063 = vsel %vm2807, 1, 0
      %v3064 = vsel %vm2808, 1, 0
      %v3065 = vsel %vm2809, 1, 0
      %v3066 = vsel %vm2810, 1, 0
      %v3067 = vsel %vm2811, 1, 0
      %v3068 = vsel %vm2812, 1, 0
      %v3069 = vsel %vm2813, 1, 0
      %v3070 = vsel %vm2814, 1, 0
      %v3071 = vsel %vm2815, 1, 0
      %v3072 = vsel %vm2816, 1, 0
      %v3073 = vsel %vm2817, 1, 0
      %v3074 = vsel %vm2818, 1, 0
      %v3075 = vsel %vm2819, 1, 0
      %v3076 = vsel %vm2820, 1, 0
      %v3077 = vsel %vm2821, 1, 0
      %v3078 = vsel %vm2822, 1, 0
      %v3079 = vsel %vm2823, 1, 0
      %3080 = vset.pattern.permute.xlu0 0
      %3081 = vperm.xlu0 %3080, %v3048
      %v3082 = vpop.permute.xlu0 %3081
      %3083 = vset.pattern.permute.xlu0 0
      %3084 = vperm.xlu0 %3083, %v3049
      %v3085 = vpop.permute.xlu0 %3084
      %3086 = vset.pattern.permute.xlu0 0
      %3087 = vperm.xlu0 %3086, %v3050
      %v3088 = vpop.permute.xlu0 %3087
      %3089 = vset.pattern.permute.xlu0 0
      %3090 = vperm.xlu0 %3089, %v3051
      %v3091 = vpop.permute.xlu0 %3090
      %3092 = vset.pattern.permute.xlu0 0
      %3093 = vperm.xlu0 %3092, %v3052
      %v3094 = vpop.permute.xlu0 %3093
      %3095 = vset.pattern.permute.xlu0 0
      %3096 = vperm.xlu0 %3095, %v3053
      %v3097 = vpop.permute.xlu0 %3096
      %3098 = vset.pattern.permute.xlu0 0
      %3099 = vperm.xlu0 %3098, %v3054
      %v3100 = vpop.permute.xlu0 %3099
      %3101 = vset.pattern.permute.xlu0 0
      %3102 = vperm.xlu0 %3101, %v3055
      %v3103 = vpop.permute.xlu0 %3102
      %3104 = vset.pattern.permute.xlu0 0
      %3105 = vperm.xlu0 %3104, %v3056
      %v3106 = vpop.permute.xlu0 %3105
      %3107 = vset.pattern.permute.xlu0 0
      %3108 = vperm.xlu0 %3107, %v3057
      %v3109 = vpop.permute.xlu0 %3108
      %3110 = vset.pattern.permute.xlu0 0
      %3111 = vperm.xlu0 %3110, %v3058
      %v3112 = vpop.permute.xlu0 %3111
      %3113 = vset.pattern.permute.xlu0 0
      %3114 = vperm.xlu0 %3113, %v3059
      %v3115 = vpop.permute.xlu0 %3114
      %3116 = vset.pattern.permute.xlu0 0
      %3117 = vperm.xlu0 %3116, %v3060
      %v3118 = vpop.permute.xlu0 %3117
      %3119 = vset.pattern.permute.xlu0 0
      %3120 = vperm.xlu0 %3119, %v3061
      %v3121 = vpop.permute.xlu0 %3120
      %3122 = vset.pattern.permute.xlu0 0
      %3123 = vperm.xlu0 %3122, %v3062
      %v3124 = vpop.permute.xlu0 %3123
      %3125 = vset.pattern.permute.xlu0 0
      %3126 = vperm.xlu0 %3125, %v3063
      %v3127 = vpop.permute.xlu0 %3126
      %3128 = vset.pattern.permute.xlu0 0
      %3129 = vperm.xlu0 %3128, %v3064
      %v3130 = vpop.permute.xlu0 %3129
      %3131 = vset.pattern.permute.xlu0 0
      %3132 = vperm.xlu0 %3131, %v3065
      %v3133 = vpop.permute.xlu0 %3132
      %3134 = vset.pattern.permute.xlu0 0
      %3135 = vperm.xlu0 %3134, %v3066
      %v3136 = vpop.permute.xlu0 %3135
      %3137 = vset.pattern.permute.xlu0 0
      %3138 = vperm.xlu0 %3137, %v3067
      %v3139 = vpop.permute.xlu0 %3138
      %3140 = vset.pattern.permute.xlu0 0
      %3141 = vperm.xlu0 %3140, %v3068
      %v3142 = vpop.permute.xlu0 %3141
      %3143 = vset.pattern.permute.xlu0 0
      %3144 = vperm.xlu0 %3143, %v3069
      %v3145 = vpop.permute.xlu0 %3144
      %3146 = vset.pattern.permute.xlu0 0
      %3147 = vperm.xlu0 %3146, %v3070
      %v3148 = vpop.permute.xlu0 %3147
      %3149 = vset.pattern.permute.xlu0 0
      %3150 = vperm.xlu0 %3149, %v3071
      %v3151 = vpop.permute.xlu0 %3150
      %3152 = vset.pattern.permute.xlu0 0
      %3153 = vperm.xlu0 %3152, %v3072
      %v3154 = vpop.permute.xlu0 %3153
      %3155 = vset.pattern.permute.xlu0 0
      %3156 = vperm.xlu0 %3155, %v3073
      %v3157 = vpop.permute.xlu0 %3156
      %3158 = vset.pattern.permute.xlu0 0
      %3159 = vperm.xlu0 %3158, %v3074
      %v3160 = vpop.permute.xlu0 %3159
      %3161 = vset.pattern.permute.xlu0 0
      %3162 = vperm.xlu0 %3161, %v3075
      %v3163 = vpop.permute.xlu0 %3162
      %3164 = vset.pattern.permute.xlu0 0
      %3165 = vperm.xlu0 %3164, %v3076
      %v3166 = vpop.permute.xlu0 %3165
      %3167 = vset.pattern.permute.xlu0 0
      %3168 = vperm.xlu0 %3167, %v3077
      %v3169 = vpop.permute.xlu0 %3168
      %3170 = vset.pattern.permute.xlu0 0
      %3171 = vperm.xlu0 %3170, %v3078
      %v3172 = vpop.permute.xlu0 %3171
      %3173 = vset.pattern.permute.xlu0 0
      %3174 = vperm.xlu0 %3173, %v3079
      %v3175 = vpop.permute.xlu0 %3174
      %vm3176 = vcmp.eq.s32.totalorder %v3082, 1
      %vm3177 = vcmp.eq.s32.totalorder %v3085, 1
      %vm3178 = vcmp.eq.s32.totalorder %v3088, 1
      %vm3179 = vcmp.eq.s32.totalorder %v3091, 1
      %vm3180 = vcmp.eq.s32.totalorder %v3094, 1
      %vm3181 = vcmp.eq.s32.totalorder %v3097, 1
      %vm3182 = vcmp.eq.s32.totalorder %v3100, 1
      %vm3183 = vcmp.eq.s32.totalorder %v3103, 1
      %vm3184 = vcmp.eq.s32.totalorder %v3106, 1
      %vm3185 = vcmp.eq.s32.totalorder %v3109, 1
      %vm3186 = vcmp.eq.s32.totalorder %v3112, 1
      %vm3187 = vcmp.eq.s32.totalorder %v3115, 1
      %vm3188 = vcmp.eq.s32.totalorder %v3118, 1
      %vm3189 = vcmp.eq.s32.totalorder %v3121, 1
      %vm3190 = vcmp.eq.s32.totalorder %v3124, 1
      %vm3191 = vcmp.eq.s32.totalorder %v3127, 1
      %vm3192 = vcmp.eq.s32.totalorder %v3130, 1
      %vm3193 = vcmp.eq.s32.totalorder %v3133, 1
      %vm3194 = vcmp.eq.s32.totalorder %v3136, 1
      %vm3195 = vcmp.eq.s32.totalorder %v3139, 1
      %vm3196 = vcmp.eq.s32.totalorder %v3142, 1
      %vm3197 = vcmp.eq.s32.totalorder %v3145, 1
      %vm3198 = vcmp.eq.s32.totalorder %v3148, 1
      %vm3199 = vcmp.eq.s32.totalorder %v3151, 1
      %vm3200 = vcmp.eq.s32.totalorder %v3154, 1
      %vm3201 = vcmp.eq.s32.totalorder %v3157, 1
      %vm3202 = vcmp.eq.s32.totalorder %v3160, 1
      %vm3203 = vcmp.eq.s32.totalorder %v3163, 1
      %vm3204 = vcmp.eq.s32.totalorder %v3166, 1
      %vm3205 = vcmp.eq.s32.totalorder %v3169, 1
      %vm3206 = vcmp.eq.s32.totalorder %v3172, 1
      %vm3207 = vcmp.eq.s32.totalorder %v3175, 1
      %v3208 = vsel %vm3176, %v1510, 0.0
      %v3209 = vsel %vm3177, %v1511, 0.0
      %v3210 = vsel %vm3178, %v1512, 0.0
      %v3211 = vsel %vm3179, %v1513, 0.0
      %v3212 = vsel %vm3180, %v1514, 0.0
      %v3213 = vsel %vm3181, %v1515, 0.0
      %v3214 = vsel %vm3182, %v1516, 0.0
      %v3215 = vsel %vm3183, %v1517, 0.0
      %v3216 = vsel %vm3184, %v1518, 0.0
      %v3217 = vsel %vm3185, %v1519, 0.0
      %v3218 = vsel %vm3186, %v1520, 0.0
      %v3219 = vsel %vm3187, %v1521, 0.0
      %v3220 = vsel %vm3188, %v1522, 0.0
      %v3221 = vsel %vm3189, %v1523, 0.0
      %v3222 = vsel %vm3190, %v1524, 0.0
      %v3223 = vsel %vm3191, %v1525, 0.0
      %v3224 = vsel %vm3192, %v1526, 0.0
      %v3225 = vsel %vm3193, %v1527, 0.0
      %v3226 = vsel %vm3194, %v1528, 0.0
      %v3227 = vsel %vm3195, %v1529, 0.0
      %v3228 = vsel %vm3196, %v1530, 0.0
      %v3229 = vsel %vm3197, %v1531, 0.0
      %v3230 = vsel %vm3198, %v1532, 0.0
      %v3231 = vsel %vm3199, %v1533, 0.0
      %v3232 = vsel %vm3200, %v1534, 0.0
      %v3233 = vsel %vm3201, %v1535, 0.0
      %v3234 = vsel %vm3202, %v1536, 0.0
      %v3235 = vsel %vm3203, %v1537, 0.0
      %v3236 = vsel %vm3204, %v1538, 0.0
      %v3237 = vsel %vm3205, %v1539, 0.0
      %v3238 = vsel %vm3206, %v1508, 0.0
      %v3239 = vsel %vm3207, %v1509, 0.0
      %vm3240 = vmand %vm2792, %vm2152
      %vm3241 = vmand %vm2793, %vm2153
      %vm3242 = vmand %vm2794, %vm2154
      %vm3243 = vmand %vm2795, %vm2155
      %vm3244 = vmand %vm2796, %vm2156
      %vm3245 = vmand %vm2797, %vm2157
      %vm3246 = vmand %vm2798, %vm2158
      %vm3247 = vmand %vm2799, %vm2159
      %vm3248 = vmand %vm2800, %vm2160
      %vm3249 = vmand %vm2801, %vm2161
      %vm3250 = vmand %vm2802, %vm2162
      %vm3251 = vmand %vm2803, %vm2163
      %vm3252 = vmand %vm2804, %vm2164
      %vm3253 = vmand %vm2805, %vm2165
      %vm3254 = vmand %vm2806, %vm2166
      %vm3255 = vmand %vm2807, %vm2167
      %vm3256 = vmand %vm2808, %vm2168
      %vm3257 = vmand %vm2809, %vm2169
      %vm3258 = vmand %vm2810, %vm2170
      %vm3259 = vmand %vm2811, %vm2171
      %vm3260 = vmand %vm2812, %vm2172
      %vm3261 = vmand %vm2813, %vm2173
      %vm3262 = vmand %vm2814, %vm2174
      %vm3263 = vmand %vm2815, %vm2175
      %vm3264 = vmand %vm2816, %vm2176
      %vm3265 = vmand %vm2817, %vm2177
      %vm3266 = vmand %vm2818, %vm2178
      %vm3267 = vmand %vm2819, %vm2179
      %vm3268 = vmand %vm2820, %vm2180
      %vm3269 = vmand %vm2821, %vm2181
      %vm3270 = vmand %vm2822, %vm2182
      %vm3271 = vmand %vm2823, %vm2183
      %v3272 = vsel %vm3240, 1, 0
      %v3273 = vsel %vm3241, 1, 0
      %v3274 = vsel %vm3242, 1, 0
      %v3275 = vsel %vm3243, 1, 0
      %v3276 = vsel %vm3244, 1, 0
      %v3277 = vsel %vm3245, 1, 0
      %v3278 = vsel %vm3246, 1, 0
      %v3279 = vsel %vm3247, 1, 0
      %v3280 = vsel %vm3248, 1, 0
      %v3281 = vsel %vm3249, 1, 0
      %v3282 = vsel %vm3250, 1, 0
      %v3283 = vsel %vm3251, 1, 0
      %v3284 = vsel %vm3252, 1, 0
      %v3285 = vsel %vm3253, 1, 0
      %v3286 = vsel %vm3254, 1, 0
      %v3287 = vsel %vm3255, 1, 0
      %v3288 = vsel %vm3256, 1, 0
      %v3289 = vsel %vm3257, 1, 0
      %v3290 = vsel %vm3258, 1, 0
      %v3291 = vsel %vm3259, 1, 0
      %v3292 = vsel %vm3260, 1, 0
      %v3293 = vsel %vm3261, 1, 0
      %v3294 = vsel %vm3262, 1, 0
      %v3295 = vsel %vm3263, 1, 0
      %v3296 = vsel %vm3264, 1, 0
      %v3297 = vsel %vm3265, 1, 0
      %v3298 = vsel %vm3266, 1, 0
      %v3299 = vsel %vm3267, 1, 0
      %v3300 = vsel %vm3268, 1, 0
      %v3301 = vsel %vm3269, 1, 0
      %v3302 = vsel %vm3270, 1, 0
      %v3303 = vsel %vm3271, 1, 0
      %3304 = vset.pattern.permute.xlu0 0
      %3305 = vperm.xlu0 %3304, %v3272
      %v3306 = vpop.permute.xlu0 %3305
      %3307 = vset.pattern.permute.xlu0 0
      %3308 = vperm.xlu0 %3307, %v3273
      %v3309 = vpop.permute.xlu0 %3308
      %3310 = vset.pattern.permute.xlu0 0
      %3311 = vperm.xlu0 %3310, %v3274
      %v3312 = vpop.permute.xlu0 %3311
      %3313 = vset.pattern.permute.xlu0 0
      %3314 = vperm.xlu0 %3313, %v3275
      %v3315 = vpop.permute.xlu0 %3314
      %3316 = vset.pattern.permute.xlu0 0
      %3317 = vperm.xlu0 %3316, %v3276
      %v3318 = vpop.permute.xlu0 %3317
      %3319 = vset.pattern.permute.xlu0 0
      %3320 = vperm.xlu0 %3319, %v3277
      %v3321 = vpop.permute.xlu0 %3320
      %3322 = vset.pattern.permute.xlu0 0
      %3323 = vperm.xlu0 %3322, %v3278
      %v3324 = vpop.permute.xlu0 %3323
      %3325 = vset.pattern.permute.xlu0 0
      %3326 = vperm.xlu0 %3325, %v3279
      %v3327 = vpop.permute.xlu0 %3326
      %3328 = vset.pattern.permute.xlu0 0
      %3329 = vperm.xlu0 %3328, %v3280
      %v3330 = vpop.permute.xlu0 %3329
      %3331 = vset.pattern.permute.xlu0 0
      %3332 = vperm.xlu0 %3331, %v3281
      %v3333 = vpop.permute.xlu0 %3332
      %3334 = vset.pattern.permute.xlu0 0
      %3335 = vperm.xlu0 %3334, %v3282
      %v3336 = vpop.permute.xlu0 %3335
      %3337 = vset.pattern.permute.xlu0 0
      %3338 = vperm.xlu0 %3337, %v3283
      %v3339 = vpop.permute.xlu0 %3338
      %3340 = vset.pattern.permute.xlu0 0
      %3341 = vperm.xlu0 %3340, %v3284
      %v3342 = vpop.permute.xlu0 %3341
      %3343 = vset.pattern.permute.xlu0 0
      %3344 = vperm.xlu0 %3343, %v3285
      %v3345 = vpop.permute.xlu0 %3344
      %3346 = vset.pattern.permute.xlu0 0
      %3347 = vperm.xlu0 %3346, %v3286
      %v3348 = vpop.permute.xlu0 %3347
      %3349 = vset.pattern.permute.xlu0 0
      %3350 = vperm.xlu0 %3349, %v3287
      %v3351 = vpop.permute.xlu0 %3350
      %3352 = vset.pattern.permute.xlu0 0
      %3353 = vperm.xlu0 %3352, %v3288
      %v3354 = vpop.permute.xlu0 %3353
      %3355 = vset.pattern.permute.xlu0 0
      %3356 = vperm.xlu0 %3355, %v3289
      %v3357 = vpop.permute.xlu0 %3356
      %3358 = vset.pattern.permute.xlu0 0
      %3359 = vperm.xlu0 %3358, %v3290
      %v3360 = vpop.permute.xlu0 %3359
      %3361 = vset.pattern.permute.xlu0 0
      %3362 = vperm.xlu0 %3361, %v3291
      %v3363 = vpop.permute.xlu0 %3362
      %3364 = vset.pattern.permute.xlu0 0
      %3365 = vperm.xlu0 %3364, %v3292
      %v3366 = vpop.permute.xlu0 %3365
      %3367 = vset.pattern.permute.xlu0 0
      %3368 = vperm.xlu0 %3367, %v3293
      %v3369 = vpop.permute.xlu0 %3368
      %3370 = vset.pattern.permute.xlu0 0
      %3371 = vperm.xlu0 %3370, %v3294
      %v3372 = vpop.permute.xlu0 %3371
      %3373 = vset.pattern.permute.xlu0 0
      %3374 = vperm.xlu0 %3373, %v3295
      %v3375 = vpop.permute.xlu0 %3374
      %3376 = vset.pattern.permute.xlu0 0
      %3377 = vperm.xlu0 %3376, %v3296
      %v3378 = vpop.permute.xlu0 %3377
      %3379 = vset.pattern.permute.xlu0 0
      %3380 = vperm.xlu0 %3379, %v3297
      %v3381 = vpop.permute.xlu0 %3380
      %3382 = vset.pattern.permute.xlu0 0
      %3383 = vperm.xlu0 %3382, %v3298
      %v3384 = vpop.permute.xlu0 %3383
      %3385 = vset.pattern.permute.xlu0 0
      %3386 = vperm.xlu0 %3385, %v3299
      %v3387 = vpop.permute.xlu0 %3386
      %3388 = vset.pattern.permute.xlu0 0
      %3389 = vperm.xlu0 %3388, %v3300
      %v3390 = vpop.permute.xlu0 %3389
      %3391 = vset.pattern.permute.xlu0 0
      %3392 = vperm.xlu0 %3391, %v3301
      %v3393 = vpop.permute.xlu0 %3392
      %3394 = vset.pattern.permute.xlu0 0
      %3395 = vperm.xlu0 %3394, %v3302
      %v3396 = vpop.permute.xlu0 %3395
      %3397 = vset.pattern.permute.xlu0 0
      %3398 = vperm.xlu0 %3397, %v3303
      %v3399 = vpop.permute.xlu0 %3398
      %vm3400 = vcmp.eq.s32.totalorder %v3306, 1
      %vm3401 = vcmp.eq.s32.totalorder %v3309, 1
      %vm3402 = vcmp.eq.s32.totalorder %v3312, 1
      %vm3403 = vcmp.eq.s32.totalorder %v3315, 1
      %vm3404 = vcmp.eq.s32.totalorder %v3318, 1
      %vm3405 = vcmp.eq.s32.totalorder %v3321, 1
      %vm3406 = vcmp.eq.s32.totalorder %v3324, 1
      %vm3407 = vcmp.eq.s32.totalorder %v3327, 1
      %vm3408 = vcmp.eq.s32.totalorder %v3330, 1
      %vm3409 = vcmp.eq.s32.totalorder %v3333, 1
      %vm3410 = vcmp.eq.s32.totalorder %v3336, 1
      %vm3411 = vcmp.eq.s32.totalorder %v3339, 1
      %vm3412 = vcmp.eq.s32.totalorder %v3342, 1
      %vm3413 = vcmp.eq.s32.totalorder %v3345, 1
      %vm3414 = vcmp.eq.s32.totalorder %v3348, 1
      %vm3415 = vcmp.eq.s32.totalorder %v3351, 1
      %vm3416 = vcmp.eq.s32.totalorder %v3354, 1
      %vm3417 = vcmp.eq.s32.totalorder %v3357, 1
      %vm3418 = vcmp.eq.s32.totalorder %v3360, 1
      %vm3419 = vcmp.eq.s32.totalorder %v3363, 1
      %vm3420 = vcmp.eq.s32.totalorder %v3366, 1
      %vm3421 = vcmp.eq.s32.totalorder %v3369, 1
      %vm3422 = vcmp.eq.s32.totalorder %v3372, 1
      %vm3423 = vcmp.eq.s32.totalorder %v3375, 1
      %vm3424 = vcmp.eq.s32.totalorder %v3378, 1
      %vm3425 = vcmp.eq.s32.totalorder %v3381, 1
      %vm3426 = vcmp.eq.s32.totalorder %v3384, 1
      %vm3427 = vcmp.eq.s32.totalorder %v3387, 1
      %vm3428 = vcmp.eq.s32.totalorder %v3390, 1
      %vm3429 = vcmp.eq.s32.totalorder %v3393, 1
      %vm3430 = vcmp.eq.s32.totalorder %v3396, 1
      %vm3431 = vcmp.eq.s32.totalorder %v3399, 1
      %v3432 = vsel %vm3400, %v2148, 0.0
      %v3433 = vsel %vm3401, %v2147, 0.0
      %v3434 = vsel %vm3402, %v2146, 0.0
      %v3435 = vsel %vm3403, %v2145, 0.0
      %v3436 = vsel %vm3404, %v2144, 0.0
      %v3437 = vsel %vm3405, %v2143, 0.0
      %v3438 = vsel %vm3406, %v2142, 0.0
      %v3439 = vsel %vm3407, %v2141, 0.0
      %v3440 = vsel %vm3408, %v2140, 0.0
      %v3441 = vsel %vm3409, %v2139, 0.0
      %v3442 = vsel %vm3410, %v2138, 0.0
      %v3443 = vsel %vm3411, %v2137, 0.0
      %v3444 = vsel %vm3412, %v2136, 0.0
      %v3445 = vsel %vm3413, %v2135, 0.0
      %v3446 = vsel %vm3414, %v2134, 0.0
      %v3447 = vsel %vm3415, %v2133, 0.0
      %v3448 = vsel %vm3416, %v2132, 0.0
      %v3449 = vsel %vm3417, %v2131, 0.0
      %v3450 = vsel %vm3418, %v2130, 0.0
      %v3451 = vsel %vm3419, %v2129, 0.0
      %v3452 = vsel %vm3420, %v2128, 0.0
      %v3453 = vsel %vm3421, %v2127, 0.0
      %v3454 = vsel %vm3422, %v2126, 0.0
      %v3455 = vsel %vm3423, %v2125, 0.0
      %v3456 = vsel %vm3424, %v2124, 0.0
      %v3457 = vsel %vm3425, %v2123, 0.0
      %v3458 = vsel %vm3426, %v2122, 0.0
      %v3459 = vsel %vm3427, %v2121, 0.0
      %v3460 = vsel %vm3428, %v2120, 0.0
      %v3461 = vsel %vm3429, %v2151, 0.0
      %v3462 = vsel %vm3430, %v2150, 0.0
      %v3463 = vsel %vm3431, %v2149, 0.0
      %3496 = vrot.lane.b32.xlu0 %v2055, 4
      %v3497 = vpop.permute.xlu0 %3496
      %3498 = vrot.lane.b32.xlu0 %v2056, 4
      %v3499 = vpop.permute.xlu0 %3498
      %3500 = vrot.lane.b32.xlu0 %v2057, 4
      %v3501 = vpop.permute.xlu0 %3500
      %3502 = vrot.lane.b32.xlu0 %v2058, 4
      %v3503 = vpop.permute.xlu0 %3502
      %3504 = vrot.lane.b32.xlu0 %v2059, 4
      %v3505 = vpop.permute.xlu0 %3504
      %3506 = vrot.lane.b32.xlu0 %v2060, 4
      %v3507 = vpop.permute.xlu0 %3506
      %3508 = vrot.lane.b32.xlu0 %v2061, 4
      %v3509 = vpop.permute.xlu0 %3508
      %3510 = vrot.lane.b32.xlu0 %v2062, 4
      %v3511 = vpop.permute.xlu0 %3510
      %3512 = vrot.lane.b32.xlu0 %v2063, 4
      %v3513 = vpop.permute.xlu0 %3512
      %3514 = vrot.lane.b32.xlu0 %v2064, 4
      %v3515 = vpop.permute.xlu0 %3514
      %3516 = vrot.lane.b32.xlu0 %v2065, 4
      %v3517 = vpop.permute.xlu0 %3516
      %3518 = vrot.lane.b32.xlu0 %v2066, 4
      %v3519 = vpop.permute.xlu0 %3518
      %3520 = vrot.lane.b32.xlu0 %v2067, 4
      %v3521 = vpop.permute.xlu0 %3520
      %3522 = vrot.lane.b32.xlu0 %v2068, 4
      %v3523 = vpop.permute.xlu0 %3522
      %3524 = vrot.lane.b32.xlu0 %v2069, 4
      %v3525 = vpop.permute.xlu0 %3524
      %3526 = vrot.lane.b32.xlu0 %v2070, 4
      %v3527 = vpop.permute.xlu0 %3526
      %3528 = vrot.lane.b32.xlu0 %v2071, 4
      %v3529 = vpop.permute.xlu0 %3528
      %3530 = vrot.lane.b32.xlu0 %v2072, 4
      %v3531 = vpop.permute.xlu0 %3530
      %3532 = vrot.lane.b32.xlu0 %v2073, 4
      %v3533 = vpop.permute.xlu0 %3532
      %3534 = vrot.lane.b32.xlu0 %v2074, 4
      %v3535 = vpop.permute.xlu0 %3534
      %3536 = vrot.lane.b32.xlu0 %v2075, 4
      %v3537 = vpop.permute.xlu0 %3536
      %3538 = vrot.lane.b32.xlu0 %v2076, 4
      %v3539 = vpop.permute.xlu0 %3538
      %3540 = vrot.lane.b32.xlu0 %v2077, 4
      %v3541 = vpop.permute.xlu0 %3540
      %3542 = vrot.lane.b32.xlu0 %v2078, 4
      %v3543 = vpop.permute.xlu0 %3542
      %3544 = vrot.lane.b32.xlu0 %v2079, 4
      %v3545 = vpop.permute.xlu0 %3544
      %3546 = vrot.lane.b32.xlu0 %v2080, 4
      %v3547 = vpop.permute.xlu0 %3546
      %3548 = vrot.lane.b32.xlu0 %v2081, 4
      %v3549 = vpop.permute.xlu0 %3548
      %3550 = vrot.lane.b32.xlu0 %v2082, 4
      %v3551 = vpop.permute.xlu0 %3550
      %3552 = vrot.lane.b32.xlu0 %v2083, 4
      %v3553 = vpop.permute.xlu0 %3552
      %3554 = vrot.lane.b32.xlu0 %v2084, 4
      %v3555 = vpop.permute.xlu0 %3554
      %3556 = vrot.lane.b32.xlu0 %v2085, 4
      %v3557 = vpop.permute.xlu0 %3556
      %3558 = vrot.lane.b32.xlu0 %v2086, 4
      %v3559 = vpop.permute.xlu0 %3558
      %3624 = vrot.lane.b32.xlu0 %v2376, 8
      %v3625 = vpop.permute.xlu0 %3624
      %3626 = vrot.lane.b32.xlu0 %v2377, 8
      %v3627 = vpop.permute.xlu0 %3626
      %3628 = vrot.lane.b32.xlu0 %v2378, 8
      %v3629 = vpop.permute.xlu0 %3628
      %3630 = vrot.lane.b32.xlu0 %v2379, 8
      %v3631 = vpop.permute.xlu0 %3630
      %3632 = vrot.lane.b32.xlu0 %v2380, 8
      %v3633 = vpop.permute.xlu0 %3632
      %3634 = vrot.lane.b32.xlu0 %v2381, 8
      %v3635 = vpop.permute.xlu0 %3634
      %3636 = vrot.lane.b32.xlu0 %v2382, 8
      %v3637 = vpop.permute.xlu0 %3636
      %3638 = vrot.lane.b32.xlu0 %v2383, 8
      %v3639 = vpop.permute.xlu0 %3638
      %3640 = vrot.lane.b32.xlu0 %v2384, 8
      %v3641 = vpop.permute.xlu0 %3640
      %3642 = vrot.lane.b32.xlu0 %v2385, 8
      %v3643 = vpop.permute.xlu0 %3642
      %3644 = vrot.lane.b32.xlu0 %v2386, 8
      %v3645 = vpop.permute.xlu0 %3644
      %3646 = vrot.lane.b32.xlu0 %v2387, 8
      %v3647 = vpop.permute.xlu0 %3646
      %3648 = vrot.lane.b32.xlu0 %v2388, 8
      %v3649 = vpop.permute.xlu0 %3648
      %3650 = vrot.lane.b32.xlu0 %v2389, 8
      %v3651 = vpop.permute.xlu0 %3650
      %3652 = vrot.lane.b32.xlu0 %v2390, 8
      %v3653 = vpop.permute.xlu0 %3652
      %3654 = vrot.lane.b32.xlu0 %v2391, 8
      %v3655 = vpop.permute.xlu0 %3654
      %3656 = vrot.lane.b32.xlu0 %v2392, 8
      %v3657 = vpop.permute.xlu0 %3656
      %3658 = vrot.lane.b32.xlu0 %v2393, 8
      %v3659 = vpop.permute.xlu0 %3658
      %3660 = vrot.lane.b32.xlu0 %v2394, 8
      %v3661 = vpop.permute.xlu0 %3660
      %3662 = vrot.lane.b32.xlu0 %v2395, 8
      %v3663 = vpop.permute.xlu0 %3662
      %3664 = vrot.lane.b32.xlu0 %v2396, 8
      %v3665 = vpop.permute.xlu0 %3664
      %3666 = vrot.lane.b32.xlu0 %v2397, 8
      %v3667 = vpop.permute.xlu0 %3666
      %3668 = vrot.lane.b32.xlu0 %v2398, 8
      %v3669 = vpop.permute.xlu0 %3668
      %3670 = vrot.lane.b32.xlu0 %v2399, 8
      %v3671 = vpop.permute.xlu0 %3670
      %3672 = vrot.lane.b32.xlu0 %v2400, 8
      %v3673 = vpop.permute.xlu0 %3672
      %3674 = vrot.lane.b32.xlu0 %v2401, 8
      %v3675 = vpop.permute.xlu0 %3674
      %3676 = vrot.lane.b32.xlu0 %v2402, 8
      %v3677 = vpop.permute.xlu0 %3676
      %3678 = vrot.lane.b32.xlu0 %v2403, 8
      %v3679 = vpop.permute.xlu0 %3678
      %3680 = vrot.lane.b32.xlu0 %v2404, 8
      %v3681 = vpop.permute.xlu0 %3680
      %3682 = vrot.lane.b32.xlu0 %v2405, 8
      %v3683 = vpop.permute.xlu0 %3682
      %3684 = vrot.lane.b32.xlu0 %v2406, 8
      %v3685 = vpop.permute.xlu0 %3684
      %3686 = vrot.lane.b32.xlu0 %v2407, 8
      %v3687 = vpop.permute.xlu0 %3686
      %3752 = vrot.lane.b32.xlu0 %v2568, 12
      %v3753 = vpop.permute.xlu0 %3752
      %3754 = vrot.lane.b32.xlu0 %v2569, 12
      %v3755 = vpop.permute.xlu0 %3754
      %3756 = vrot.lane.b32.xlu0 %v2570, 12
      %v3757 = vpop.permute.xlu0 %3756
      %3758 = vrot.lane.b32.xlu0 %v2571, 12
      %v3759 = vpop.permute.xlu0 %3758
      %3760 = vrot.lane.b32.xlu0 %v2572, 12
      %v3761 = vpop.permute.xlu0 %3760
      %3762 = vrot.lane.b32.xlu0 %v2573, 12
      %v3763 = vpop.permute.xlu0 %3762
      %3764 = vrot.lane.b32.xlu0 %v2574, 12
      %v3765 = vpop.permute.xlu0 %3764
      %3766 = vrot.lane.b32.xlu0 %v2575, 12
      %v3767 = vpop.permute.xlu0 %3766
      %3768 = vrot.lane.b32.xlu0 %v2576, 12
      %v3769 = vpop.permute.xlu0 %3768
      %3770 = vrot.lane.b32.xlu0 %v2577, 12
      %v3771 = vpop.permute.xlu0 %3770
      %3772 = vrot.lane.b32.xlu0 %v2578, 12
      %v3773 = vpop.permute.xlu0 %3772
      %3774 = vrot.lane.b32.xlu0 %v2579, 12
      %v3775 = vpop.permute.xlu0 %3774
      %3776 = vrot.lane.b32.xlu0 %v2580, 12
      %v3777 = vpop.permute.xlu0 %3776
      %3778 = vrot.lane.b32.xlu0 %v2581, 12
      %v3779 = vpop.permute.xlu0 %3778
      %3780 = vrot.lane.b32.xlu0 %v2582, 12
      %v3781 = vpop.permute.xlu0 %3780
      %3782 = vrot.lane.b32.xlu0 %v2583, 12
      %v3783 = vpop.permute.xlu0 %3782
      %3784 = vrot.lane.b32.xlu0 %v2584, 12
      %v3785 = vpop.permute.xlu0 %3784
      %3786 = vrot.lane.b32.xlu0 %v2585, 12
      %v3787 = vpop.permute.xlu0 %3786
      %3788 = vrot.lane.b32.xlu0 %v2586, 12
      %v3789 = vpop.permute.xlu0 %3788
      %3790 = vrot.lane.b32.xlu0 %v2587, 12
      %v3791 = vpop.permute.xlu0 %3790
      %3792 = vrot.lane.b32.xlu0 %v2588, 12
      %v3793 = vpop.permute.xlu0 %3792
      %3794 = vrot.lane.b32.xlu0 %v2589, 12
      %v3795 = vpop.permute.xlu0 %3794
      %3796 = vrot.lane.b32.xlu0 %v2590, 12
      %v3797 = vpop.permute.xlu0 %3796
      %3798 = vrot.lane.b32.xlu0 %v2591, 12
      %v3799 = vpop.permute.xlu0 %3798
      %3800 = vrot.lane.b32.xlu0 %v2592, 12
      %v3801 = vpop.permute.xlu0 %3800
      %3802 = vrot.lane.b32.xlu0 %v2593, 12
      %v3803 = vpop.permute.xlu0 %3802
      %3804 = vrot.lane.b32.xlu0 %v2594, 12
      %v3805 = vpop.permute.xlu0 %3804
      %3806 = vrot.lane.b32.xlu0 %v2595, 12
      %v3807 = vpop.permute.xlu0 %3806
      %3808 = vrot.lane.b32.xlu0 %v2596, 12
      %v3809 = vpop.permute.xlu0 %3808
      %3810 = vrot.lane.b32.xlu0 %v2597, 12
      %v3811 = vpop.permute.xlu0 %3810
      %3812 = vrot.lane.b32.xlu0 %v2598, 12
      %v3813 = vpop.permute.xlu0 %3812
      %3814 = vrot.lane.b32.xlu0 %v2599, 12
      %v3815 = vpop.permute.xlu0 %3814
      %3880 = vrot.lane.b32.xlu0 %v1508, 16
      %v3881 = vpop.permute.xlu0 %3880
      %3882 = vrot.lane.b32.xlu0 %v1509, 16
      %v3883 = vpop.permute.xlu0 %3882
      %3884 = vrot.lane.b32.xlu0 %v1510, 16
      %v3885 = vpop.permute.xlu0 %3884
      %3886 = vrot.lane.b32.xlu0 %v1511, 16
      %v3887 = vpop.permute.xlu0 %3886
      %3888 = vrot.lane.b32.xlu0 %v1512, 16
      %v3889 = vpop.permute.xlu0 %3888
      %3890 = vrot.lane.b32.xlu0 %v1513, 16
      %v3891 = vpop.permute.xlu0 %3890
      %3892 = vrot.lane.b32.xlu0 %v1514, 16
      %v3893 = vpop.permute.xlu0 %3892
      %3894 = vrot.lane.b32.xlu0 %v1515, 16
      %v3895 = vpop.permute.xlu0 %3894
      %3896 = vrot.lane.b32.xlu0 %v1516, 16
      %v3897 = vpop.permute.xlu0 %3896
      %3898 = vrot.lane.b32.xlu0 %v1517, 16
      %v3899 = vpop.permute.xlu0 %3898
      %3900 = vrot.lane.b32.xlu0 %v1518, 16
      %v3901 = vpop.permute.xlu0 %3900
      %3902 = vrot.lane.b32.xlu0 %v1519, 16
      %v3903 = vpop.permute.xlu0 %3902
      %3904 = vrot.lane.b32.xlu0 %v1520, 16
      %v3905 = vpop.permute.xlu0 %3904
      %3906 = vrot.lane.b32.xlu0 %v1521, 16
      %v3907 = vpop.permute.xlu0 %3906
      %3908 = vrot.lane.b32.xlu0 %v1522, 16
      %v3909 = vpop.permute.xlu0 %3908
      %3910 = vrot.lane.b32.xlu0 %v1523, 16
      %v3911 = vpop.permute.xlu0 %3910
      %3912 = vrot.lane.b32.xlu0 %v1524, 16
      %v3913 = vpop.permute.xlu0 %3912
      %3914 = vrot.lane.b32.xlu0 %v1525, 16
      %v3915 = vpop.permute.xlu0 %3914
      %3916 = vrot.lane.b32.xlu0 %v1526, 16
      %v3917 = vpop.permute.xlu0 %3916
      %3918 = vrot.lane.b32.xlu0 %v1527, 16
      %v3919 = vpop.permute.xlu0 %3918
      %3920 = vrot.lane.b32.xlu0 %v1528, 16
      %v3921 = vpop.permute.xlu0 %3920
      %3922 = vrot.lane.b32.xlu0 %v1529, 16
      %v3923 = vpop.permute.xlu0 %3922
      %3924 = vrot.lane.b32.xlu0 %v1530, 16
      %v3925 = vpop.permute.xlu0 %3924
      %3926 = vrot.lane.b32.xlu0 %v1531, 16
      %v3927 = vpop.permute.xlu0 %3926
      %3928 = vrot.lane.b32.xlu0 %v1532, 16
      %v3929 = vpop.permute.xlu0 %3928
      %3930 = vrot.lane.b32.xlu0 %v1533, 16
      %v3931 = vpop.permute.xlu0 %3930
      %3932 = vrot.lane.b32.xlu0 %v1534, 16
      %v3933 = vpop.permute.xlu0 %3932
      %3934 = vrot.lane.b32.xlu0 %v1535, 16
      %v3935 = vpop.permute.xlu0 %3934
      %3936 = vrot.lane.b32.xlu0 %v1536, 16
      %v3937 = vpop.permute.xlu0 %3936
      %3938 = vrot.lane.b32.xlu0 %v1537, 16
      %v3939 = vpop.permute.xlu0 %3938
      %3940 = vrot.lane.b32.xlu0 %v1538, 16
      %v3941 = vpop.permute.xlu0 %3940
      %3942 = vrot.lane.b32.xlu0 %v1539, 16
      %v3943 = vpop.permute.xlu0 %3942
      %4008 = vrot.lane.b32.xlu0 %v2760, 20
      %v4009 = vpop.permute.xlu0 %4008
      %4010 = vrot.lane.b32.xlu0 %v2761, 20
      %v4011 = vpop.permute.xlu0 %4010
      %4012 = vrot.lane.b32.xlu0 %v2762, 20
      %v4013 = vpop.permute.xlu0 %4012
      %4014 = vrot.lane.b32.xlu0 %v2763, 20
      %v4015 = vpop.permute.xlu0 %4014
      %4016 = vrot.lane.b32.xlu0 %v2764, 20
      %v4017 = vpop.permute.xlu0 %4016
      %4018 = vrot.lane.b32.xlu0 %v2765, 20
      %v4019 = vpop.permute.xlu0 %4018
      %4020 = vrot.lane.b32.xlu0 %v2766, 20
      %v4021 = vpop.permute.xlu0 %4020
      %4022 = vrot.lane.b32.xlu0 %v2767, 20
      %v4023 = vpop.permute.xlu0 %4022
      %4024 = vrot.lane.b32.xlu0 %v2768, 20
      %v4025 = vpop.permute.xlu0 %4024
      %4026 = vrot.lane.b32.xlu0 %v2769, 20
      %v4027 = vpop.permute.xlu0 %4026
      %4028 = vrot.lane.b32.xlu0 %v2770, 20
      %v4029 = vpop.permute.xlu0 %4028
      %4030 = vrot.lane.b32.xlu0 %v2771, 20
      %v4031 = vpop.permute.xlu0 %4030
      %4032 = vrot.lane.b32.xlu0 %v2772, 20
      %v4033 = vpop.permute.xlu0 %4032
      %4034 = vrot.lane.b32.xlu0 %v2773, 20
      %v4035 = vpop.permute.xlu0 %4034
      %4036 = vrot.lane.b32.xlu0 %v2774, 20
      %v4037 = vpop.permute.xlu0 %4036
      %4038 = vrot.lane.b32.xlu0 %v2775, 20
      %v4039 = vpop.permute.xlu0 %4038
      %4040 = vrot.lane.b32.xlu0 %v2776, 20
      %v4041 = vpop.permute.xlu0 %4040
      %4042 = vrot.lane.b32.xlu0 %v2777, 20
      %v4043 = vpop.permute.xlu0 %4042
      %4044 = vrot.lane.b32.xlu0 %v2778, 20
      %v4045 = vpop.permute.xlu0 %4044
      %4046 = vrot.lane.b32.xlu0 %v2779, 20
      %v4047 = vpop.permute.xlu0 %4046
      %4048 = vrot.lane.b32.xlu0 %v2780, 20
      %v4049 = vpop.permute.xlu0 %4048
      %4050 = vrot.lane.b32.xlu0 %v2781, 20
      %v4051 = vpop.permute.xlu0 %4050
      %4052 = vrot.lane.b32.xlu0 %v2782, 20
      %v4053 = vpop.permute.xlu0 %4052
      %4054 = vrot.lane.b32.xlu0 %v2783, 20
      %v4055 = vpop.permute.xlu0 %4054
      %4056 = vrot.lane.b32.xlu0 %v2784, 20
      %v4057 = vpop.permute.xlu0 %4056
      %4058 = vrot.lane.b32.xlu0 %v2785, 20
      %v4059 = vpop.permute.xlu0 %4058
      %4060 = vrot.lane.b32.xlu0 %v2786, 20
      %v4061 = vpop.permute.xlu0 %4060
      %4062 = vrot.lane.b32.xlu0 %v2787, 20
      %v4063 = vpop.permute.xlu0 %4062
      %4064 = vrot.lane.b32.xlu0 %v2788, 20
      %v4065 = vpop.permute.xlu0 %4064
      %4066 = vrot.lane.b32.xlu0 %v2789, 20
      %v4067 = vpop.permute.xlu0 %4066
      %4068 = vrot.lane.b32.xlu0 %v2790, 20
      %v4069 = vpop.permute.xlu0 %4068
      %4070 = vrot.lane.b32.xlu0 %v2791, 20
      %v4071 = vpop.permute.xlu0 %4070
      %4136 = vrot.lane.b32.xlu0 %v3016, 24
      %v4137 = vpop.permute.xlu0 %4136
      %4138 = vrot.lane.b32.xlu0 %v3017, 24
      %v4139 = vpop.permute.xlu0 %4138
      %4140 = vrot.lane.b32.xlu0 %v3018, 24
      %v4141 = vpop.permute.xlu0 %4140
      %4142 = vrot.lane.b32.xlu0 %v3019, 24
      %v4143 = vpop.permute.xlu0 %4142
      %4144 = vrot.lane.b32.xlu0 %v3020, 24
      %v4145 = vpop.permute.xlu0 %4144
      %4146 = vrot.lane.b32.xlu0 %v3021, 24
      %v4147 = vpop.permute.xlu0 %4146
      %4148 = vrot.lane.b32.xlu0 %v3022, 24
      %v4149 = vpop.permute.xlu0 %4148
      %4150 = vrot.lane.b32.xlu0 %v3023, 24
      %v4151 = vpop.permute.xlu0 %4150
      %4152 = vrot.lane.b32.xlu0 %v3024, 24
      %v4153 = vpop.permute.xlu0 %4152
      %4154 = vrot.lane.b32.xlu0 %v3025, 24
      %v4155 = vpop.permute.xlu0 %4154
      %4156 = vrot.lane.b32.xlu0 %v3026, 24
      %v4157 = vpop.permute.xlu0 %4156
      %4158 = vrot.lane.b32.xlu0 %v3027, 24
      %v4159 = vpop.permute.xlu0 %4158
      %4160 = vrot.lane.b32.xlu0 %v3028, 24
      %v4161 = vpop.permute.xlu0 %4160
      %4162 = vrot.lane.b32.xlu0 %v3029, 24
      %v4163 = vpop.permute.xlu0 %4162
      %4164 = vrot.lane.b32.xlu0 %v3030, 24
      %v4165 = vpop.permute.xlu0 %4164
      %4166 = vrot.lane.b32.xlu0 %v3031, 24
      %v4167 = vpop.permute.xlu0 %4166
      %4168 = vrot.lane.b32.xlu0 %v3032, 24
      %v4169 = vpop.permute.xlu0 %4168
      %4170 = vrot.lane.b32.xlu0 %v3033, 24
      %v4171 = vpop.permute.xlu0 %4170
      %4172 = vrot.lane.b32.xlu0 %v3034, 24
      %v4173 = vpop.permute.xlu0 %4172
      %4174 = vrot.lane.b32.xlu0 %v3035, 24
      %v4175 = vpop.permute.xlu0 %4174
      %4176 = vrot.lane.b32.xlu0 %v3036, 24
      %v4177 = vpop.permute.xlu0 %4176
      %4178 = vrot.lane.b32.xlu0 %v3037, 24
      %v4179 = vpop.permute.xlu0 %4178
      %4180 = vrot.lane.b32.xlu0 %v3038, 24
      %v4181 = vpop.permute.xlu0 %4180
      %4182 = vrot.lane.b32.xlu0 %v3039, 24
      %v4183 = vpop.permute.xlu0 %4182
      %4184 = vrot.lane.b32.xlu0 %v3040, 24
      %v4185 = vpop.permute.xlu0 %4184
      %4186 = vrot.lane.b32.xlu0 %v3041, 24
      %v4187 = vpop.permute.xlu0 %4186
      %4188 = vrot.lane.b32.xlu0 %v3042, 24
      %v4189 = vpop.permute.xlu0 %4188
      %4190 = vrot.lane.b32.xlu0 %v3043, 24
      %v4191 = vpop.permute.xlu0 %4190
      %4192 = vrot.lane.b32.xlu0 %v3044, 24
      %v4193 = vpop.permute.xlu0 %4192
      %4194 = vrot.lane.b32.xlu0 %v3045, 24
      %v4195 = vpop.permute.xlu0 %4194
      %4196 = vrot.lane.b32.xlu0 %v3046, 24
      %v4197 = vpop.permute.xlu0 %4196
      %4198 = vrot.lane.b32.xlu0 %v3047, 24
      %v4199 = vpop.permute.xlu0 %4198
      %4264 = vrot.lane.b32.xlu0 %v3208, 28
      %v4265 = vpop.permute.xlu0 %4264
      %4266 = vrot.lane.b32.xlu0 %v3209, 28
      %v4267 = vpop.permute.xlu0 %4266
      %4268 = vrot.lane.b32.xlu0 %v3210, 28
      %v4269 = vpop.permute.xlu0 %4268
      %4270 = vrot.lane.b32.xlu0 %v3211, 28
      %v4271 = vpop.permute.xlu0 %4270
      %4272 = vrot.lane.b32.xlu0 %v3212, 28
      %v4273 = vpop.permute.xlu0 %4272
      %4274 = vrot.lane.b32.xlu0 %v3213, 28
      %v4275 = vpop.permute.xlu0 %4274
      %4276 = vrot.lane.b32.xlu0 %v3214, 28
      %v4277 = vpop.permute.xlu0 %4276
      %4278 = vrot.lane.b32.xlu0 %v3215, 28
      %v4279 = vpop.permute.xlu0 %4278
      %4280 = vrot.lane.b32.xlu0 %v3216, 28
      %v4281 = vpop.permute.xlu0 %4280
      %4282 = vrot.lane.b32.xlu0 %v3217, 28
      %v4283 = vpop.permute.xlu0 %4282
      %4284 = vrot.lane.b32.xlu0 %v3218, 28
      %v4285 = vpop.permute.xlu0 %4284
      %4286 = vrot.lane.b32.xlu0 %v3219, 28
      %v4287 = vpop.permute.xlu0 %4286
      %4288 = vrot.lane.b32.xlu0 %v3220, 28
      %v4289 = vpop.permute.xlu0 %4288
      %4290 = vrot.lane.b32.xlu0 %v3221, 28
      %v4291 = vpop.permute.xlu0 %4290
      %4292 = vrot.lane.b32.xlu0 %v3222, 28
      %v4293 = vpop.permute.xlu0 %4292
      %4294 = vrot.lane.b32.xlu0 %v3223, 28
      %v4295 = vpop.permute.xlu0 %4294
      %4296 = vrot.lane.b32.xlu0 %v3224, 28
      %v4297 = vpop.permute.xlu0 %4296
      %4298 = vrot.lane.b32.xlu0 %v3225, 28
      %v4299 = vpop.permute.xlu0 %4298
      %4300 = vrot.lane.b32.xlu0 %v3226, 28
      %v4301 = vpop.permute.xlu0 %4300
      %4302 = vrot.lane.b32.xlu0 %v3227, 28
      %v4303 = vpop.permute.xlu0 %4302
      %4304 = vrot.lane.b32.xlu0 %v3228, 28
      %v4305 = vpop.permute.xlu0 %4304
      %4306 = vrot.lane.b32.xlu0 %v3229, 28
      %v4307 = vpop.permute.xlu0 %4306
      %4308 = vrot.lane.b32.xlu0 %v3230, 28
      %v4309 = vpop.permute.xlu0 %4308
      %4310 = vrot.lane.b32.xlu0 %v3231, 28
      %v4311 = vpop.permute.xlu0 %4310
      %4312 = vrot.lane.b32.xlu0 %v3232, 28
      %v4313 = vpop.permute.xlu0 %4312
      %4314 = vrot.lane.b32.xlu0 %v3233, 28
      %v4315 = vpop.permute.xlu0 %4314
      %4316 = vrot.lane.b32.xlu0 %v3234, 28
      %v4317 = vpop.permute.xlu0 %4316
      %4318 = vrot.lane.b32.xlu0 %v3235, 28
      %v4319 = vpop.permute.xlu0 %4318
      %4320 = vrot.lane.b32.xlu0 %v3236, 28
      %v4321 = vpop.permute.xlu0 %4320
      %4322 = vrot.lane.b32.xlu0 %v3237, 28
      %v4323 = vpop.permute.xlu0 %4322
      %4324 = vrot.lane.b32.xlu0 %v3238, 28
      %v4325 = vpop.permute.xlu0 %4324
      %4326 = vrot.lane.b32.xlu0 %v3239, 28
      %v4327 = vpop.permute.xlu0 %4326
      %4392 = vrot.lane.b32.xlu0 %v3432, 32
      %v4393 = vpop.permute.xlu0 %4392
      %4394 = vrot.lane.b32.xlu0 %v3433, 32
      %v4395 = vpop.permute.xlu0 %4394
      %4396 = vrot.lane.b32.xlu0 %v3434, 32
      %v4397 = vpop.permute.xlu0 %4396
      %4398 = vrot.lane.b32.xlu0 %v3435, 32
      %v4399 = vpop.permute.xlu0 %4398
      %4400 = vrot.lane.b32.xlu0 %v3436, 32
      %v4401 = vpop.permute.xlu0 %4400
      %4402 = vrot.lane.b32.xlu0 %v3437, 32
      %v4403 = vpop.permute.xlu0 %4402
      %4404 = vrot.lane.b32.xlu0 %v3438, 32
      %v4405 = vpop.permute.xlu0 %4404
      %4406 = vrot.lane.b32.xlu0 %v3439, 32
      %v4407 = vpop.permute.xlu0 %4406
      %4408 = vrot.lane.b32.xlu0 %v3440, 32
      %v4409 = vpop.permute.xlu0 %4408
      %4410 = vrot.lane.b32.xlu0 %v3441, 32
      %v4411 = vpop.permute.xlu0 %4410
      %4412 = vrot.lane.b32.xlu0 %v3442, 32
      %v4413 = vpop.permute.xlu0 %4412
      %4414 = vrot.lane.b32.xlu0 %v3443, 32
      %v4415 = vpop.permute.xlu0 %4414
      %4416 = vrot.lane.b32.xlu0 %v3444, 32
      %v4417 = vpop.permute.xlu0 %4416
      %4418 = vrot.lane.b32.xlu0 %v3445, 32
      %v4419 = vpop.permute.xlu0 %4418
      %4420 = vrot.lane.b32.xlu0 %v3446, 32
      %v4421 = vpop.permute.xlu0 %4420
      %4422 = vrot.lane.b32.xlu0 %v3447, 32
      %v4423 = vpop.permute.xlu0 %4422
      %4424 = vrot.lane.b32.xlu0 %v3448, 32
      %v4425 = vpop.permute.xlu0 %4424
      %4426 = vrot.lane.b32.xlu0 %v3449, 32
      %v4427 = vpop.permute.xlu0 %4426
      %4428 = vrot.lane.b32.xlu0 %v3450, 32
      %v4429 = vpop.permute.xlu0 %4428
      %4430 = vrot.lane.b32.xlu0 %v3451, 32
      %v4431 = vpop.permute.xlu0 %4430
      %4432 = vrot.lane.b32.xlu0 %v3452, 32
      %v4433 = vpop.permute.xlu0 %4432
      %4434 = vrot.lane.b32.xlu0 %v3453, 32
      %v4435 = vpop.permute.xlu0 %4434
      %4436 = vrot.lane.b32.xlu0 %v3454, 32
      %v4437 = vpop.permute.xlu0 %4436
      %4438 = vrot.lane.b32.xlu0 %v3455, 32
      %v4439 = vpop.permute.xlu0 %4438
      %4440 = vrot.lane.b32.xlu0 %v3456, 32
      %v4441 = vpop.permute.xlu0 %4440
      %4442 = vrot.lane.b32.xlu0 %v3457, 32
      %v4443 = vpop.permute.xlu0 %4442
      %4444 = vrot.lane.b32.xlu0 %v3458, 32
      %v4445 = vpop.permute.xlu0 %4444
      %4446 = vrot.lane.b32.xlu0 %v3459, 32
      %v4447 = vpop.permute.xlu0 %4446
      %4448 = vrot.lane.b32.xlu0 %v3460, 32
      %v4449 = vpop.permute.xlu0 %4448
      %4450 = vrot.lane.b32.xlu0 %v3461, 32
      %v4451 = vpop.permute.xlu0 %4450
      %4452 = vrot.lane.b32.xlu0 %v3462, 32
      %v4453 = vpop.permute.xlu0 %4452
      %4454 = vrot.lane.b32.xlu0 %v3463, 32
      %v4455 = vpop.permute.xlu0 %4454
      %vm4488 = vcmask 31744
      %v4489 = vsel %vm4488, %v1863, %v3497
      %v4490 = vsel %vm4488, %v1864, %v3499
      %v4491 = vsel %vm4488, %v1865, %v3501
      %v4492 = vsel %vm4488, %v1866, %v3503
      %v4493 = vsel %vm4488, %v1867, %v3505
      %v4494 = vsel %vm4488, %v1868, %v3507
      %v4495 = vsel %vm4488, %v1869, %v3509
      %v4496 = vsel %vm4488, %v1870, %v3511
      %v4497 = vsel %vm4488, %v1871, %v3513
      %v4498 = vsel %vm4488, %v1872, %v3515
      %v4499 = vsel %vm4488, %v1873, %v3517
      %v4500 = vsel %vm4488, %v1874, %v3519
      %v4501 = vsel %vm4488, %v1875, %v3521
      %v4502 = vsel %vm4488, %v1876, %v3523
      %v4503 = vsel %vm4488, %v1877, %v3525
      %v4504 = vsel %vm4488, %v1878, %v3527
      %v4505 = vsel %vm4488, %v1879, %v3529
      %v4506 = vsel %vm4488, %v1880, %v3531
      %v4507 = vsel %vm4488, %v1881, %v3533
      %v4508 = vsel %vm4488, %v1882, %v3535
      %v4509 = vsel %vm4488, %v1883, %v3537
      %v4510 = vsel %vm4488, %v1884, %v3539
      %v4511 = vsel %vm4488, %v1885, %v3541
      %v4512 = vsel %vm4488, %v1886, %v3543
      %v4513 = vsel %vm4488, %v1887, %v3545
      %v4514 = vsel %vm4488, %v1888, %v3547
      %v4515 = vsel %vm4488, %v1889, %v3549
      %v4516 = vsel %vm4488, %v1890, %v3551
      %v4517 = vsel %vm4488, %v1891, %v3553
      %v4518 = vsel %vm4488, %v1892, %v3555
      %v4519 = vsel %vm4488, %v1893, %v3557
      %v4520 = vsel %vm4488, %v1894, %v3559
      %v4521 = vsel %vm565, %v4489, %v3625
      %v4522 = vsel %vm565, %v4490, %v3627
      %v4523 = vsel %vm565, %v4491, %v3629
      %v4524 = vsel %vm565, %v4492, %v3631
      %v4525 = vsel %vm565, %v4493, %v3633
      %v4526 = vsel %vm565, %v4494, %v3635
      %v4527 = vsel %vm565, %v4495, %v3637
      %v4528 = vsel %vm565, %v4496, %v3639
      %v4529 = vsel %vm565, %v4497, %v3641
      %v4530 = vsel %vm565, %v4498, %v3643
      %v4531 = vsel %vm565, %v4499, %v3645
      %v4532 = vsel %vm565, %v4500, %v3647
      %v4533 = vsel %vm565, %v4501, %v3649
      %v4534 = vsel %vm565, %v4502, %v3651
      %v4535 = vsel %vm565, %v4503, %v3653
      %v4536 = vsel %vm565, %v4504, %v3655
      %v4537 = vsel %vm565, %v4505, %v3657
      %v4538 = vsel %vm565, %v4506, %v3659
      %v4539 = vsel %vm565, %v4507, %v3661
      %v4540 = vsel %vm565, %v4508, %v3663
      %v4541 = vsel %vm565, %v4509, %v3665
      %v4542 = vsel %vm565, %v4510, %v3667
      %v4543 = vsel %vm565, %v4511, %v3669
      %v4544 = vsel %vm565, %v4512, %v3671
      %v4545 = vsel %vm565, %v4513, %v3673
      %v4546 = vsel %vm565, %v4514, %v3675
      %v4547 = vsel %vm565, %v4515, %v3677
      %v4548 = vsel %vm565, %v4516, %v3679
      %v4549 = vsel %vm565, %v4517, %v3681
      %v4550 = vsel %vm565, %v4518, %v3683
      %v4551 = vsel %vm565, %v4519, %v3685
      %v4552 = vsel %vm565, %v4520, %v3687
      %vm4553 = vcmask 97280
      %v4554 = vsel %vm4553, %v4521, %v3753
      %v4555 = vsel %vm4553, %v4522, %v3755
      %v4556 = vsel %vm4553, %v4523, %v3757
      %v4557 = vsel %vm4553, %v4524, %v3759
      %v4558 = vsel %vm4553, %v4525, %v3761
      %v4559 = vsel %vm4553, %v4526, %v3763
      %v4560 = vsel %vm4553, %v4527, %v3765
      %v4561 = vsel %vm4553, %v4528, %v3767
      %v4562 = vsel %vm4553, %v4529, %v3769
      %v4563 = vsel %vm4553, %v4530, %v3771
      %v4564 = vsel %vm4553, %v4531, %v3773
      %v4565 = vsel %vm4553, %v4532, %v3775
      %v4566 = vsel %vm4553, %v4533, %v3777
      %v4567 = vsel %vm4553, %v4534, %v3779
      %v4568 = vsel %vm4553, %v4535, %v3781
      %v4569 = vsel %vm4553, %v4536, %v3783
      %v4570 = vsel %vm4553, %v4537, %v3785
      %v4571 = vsel %vm4553, %v4538, %v3787
      %v4572 = vsel %vm4553, %v4539, %v3789
      %v4573 = vsel %vm4553, %v4540, %v3791
      %v4574 = vsel %vm4553, %v4541, %v3793
      %v4575 = vsel %vm4553, %v4542, %v3795
      %v4576 = vsel %vm4553, %v4543, %v3797
      %v4577 = vsel %vm4553, %v4544, %v3799
      %v4578 = vsel %vm4553, %v4545, %v3801
      %v4579 = vsel %vm4553, %v4546, %v3803
      %v4580 = vsel %vm4553, %v4547, %v3805
      %v4581 = vsel %vm4553, %v4548, %v3807
      %v4582 = vsel %vm4553, %v4549, %v3809
      %v4583 = vsel %vm4553, %v4550, %v3811
      %v4584 = vsel %vm4553, %v4551, %v3813
      %v4585 = vsel %vm4553, %v4552, %v3815
      %vm4586 = vcmask 130048
      %v4587 = vsel %vm4586, %v4554, %v3881
      %v4588 = vsel %vm4586, %v4555, %v3883
      %v4589 = vsel %vm4586, %v4556, %v3885
      %v4590 = vsel %vm4586, %v4557, %v3887
      %v4591 = vsel %vm4586, %v4558, %v3889
      %v4592 = vsel %vm4586, %v4559, %v3891
      %v4593 = vsel %vm4586, %v4560, %v3893
      %v4594 = vsel %vm4586, %v4561, %v3895
      %v4595 = vsel %vm4586, %v4562, %v3897
      %v4596 = vsel %vm4586, %v4563, %v3899
      %v4597 = vsel %vm4586, %v4564, %v3901
      %v4598 = vsel %vm4586, %v4565, %v3903
      %v4599 = vsel %vm4586, %v4566, %v3905
      %v4600 = vsel %vm4586, %v4567, %v3907
      %v4601 = vsel %vm4586, %v4568, %v3909
      %v4602 = vsel %vm4586, %v4569, %v3911
      %v4603 = vsel %vm4586, %v4570, %v3913
      %v4604 = vsel %vm4586, %v4571, %v3915
      %v4605 = vsel %vm4586, %v4572, %v3917
      %v4606 = vsel %vm4586, %v4573, %v3919
      %v4607 = vsel %vm4586, %v4574, %v3921
      %v4608 = vsel %vm4586, %v4575, %v3923
      %v4609 = vsel %vm4586, %v4576, %v3925
      %v4610 = vsel %vm4586, %v4577, %v3927
      %v4611 = vsel %vm4586, %v4578, %v3929
      %v4612 = vsel %vm4586, %v4579, %v3931
      %v4613 = vsel %vm4586, %v4580, %v3933
      %v4614 = vsel %vm4586, %v4581, %v3935
      %v4615 = vsel %vm4586, %v4582, %v3937
      %v4616 = vsel %vm4586, %v4583, %v3939
      %v4617 = vsel %vm4586, %v4584, %v3941
      %v4618 = vsel %vm4586, %v4585, %v3943
      %vm4619 = vcmask 162816
      %v4620 = vsel %vm4619, %v4587, %v4009
      %v4621 = vsel %vm4619, %v4588, %v4011
      %v4622 = vsel %vm4619, %v4589, %v4013
      %v4623 = vsel %vm4619, %v4590, %v4015
      %v4624 = vsel %vm4619, %v4591, %v4017
      %v4625 = vsel %vm4619, %v4592, %v4019
      %v4626 = vsel %vm4619, %v4593, %v4021
      %v4627 = vsel %vm4619, %v4594, %v4023
      %v4628 = vsel %vm4619, %v4595, %v4025
      %v4629 = vsel %vm4619, %v4596, %v4027
      %v4630 = vsel %vm4619, %v4597, %v4029
      %v4631 = vsel %vm4619, %v4598, %v4031
      %v4632 = vsel %vm4619, %v4599, %v4033
      %v4633 = vsel %vm4619, %v4600, %v4035
      %v4634 = vsel %vm4619, %v4601, %v4037
      %v4635 = vsel %vm4619, %v4602, %v4039
      %v4636 = vsel %vm4619, %v4603, %v4041
      %v4637 = vsel %vm4619, %v4604, %v4043
      %v4638 = vsel %vm4619, %v4605, %v4045
      %v4639 = vsel %vm4619, %v4606, %v4047
      %v4640 = vsel %vm4619, %v4607, %v4049
      %v4641 = vsel %vm4619, %v4608, %v4051
      %v4642 = vsel %vm4619, %v4609, %v4053
      %v4643 = vsel %vm4619, %v4610, %v4055
      %v4644 = vsel %vm4619, %v4611, %v4057
      %v4645 = vsel %vm4619, %v4612, %v4059
      %v4646 = vsel %vm4619, %v4613, %v4061
      %v4647 = vsel %vm4619, %v4614, %v4063
      %v4648 = vsel %vm4619, %v4615, %v4065
      %v4649 = vsel %vm4619, %v4616, %v4067
      %v4650 = vsel %vm4619, %v4617, %v4069
      %v4651 = vsel %vm4619, %v4618, %v4071
      %vm4652 = vcmask 195584
      %v4653 = vsel %vm4652, %v4620, %v4137
      %v4654 = vsel %vm4652, %v4621, %v4139
      %v4655 = vsel %vm4652, %v4622, %v4141
      %v4656 = vsel %vm4652, %v4623, %v4143
      %v4657 = vsel %vm4652, %v4624, %v4145
      %v4658 = vsel %vm4652, %v4625, %v4147
      %v4659 = vsel %vm4652, %v4626, %v4149
      %v4660 = vsel %vm4652, %v4627, %v4151
      %v4661 = vsel %vm4652, %v4628, %v4153
      %v4662 = vsel %vm4652, %v4629, %v4155
      %v4663 = vsel %vm4652, %v4630, %v4157
      %v4664 = vsel %vm4652, %v4631, %v4159
      %v4665 = vsel %vm4652, %v4632, %v4161
      %v4666 = vsel %vm4652, %v4633, %v4163
      %v4667 = vsel %vm4652, %v4634, %v4165
      %v4668 = vsel %vm4652, %v4635, %v4167
      %v4669 = vsel %vm4652, %v4636, %v4169
      %v4670 = vsel %vm4652, %v4637, %v4171
      %v4671 = vsel %vm4652, %v4638, %v4173
      %v4672 = vsel %vm4652, %v4639, %v4175
      %v4673 = vsel %vm4652, %v4640, %v4177
      %v4674 = vsel %vm4652, %v4641, %v4179
      %v4675 = vsel %vm4652, %v4642, %v4181
      %v4676 = vsel %vm4652, %v4643, %v4183
      %v4677 = vsel %vm4652, %v4644, %v4185
      %v4678 = vsel %vm4652, %v4645, %v4187
      %v4679 = vsel %vm4652, %v4646, %v4189
      %v4680 = vsel %vm4652, %v4647, %v4191
      %v4681 = vsel %vm4652, %v4648, %v4193
      %v4682 = vsel %vm4652, %v4649, %v4195
      %v4683 = vsel %vm4652, %v4650, %v4197
      %v4684 = vsel %vm4652, %v4651, %v4199
      %vm4685 = vcmask 228352
      %v4686 = vsel %vm4685, %v4653, %v4265
      %v4687 = vsel %vm4685, %v4654, %v4267
      %v4688 = vsel %vm4685, %v4655, %v4269
      %v4689 = vsel %vm4685, %v4656, %v4271
      %v4690 = vsel %vm4685, %v4657, %v4273
      %v4691 = vsel %vm4685, %v4658, %v4275
      %v4692 = vsel %vm4685, %v4659, %v4277
      %v4693 = vsel %vm4685, %v4660, %v4279
      %v4694 = vsel %vm4685, %v4661, %v4281
      %v4695 = vsel %vm4685, %v4662, %v4283
      %v4696 = vsel %vm4685, %v4663, %v4285
      %v4697 = vsel %vm4685, %v4664, %v4287
      %v4698 = vsel %vm4685, %v4665, %v4289
      %v4699 = vsel %vm4685, %v4666, %v4291
      %v4700 = vsel %vm4685, %v4667, %v4293
      %v4701 = vsel %vm4685, %v4668, %v4295
      %v4702 = vsel %vm4685, %v4669, %v4297
      %v4703 = vsel %vm4685, %v4670, %v4299
      %v4704 = vsel %vm4685, %v4671, %v4301
      %v4705 = vsel %vm4685, %v4672, %v4303
      %v4706 = vsel %vm4685, %v4673, %v4305
      %v4707 = vsel %vm4685, %v4674, %v4307
      %v4708 = vsel %vm4685, %v4675, %v4309
      %v4709 = vsel %vm4685, %v4676, %v4311
      %v4710 = vsel %vm4685, %v4677, %v4313
      %v4711 = vsel %vm4685, %v4678, %v4315
      %v4712 = vsel %vm4685, %v4679, %v4317
      %v4713 = vsel %vm4685, %v4680, %v4319
      %v4714 = vsel %vm4685, %v4681, %v4321
      %v4715 = vsel %vm4685, %v4682, %v4323
      %v4716 = vsel %vm4685, %v4683, %v4325
      %v4717 = vsel %vm4685, %v4684, %v4327
      %vm4718 = vcmask 261120
      %v4719 = vsel %vm4718, %v4686, %v4393
      %v4720 = vsel %vm4718, %v4687, %v4395
      %v4721 = vsel %vm4718, %v4688, %v4397
      %v4722 = vsel %vm4718, %v4689, %v4399
      %v4723 = vsel %vm4718, %v4690, %v4401
      %v4724 = vsel %vm4718, %v4691, %v4403
      %v4725 = vsel %vm4718, %v4692, %v4405
      %v4726 = vsel %vm4718, %v4693, %v4407
      %v4727 = vsel %vm4718, %v4694, %v4409
      %v4728 = vsel %vm4718, %v4695, %v4411
      %v4729 = vsel %vm4718, %v4696, %v4413
      %v4730 = vsel %vm4718, %v4697, %v4415
      %v4731 = vsel %vm4718, %v4698, %v4417
      %v4732 = vsel %vm4718, %v4699, %v4419
      %v4733 = vsel %vm4718, %v4700, %v4421
      %v4734 = vsel %vm4718, %v4701, %v4423
      %v4735 = vsel %vm4718, %v4702, %v4425
      %v4736 = vsel %vm4718, %v4703, %v4427
      %v4737 = vsel %vm4718, %v4704, %v4429
      %v4738 = vsel %vm4718, %v4705, %v4431
      %v4739 = vsel %vm4718, %v4706, %v4433
      %v4740 = vsel %vm4718, %v4707, %v4435
      %v4741 = vsel %vm4718, %v4708, %v4437
      %v4742 = vsel %vm4718, %v4709, %v4439
      %v4743 = vsel %vm4718, %v4710, %v4441
      %v4744 = vsel %vm4718, %v4711, %v4443
      %v4745 = vsel %vm4718, %v4712, %v4445
      %v4746 = vsel %vm4718, %v4713, %v4447
      %v4747 = vsel %vm4718, %v4714, %v4449
      %v4748 = vsel %vm4718, %v4715, %v4451
      %v4749 = vsel %vm4718, %v4716, %v4453
      %v4750 = vsel %vm4718, %v4717, %v4455
      %v4751 = vpack.c.bf16 %v4720, %v4719
      %v4752 = vpack.c.bf16 %v4722, %v4721
      %v4753 = vpack.c.bf16 %v4724, %v4723
      %v4754 = vpack.c.bf16 %v4726, %v4725
      %v4755 = vpack.c.bf16 %v4728, %v4727
      %v4756 = vpack.c.bf16 %v4730, %v4729
      %v4757 = vpack.c.bf16 %v4732, %v4731
      %v4758 = vpack.c.bf16 %v4734, %v4733
      %v4759 = vpack.c.bf16 %v4736, %v4735
      %v4760 = vpack.c.bf16 %v4738, %v4737
      %v4761 = vpack.c.bf16 %v4740, %v4739
      %v4762 = vpack.c.bf16 %v4742, %v4741
      %v4763 = vpack.c.bf16 %v4744, %v4743
      %v4764 = vpack.c.bf16 %v4746, %v4745
      %v4765 = vpack.c.bf16 %v4748, %v4747
      %v4766 = vpack.c.bf16 %v4750, %v4749
      %v4767 = vld [vmem:[%s7] sm:$0xf]
      %v4768 = vld [vmem:[%s7 + $0x4] sm:$0xf]
      %v4769 = vld [vmem:[%s7 + $0x8] sm:$0xf]
      %v4770 = vld [vmem:[%s7 + $0xc] sm:$0xf]
      %v4771 = vld [vmem:[%s7 + $0x10] sm:$0x3]
      %v4777 = vunpack.c.l.b16 %v4767
      %v4778 = vunpack.c.l.b16 %v4768
      %v4779 = vunpack.c.l.b16 %v4769
      %v4780 = vunpack.c.l.b16 %v4770
      %v4781 = vunpack.c.l.b16 %v4771
      %v4782 = vpack.c.b16 %v4778, %v4777
      %v4783 = vpack.c.b16 %v4780, %v4779
      %v4784 = vpack.c.b16 %v4781, %v4781
      %vm4787 = vcmask 293888
      %v4789 = vsel %vm4787, %v4751, 0
      %v4792 = vsel %vm4787, %v4752, 0
      %v4795 = vsel %vm4787, %v4753, 0
      %v4798 = vsel %vm4787, %v4754, 0
      %v4801 = vsel %vm4787, %v4755, 0
      %v4804 = vsel %vm4787, %v4756, 0
      %v4807 = vsel %vm4787, %v4757, 0
      %v4810 = vsel %vm4787, %v4758, 0
      %v4813 = vsel %vm4787, %v4759, 0
      %v4816 = vsel %vm4787, %v4760, 0
      %v4819 = vsel %vm4787, %v4761, 0
      %v4822 = vsel %vm4787, %v4762, 0
      %v4825 = vsel %vm4787, %v4763, 0
      %v4828 = vsel %vm4787, %v4764, 0
      %v4831 = vsel %vm4787, %v4765, 0
      %v4834 = vsel %vm4787, %v4766, 0
      %vm4836 = vcmask 1041408
      %v4838 = vsel %vm4836, %v4784, 0
      %4840 = vmatprep.subr.bf16.mxu0 0
      %4841 = vmatpush1.bf16.msra.mxu0 %v4782
      %4842 = vmatprep.subr.bf16.mxu0 0
      %4843 = vmatpush1.bf16.msra.mxu0 %v4783
      %4844 = vmatprep.subr.bf16.mxu0 0
      %4845 = vmatpush1.bf16.msra.mxu0 %v4838
      %4846 = vmatprep.subr.bf16.mxu0 0
      %4847 = vmatpush1.bf16.msra.mxu0 0
      %4848 = vmatprep.subr.bf16.mxu0 0
      %4849 = vmatpush1.bf16.msra.mxu0 0
      %4850 = vmatprep.subr.bf16.mxu0 0
      %4851 = vmatpush1.bf16.msra.mxu0 0
      %4852 = vmatprep.subr.bf16.mxu0 0
      %4853 = vmatpush1.bf16.msra.mxu0 0
      %4854 = vmatprep.subr.bf16.mxu0 0
      %4855 = vmatpush1.bf16.msra.mxu0 0
      %4856 = vmatprep.subr.bf16.mxu0 0
      %4857 = vmatpush1.bf16.msra.mxu0 0
      %4858 = vmatprep.subr.bf16.mxu0 0
      %4859 = vmatpush1.bf16.msra.mxu0 0
      %4860 = vmatprep.subr.bf16.mxu0 0
      %4861 = vmatpush1.bf16.msra.mxu0 0
      %4862 = vmatprep.subr.bf16.mxu0 0
      %4863 = vmatpush1.bf16.msra.mxu0 0
      %4864 = vmatprep.subr.bf16.mxu0 0
      %4865 = vmatpush1.bf16.msra.mxu0 0
      %4866 = vmatprep.subr.bf16.mxu0 0
      %4867 = vmatpush1.bf16.msra.mxu0 0
      %4868 = vmatprep.subr.bf16.mxu0 0
      %4869 = vmatpush1.bf16.msra.mxu0 0
      %4870 = vmatprep.subr.bf16.mxu0 0
      %4871 = vmatpush1.bf16.msra.mxu0 0
      %4872 = vmatprep.mubr.bf16.mxu0 0
      %4873 = vmatmul.mubr.bf16.gmra.mrb[0].mxu0 %v4789
      %v4874 = vpop.f32.mrb[0].mxu0
      %v4875 = vadd.f32 0.0, %v4874
      %v4876 = vpop.f32.mrb[0].mxu0
      %v4877 = vpop.f32.mrb[0].mxu0
      %v4878 = vadd.f32 0.0, %v4877
      %v4879 = vpop.f32.mrb[0].mxu0
      %4880 = vmatprep.mubr.bf16.mxu0 0
      %4881 = vmatmul.mubr.bf16.gmra.mrb[0].mxu0 %v4792
      %v4882 = vpop.f32.mrb[0].mxu0
      %v4883 = vadd.f32 0.0, %v4882
      %v4884 = vpop.f32.mrb[0].mxu0
      %v4885 = vpop.f32.mrb[0].mxu0
      %v4886 = vadd.f32 0.0, %v4885
      %v4887 = vpop.f32.mrb[0].mxu0
      %4888 = vmatprep.mubr.bf16.mxu0 0
      %4889 = vmatmul.mubr.bf16.gmra.mrb[0].mxu0 %v4795
      %v4890 = vpop.f32.mrb[0].mxu0
      %v4891 = vadd.f32 0.0, %v4890
      %v4892 = vpop.f32.mrb[0].mxu0
      %v4893 = vpop.f32.mrb[0].mxu0
      %v4894 = vadd.f32 0.0, %v4893
      %v4895 = vpop.f32.mrb[0].mxu0
      %4896 = vmatprep.mubr.bf16.mxu0 0
      %4897 = vmatmul.mubr.bf16.gmra.mrb[0].mxu0 %v4798
      %v4898 = vpop.f32.mrb[0].mxu0
      %v4899 = vadd.f32 0.0, %v4898
      %v4900 = vpop.f32.mrb[0].mxu0
      %v4901 = vpop.f32.mrb[0].mxu0
      %v4902 = vadd.f32 0.0, %v4901
      %v4903 = vpop.f32.mrb[0].mxu0
      %4904 = vmatprep.mubr.bf16.mxu0 0
      %4905 = vmatmul.mubr.bf16.gmra.mrb[0].mxu0 %v4801
      %v4906 = vpop.f32.mrb[0].mxu0
      %v4907 = vadd.f32 0.0, %v4906
      %v4908 = vpop.f32.mrb[0].mxu0
      %v4909 = vpop.f32.mrb[0].mxu0
      %v4910 = vadd.f32 0.0, %v4909
      %v4911 = vpop.f32.mrb[0].mxu0
      %4912 = vmatprep.mubr.bf16.mxu0 0
      %4913 = vmatmul.mubr.bf16.gmra.mrb[0].mxu0 %v4804
      %v4914 = vpop.f32.mrb[0].mxu0
      %v4915 = vadd.f32 0.0, %v4914
      %v4916 = vpop.f32.mrb[0].mxu0
      %v4917 = vpop.f32.mrb[0].mxu0
      %v4918 = vadd.f32 0.0, %v4917
      %v4919 = vpop.f32.mrb[0].mxu0
      %4920 = vmatprep.mubr.bf16.mxu0 0
      %4921 = vmatmul.mubr.bf16.gmra.mrb[0].mxu0 %v4807
      %v4922 = vpop.f32.mrb[0].mxu0
      %v4923 = vadd.f32 0.0, %v4922
      %v4924 = vpop.f32.mrb[0].mxu0
      %v4925 = vpop.f32.mrb[0].mxu0
      %v4926 = vadd.f32 0.0, %v4925
      %v4927 = vpop.f32.mrb[0].mxu0
      %4928 = vmatprep.mubr.bf16.mxu0 0
      %4929 = vmatmul.mubr.bf16.gmra.mrb[0].mxu0 %v4810
      %v4930 = vpop.f32.mrb[0].mxu0
      %v4931 = vadd.f32 0.0, %v4930
      %v4932 = vpop.f32.mrb[0].mxu0
      %v4933 = vpop.f32.mrb[0].mxu0
      %v4934 = vadd.f32 0.0, %v4933
      %v4935 = vpop.f32.mrb[0].mxu0
      %4936 = vmatprep.mubr.bf16.mxu0 0
      %4937 = vmatmul.mubr.bf16.gmra.mrb[0].mxu0 %v4813
      %v4938 = vpop.f32.mrb[0].mxu0
      %v4939 = vadd.f32 0.0, %v4938
      %v4940 = vpop.f32.mrb[0].mxu0
      %v4941 = vpop.f32.mrb[0].mxu0
      %v4942 = vadd.f32 0.0, %v4941
      %v4943 = vpop.f32.mrb[0].mxu0
      %4944 = vmatprep.mubr.bf16.mxu0 0
      %4945 = vmatmul.mubr.bf16.gmra.mrb[0].mxu0 %v4816
      %v4946 = vpop.f32.mrb[0].mxu0
      %v4947 = vadd.f32 0.0, %v4946
      %v4948 = vpop.f32.mrb[0].mxu0
      %v4949 = vpop.f32.mrb[0].mxu0
      %v4950 = vadd.f32 0.0, %v4949
      %v4951 = vpop.f32.mrb[0].mxu0
      %4952 = vmatprep.mubr.bf16.mxu0 0
      %4953 = vmatmul.mubr.bf16.gmra.mrb[0].mxu0 %v4819
      %v4954 = vpop.f32.mrb[0].mxu0
      %v4955 = vadd.f32 0.0, %v4954
      %v4956 = vpop.f32.mrb[0].mxu0
      %v4957 = vpop.f32.mrb[0].mxu0
      %v4958 = vadd.f32 0.0, %v4957
      %v4959 = vpop.f32.mrb[0].mxu0
      %4960 = vmatprep.mubr.bf16.mxu0 0
      %4961 = vmatmul.mubr.bf16.gmra.mrb[0].mxu0 %v4822
      %v4962 = vpop.f32.mrb[0].mxu0
      %v4963 = vadd.f32 0.0, %v4962
      %v4964 = vpop.f32.mrb[0].mxu0
      %v4965 = vpop.f32.mrb[0].mxu0
      %v4966 = vadd.f32 0.0, %v4965
      %v4967 = vpop.f32.mrb[0].mxu0
      %4968 = vmatprep.mubr.bf16.mxu0 0
      %4969 = vmatmul.mubr.bf16.gmra.mrb[0].mxu0 %v4825
      %v4970 = vpop.f32.mrb[0].mxu0
      %v4971 = vadd.f32 0.0, %v4970
      %v4972 = vpop.f32.mrb[0].mxu0
      %v4973 = vpop.f32.mrb[0].mxu0
      %v4974 = vadd.f32 0.0, %v4973
      %v4975 = vpop.f32.mrb[0].mxu0
      %4976 = vmatprep.mubr.bf16.mxu0 0
      %4977 = vmatmul.mubr.bf16.gmra.mrb[0].mxu0 %v4828
      %v4978 = vpop.f32.mrb[0].mxu0
      %v4979 = vadd.f32 0.0, %v4978
      %v4980 = vpop.f32.mrb[0].mxu0
      %v4981 = vpop.f32.mrb[0].mxu0
      %v4982 = vadd.f32 0.0, %v4981
      %v4983 = vpop.f32.mrb[0].mxu0
      %4984 = vmatprep.mubr.bf16.mxu0 0
      %4985 = vmatmul.mubr.bf16.gmra.mrb[0].mxu0 %v4831
      %v4986 = vpop.f32.mrb[0].mxu0
      %v4987 = vadd.f32 0.0, %v4986
      %v4988 = vpop.f32.mrb[0].mxu0
      %v4989 = vpop.f32.mrb[0].mxu0
      %v4990 = vadd.f32 0.0, %v4989
      %v4991 = vpop.f32.mrb[0].mxu0
      %4992 = vmatprep.mubr.bf16.mxu0 0
      %4993 = vmatmul.mubr.bf16.gmra.mrb[0].mxu0 %v4834
      %v4994 = vpop.f32.mrb[0].mxu0
      %v4995 = vadd.f32 0.0, %v4994
      %v4996 = vpop.f32.mrb[0].mxu0
      %v4997 = vpop.f32.mrb[0].mxu0
      %v4998 = vadd.f32 0.0, %v4997
      %v4999 = vpop.f32.mrb[0].mxu0
      %5000 = vdwg.mxu0
      %v5001 = vld [vmem:[%s8] sm:$0x1]
      %v5002 = vlaneseq
      %v5003 = vshrl.u32 %v5002, 7
      %v5004 = vsub.s32 0, %v5003
      %v5005 = vrot.slane %v5001, %v5004
      %v5006 = vmul.f32 %v4875, %v5005
      %v5007 = vmul.f32 %v4878, %v5005
      %v5008 = vmul.f32 %v4883, %v5005
      %v5009 = vmul.f32 %v4886, %v5005
      %v5010 = vmul.f32 %v4891, %v5005
      %v5011 = vmul.f32 %v4894, %v5005
      %v5012 = vmul.f32 %v4899, %v5005
      %v5013 = vmul.f32 %v4902, %v5005
      %v5014 = vmul.f32 %v4907, %v5005
      %v5015 = vmul.f32 %v4910, %v5005
      %v5016 = vmul.f32 %v4915, %v5005
      %v5017 = vmul.f32 %v4918, %v5005
      %v5018 = vmul.f32 %v4923, %v5005
      %v5019 = vmul.f32 %v4926, %v5005
      %v5020 = vmul.f32 %v4931, %v5005
      %v5021 = vmul.f32 %v4934, %v5005
      %v5022 = vmul.f32 %v4939, %v5005
      %v5023 = vmul.f32 %v4942, %v5005
      %v5024 = vmul.f32 %v4947, %v5005
      %v5025 = vmul.f32 %v4950, %v5005
      %v5026 = vmul.f32 %v4955, %v5005
      %v5027 = vmul.f32 %v4958, %v5005
      %v5028 = vmul.f32 %v4963, %v5005
      %v5029 = vmul.f32 %v4966, %v5005
      %v5030 = vmul.f32 %v4971, %v5005
      %v5031 = vmul.f32 %v4974, %v5005
      %v5032 = vmul.f32 %v4979, %v5005
      %v5033 = vmul.f32 %v4982, %v5005
      %v5034 = vmul.f32 %v4987, %v5005
      %v5035 = vmul.f32 %v4990, %v5005
      %v5036 = vmul.f32 %v4995, %v5005
      %v5037 = vmul.f32 %v4998, %v5005
      %v5038 = vld [vmem:[%s8 + $0x1] sm:$0x1]
      %v5039 = vlaneseq
      %v5040 = vshrl.u32 %v5039, 7
      %v5041 = vsub.s32 0, %v5040
      %v5042 = vrot.slane %v5038, %v5041
      %v5043 = vadd.f32 %v5006, %v5042
      %v5044 = vadd.f32 %v5007, %v5042
      %v5045 = vadd.f32 %v5008, %v5042
      %v5046 = vadd.f32 %v5009, %v5042
      %v5047 = vadd.f32 %v5010, %v5042
      %v5048 = vadd.f32 %v5011, %v5042
      %v5049 = vadd.f32 %v5012, %v5042
      %v5050 = vadd.f32 %v5013, %v5042
      %v5051 = vadd.f32 %v5014, %v5042
      %v5052 = vadd.f32 %v5015, %v5042
      %v5053 = vadd.f32 %v5016, %v5042
      %v5054 = vadd.f32 %v5017, %v5042
      %v5055 = vadd.f32 %v5018, %v5042
      %v5056 = vadd.f32 %v5019, %v5042
      %v5057 = vadd.f32 %v5020, %v5042
      %v5058 = vadd.f32 %v5021, %v5042
      %v5059 = vadd.f32 %v5022, %v5042
      %v5060 = vadd.f32 %v5023, %v5042
      %v5061 = vadd.f32 %v5024, %v5042
      %v5062 = vadd.f32 %v5025, %v5042
      %v5063 = vadd.f32 %v5026, %v5042
      %v5064 = vadd.f32 %v5027, %v5042
      %v5065 = vadd.f32 %v5028, %v5042
      %v5066 = vadd.f32 %v5029, %v5042
      %v5067 = vadd.f32 %v5030, %v5042
      %v5068 = vadd.f32 %v5031, %v5042
      %v5069 = vadd.f32 %v5032, %v5042
      %v5070 = vadd.f32 %v5033, %v5042
      %v5071 = vadd.f32 %v5034, %v5042
      %v5072 = vadd.f32 %v5035, %v5042
      %v5073 = vadd.f32 %v5036, %v5042
      %v5074 = vadd.f32 %v5037, %v5042
      %v5075 = vsub.f32 0.0, %v5043
      %v5076 = vsub.f32 0.0, %v5044
      %v5077 = vsub.f32 0.0, %v5045
      %v5078 = vsub.f32 0.0, %v5046
      %v5079 = vsub.f32 0.0, %v5047
      %v5080 = vsub.f32 0.0, %v5048
      %v5081 = vsub.f32 0.0, %v5049
      %v5082 = vsub.f32 0.0, %v5050
      %v5083 = vsub.f32 0.0, %v5051
      %v5084 = vsub.f32 0.0, %v5052
      %v5085 = vsub.f32 0.0, %v5053
      %v5086 = vsub.f32 0.0, %v5054
      %v5087 = vsub.f32 0.0, %v5055
      %v5088 = vsub.f32 0.0, %v5056
      %v5089 = vsub.f32 0.0, %v5057
      %v5090 = vsub.f32 0.0, %v5058
      %v5091 = vsub.f32 0.0, %v5059
      %v5092 = vsub.f32 0.0, %v5060
      %v5093 = vsub.f32 0.0, %v5061
      %v5094 = vsub.f32 0.0, %v5062
      %v5095 = vsub.f32 0.0, %v5063
      %v5096 = vsub.f32 0.0, %v5064
      %v5097 = vsub.f32 0.0, %v5065
      %v5098 = vsub.f32 0.0, %v5066
      %v5099 = vsub.f32 0.0, %v5067
      %v5100 = vsub.f32 0.0, %v5068
      %v5101 = vsub.f32 0.0, %v5069
      %v5102 = vsub.f32 0.0, %v5070
      %v5103 = vsub.f32 0.0, %v5071
      %v5104 = vsub.f32 0.0, %v5072
      %v5105 = vsub.f32 0.0, %v5073
      %v5106 = vsub.f32 0.0, %v5074
      %v5107 = vmul.f32 %v5075, 1.442695
      %v5108 = vpow.pop %v5107
      %v5109 = vmul.f32 %v5076, 1.442695
      %v5110 = vpow.pop %v5109
      %v5111 = vmul.f32 %v5077, 1.442695
      %v5112 = vpow.pop %v5111
      %v5113 = vmul.f32 %v5078, 1.442695
      %v5114 = vpow.pop %v5113
      %v5115 = vmul.f32 %v5079, 1.442695
      %v5116 = vpow.pop %v5115
      %v5117 = vmul.f32 %v5080, 1.442695
      %v5118 = vpow.pop %v5117
      %v5119 = vmul.f32 %v5081, 1.442695
      %v5120 = vpow.pop %v5119
      %v5121 = vmul.f32 %v5082, 1.442695
      %v5122 = vpow.pop %v5121
      %v5123 = vmul.f32 %v5083, 1.442695
      %v5124 = vpow.pop %v5123
      %v5125 = vmul.f32 %v5084, 1.442695
      %v5126 = vpow.pop %v5125
      %v5127 = vmul.f32 %v5085, 1.442695
      %v5128 = vpow.pop %v5127
      %v5129 = vmul.f32 %v5086, 1.442695
      %v5130 = vpow.pop %v5129
      %v5131 = vmul.f32 %v5087, 1.442695
      %v5132 = vpow.pop %v5131
      %v5133 = vmul.f32 %v5088, 1.442695
      %v5134 = vpow.pop %v5133
      %v5135 = vmul.f32 %v5089, 1.442695
      %v5136 = vpow.pop %v5135
      %v5137 = vmul.f32 %v5090, 1.442695
      %v5138 = vpow.pop %v5137
      %v5139 = vmul.f32 %v5091, 1.442695
      %v5140 = vpow.pop %v5139
      %v5141 = vmul.f32 %v5092, 1.442695
      %v5142 = vpow.pop %v5141
      %v5143 = vmul.f32 %v5093, 1.442695
      %v5144 = vpow.pop %v5143
      %v5145 = vmul.f32 %v5094, 1.442695
      %v5146 = vpow.pop %v5145
      %v5147 = vmul.f32 %v5095, 1.442695
      %v5148 = vpow.pop %v5147
      %v5149 = vmul.f32 %v5096, 1.442695
      %v5150 = vpow.pop %v5149
      %v5151 = vmul.f32 %v5097, 1.442695
      %v5152 = vpow.pop %v5151
      %v5153 = vmul.f32 %v5098, 1.442695
      %v5154 = vpow.pop %v5153
      %v5155 = vmul.f32 %v5099, 1.442695
      %v5156 = vpow.pop %v5155
      %v5157 = vmul.f32 %v5100, 1.442695
      %v5158 = vpow.pop %v5157
      %v5159 = vmul.f32 %v5101, 1.442695
      %v5160 = vpow.pop %v5159
      %v5161 = vmul.f32 %v5102, 1.442695
      %v5162 = vpow.pop %v5161
      %v5163 = vmul.f32 %v5103, 1.442695
      %v5164 = vpow.pop %v5163
      %v5165 = vmul.f32 %v5104, 1.442695
      %v5166 = vpow.pop %v5165
      %v5167 = vmul.f32 %v5105, 1.442695
      %v5168 = vpow.pop %v5167
      %v5169 = vmul.f32 %v5106, 1.442695
      %v5170 = vpow.pop %v5169
      %v5171 = vadd.f32 %v5108, 1.0
      %v5172 = vadd.f32 %v5110, 1.0
      %v5173 = vadd.f32 %v5112, 1.0
      %v5174 = vadd.f32 %v5114, 1.0
      %v5175 = vadd.f32 %v5116, 1.0
      %v5176 = vadd.f32 %v5118, 1.0
      %v5177 = vadd.f32 %v5120, 1.0
      %v5178 = vadd.f32 %v5122, 1.0
      %v5179 = vadd.f32 %v5124, 1.0
      %v5180 = vadd.f32 %v5126, 1.0
      %v5181 = vadd.f32 %v5128, 1.0
      %v5182 = vadd.f32 %v5130, 1.0
      %v5183 = vadd.f32 %v5132, 1.0
      %v5184 = vadd.f32 %v5134, 1.0
      %v5185 = vadd.f32 %v5136, 1.0
      %v5186 = vadd.f32 %v5138, 1.0
      %v5187 = vadd.f32 %v5140, 1.0
      %v5188 = vadd.f32 %v5142, 1.0
      %v5189 = vadd.f32 %v5144, 1.0
      %v5190 = vadd.f32 %v5146, 1.0
      %v5191 = vadd.f32 %v5148, 1.0
      %v5192 = vadd.f32 %v5150, 1.0
      %v5193 = vadd.f32 %v5152, 1.0
      %v5194 = vadd.f32 %v5154, 1.0
      %v5195 = vadd.f32 %v5156, 1.0
      %v5196 = vadd.f32 %v5158, 1.0
      %v5197 = vadd.f32 %v5160, 1.0
      %v5198 = vadd.f32 %v5162, 1.0
      %v5199 = vadd.f32 %v5164, 1.0
      %v5200 = vadd.f32 %v5166, 1.0
      %v5201 = vadd.f32 %v5168, 1.0
      %v5202 = vadd.f32 %v5170, 1.0
      %v5203 = vrcp.pop %v5171
      %v5204 = vrcp.pop %v5172
      %v5205 = vrcp.pop %v5173
      %v5206 = vrcp.pop %v5174
      %v5207 = vrcp.pop %v5175
      %v5208 = vrcp.pop %v5176
      %v5209 = vrcp.pop %v5177
      %v5210 = vrcp.pop %v5178
      %v5211 = vrcp.pop %v5179
      %v5212 = vrcp.pop %v5180
      %v5213 = vrcp.pop %v5181
      %v5214 = vrcp.pop %v5182
      %v5215 = vrcp.pop %v5183
      %v5216 = vrcp.pop %v5184
      %v5217 = vrcp.pop %v5185
      %v5218 = vrcp.pop %v5186
      %v5219 = vrcp.pop %v5187
      %v5220 = vrcp.pop %v5188
      %v5221 = vrcp.pop %v5189
      %v5222 = vrcp.pop %v5190
      %v5223 = vrcp.pop %v5191
      %v5224 = vrcp.pop %v5192
      %v5225 = vrcp.pop %v5193
      %v5226 = vrcp.pop %v5194
      %v5227 = vrcp.pop %v5195
      %v5228 = vrcp.pop %v5196
      %v5229 = vrcp.pop %v5197
      %v5230 = vrcp.pop %v5198
      %v5231 = vrcp.pop %v5199
      %v5232 = vrcp.pop %v5200
      %v5233 = vrcp.pop %v5201
      %v5234 = vrcp.pop %v5202
      %v5235 = vmul.f32 %v5043, %v5203
      %v5236 = vmul.f32 %v5044, %v5204
      %v5237 = vmul.f32 %v5045, %v5205
      %v5238 = vmul.f32 %v5046, %v5206
      %v5239 = vmul.f32 %v5047, %v5207
      %v5240 = vmul.f32 %v5048, %v5208
      %v5241 = vmul.f32 %v5049, %v5209
      %v5242 = vmul.f32 %v5050, %v5210
      %v5243 = vmul.f32 %v5051, %v5211
      %v5244 = vmul.f32 %v5052, %v5212
      %v5245 = vmul.f32 %v5053, %v5213
      %v5246 = vmul.f32 %v5054, %v5214
      %v5247 = vmul.f32 %v5055, %v5215
      %v5248 = vmul.f32 %v5056, %v5216
      %v5249 = vmul.f32 %v5057, %v5217
      %v5250 = vmul.f32 %v5058, %v5218
      %v5251 = vmul.f32 %v5059, %v5219
      %v5252 = vmul.f32 %v5060, %v5220
      %v5253 = vmul.f32 %v5061, %v5221
      %v5254 = vmul.f32 %v5062, %v5222
      %v5255 = vmul.f32 %v5063, %v5223
      %v5256 = vmul.f32 %v5064, %v5224
      %v5257 = vmul.f32 %v5065, %v5225
      %v5258 = vmul.f32 %v5066, %v5226
      %v5259 = vmul.f32 %v5067, %v5227
      %v5260 = vmul.f32 %v5068, %v5228
      %v5261 = vmul.f32 %v5069, %v5229
      %v5262 = vmul.f32 %v5070, %v5230
      %v5263 = vmul.f32 %v5071, %v5231
      %v5264 = vmul.f32 %v5072, %v5232
      %v5265 = vmul.f32 %v5073, %v5233
      %v5266 = vmul.f32 %v5074, %v5234
      %5299 = vrot.lane.b32.xlu0 %v5235, 8
      %v5300 = vpop.permute.xlu0 %5299
      %5301 = vrot.lane.b32.xlu0 %v5236, 8
      %v5302 = vpop.permute.xlu0 %5301
      %5303 = vrot.lane.b32.xlu0 %v5237, 8
      %v5304 = vpop.permute.xlu0 %5303
      %5305 = vrot.lane.b32.xlu0 %v5238, 8
      %v5306 = vpop.permute.xlu0 %5305
      %5307 = vrot.lane.b32.xlu0 %v5239, 8
      %v5308 = vpop.permute.xlu0 %5307
      %5309 = vrot.lane.b32.xlu0 %v5240, 8
      %v5310 = vpop.permute.xlu0 %5309
      %5311 = vrot.lane.b32.xlu0 %v5241, 8
      %v5312 = vpop.permute.xlu0 %5311
      %5313 = vrot.lane.b32.xlu0 %v5242, 8
      %v5314 = vpop.permute.xlu0 %5313
      %5315 = vrot.lane.b32.xlu0 %v5243, 8
      %v5316 = vpop.permute.xlu0 %5315
      %5317 = vrot.lane.b32.xlu0 %v5244, 8
      %v5318 = vpop.permute.xlu0 %5317
      %5319 = vrot.lane.b32.xlu0 %v5245, 8
      %v5320 = vpop.permute.xlu0 %5319
      %5321 = vrot.lane.b32.xlu0 %v5246, 8
      %v5322 = vpop.permute.xlu0 %5321
      %5323 = vrot.lane.b32.xlu0 %v5247, 8
      %v5324 = vpop.permute.xlu0 %5323
      %5325 = vrot.lane.b32.xlu0 %v5248, 8
      %v5326 = vpop.permute.xlu0 %5325
      %5327 = vrot.lane.b32.xlu0 %v5249, 8
      %v5328 = vpop.permute.xlu0 %5327
      %5329 = vrot.lane.b32.xlu0 %v5250, 8
      %v5330 = vpop.permute.xlu0 %5329
      %5331 = vrot.lane.b32.xlu0 %v5251, 8
      %v5332 = vpop.permute.xlu0 %5331
      %5333 = vrot.lane.b32.xlu0 %v5252, 8
      %v5334 = vpop.permute.xlu0 %5333
      %5335 = vrot.lane.b32.xlu0 %v5253, 8
      %v5336 = vpop.permute.xlu0 %5335
      %5337 = vrot.lane.b32.xlu0 %v5254, 8
      %v5338 = vpop.permute.xlu0 %5337
      %5339 = vrot.lane.b32.xlu0 %v5255, 8
      %v5340 = vpop.permute.xlu0 %5339
      %5341 = vrot.lane.b32.xlu0 %v5256, 8
      %v5342 = vpop.permute.xlu0 %5341
      %5343 = vrot.lane.b32.xlu0 %v5257, 8
      %v5344 = vpop.permute.xlu0 %5343
      %5345 = vrot.lane.b32.xlu0 %v5258, 8
      %v5346 = vpop.permute.xlu0 %5345
      %5347 = vrot.lane.b32.xlu0 %v5259, 8
      %v5348 = vpop.permute.xlu0 %5347
      %5349 = vrot.lane.b32.xlu0 %v5260, 8
      %v5350 = vpop.permute.xlu0 %5349
      %5351 = vrot.lane.b32.xlu0 %v5261, 8
      %v5352 = vpop.permute.xlu0 %5351
      %5353 = vrot.lane.b32.xlu0 %v5262, 8
      %v5354 = vpop.permute.xlu0 %5353
      %5355 = vrot.lane.b32.xlu0 %v5263, 8
      %v5356 = vpop.permute.xlu0 %5355
      %5357 = vrot.lane.b32.xlu0 %v5264, 8
      %v5358 = vpop.permute.xlu0 %5357
      %5359 = vrot.lane.b32.xlu0 %v5265, 8
      %v5360 = vpop.permute.xlu0 %5359
      %5361 = vrot.lane.b32.xlu0 %v5266, 8
      %v5362 = vpop.permute.xlu0 %5361
      %v5395 = vsel %vm565, %v1013, %v5300
      %v5396 = vsel %vm565, %v1014, %v5302
      %v5397 = vsel %vm565, %v1015, %v5304
      %v5398 = vsel %vm565, %v1016, %v5306
      %v5399 = vsel %vm565, %v1017, %v5308
      %v5400 = vsel %vm565, %v1018, %v5310
      %v5401 = vsel %vm565, %v1019, %v5312
      %v5402 = vsel %vm565, %v1020, %v5314
      %v5403 = vsel %vm565, %v1021, %v5316
      %v5404 = vsel %vm565, %v1022, %v5318
      %v5405 = vsel %vm565, %v1023, %v5320
      %v5406 = vsel %vm565, %v1024, %v5322
      %v5407 = vsel %vm565, %v1025, %v5324
      %v5408 = vsel %vm565, %v1026, %v5326
      %v5409 = vsel %vm565, %v1027, %v5328
      %v5410 = vsel %vm565, %v1028, %v5330
      %v5411 = vsel %vm565, %v1029, %v5332
      %v5412 = vsel %vm565, %v1030, %v5334
      %v5413 = vsel %vm565, %v1031, %v5336
      %v5414 = vsel %vm565, %v1032, %v5338
      %v5415 = vsel %vm565, %v1033, %v5340
      %v5416 = vsel %vm565, %v1034, %v5342
      %v5417 = vsel %vm565, %v1035, %v5344
      %v5418 = vsel %vm565, %v1036, %v5346
      %v5419 = vsel %vm565, %v1037, %v5348
      %v5420 = vsel %vm565, %v1038, %v5350
      %v5421 = vsel %vm565, %v1039, %v5352
      %v5422 = vsel %vm565, %v1040, %v5354
      %v5423 = vsel %vm565, %v1041, %v5356
      %v5424 = vsel %vm565, %v1042, %v5358
      %v5425 = vsel %vm565, %v1043, %v5360
      %v5426 = vsel %vm565, %v1044, %v5362
      %v5427 = vpack.c.bf16 %v5396, %v5395
      %v5428 = vpack.c.bf16 %v5398, %v5397
      %v5429 = vpack.c.bf16 %v5400, %v5399
      %v5430 = vpack.c.bf16 %v5402, %v5401
      %v5431 = vpack.c.bf16 %v5404, %v5403
      %v5432 = vpack.c.bf16 %v5406, %v5405
      %v5433 = vpack.c.bf16 %v5408, %v5407
      %v5434 = vpack.c.bf16 %v5410, %v5409
      %v5435 = vpack.c.bf16 %v5412, %v5411
      %v5436 = vpack.c.bf16 %v5414, %v5413
      %v5437 = vpack.c.bf16 %v5416, %v5415
      %v5438 = vpack.c.bf16 %v5418, %v5417
      %v5439 = vpack.c.bf16 %v5420, %v5419
      %v5440 = vpack.c.bf16 %v5422, %v5421
      %v5441 = vpack.c.bf16 %v5424, %v5423
      %v5442 = vpack.c.bf16 %v5426, %v5425
      %v5443 = vld [vmem:[%s9] sm:$0xf]
      %v5444 = vld [vmem:[%s9 + $0x4] sm:$0x3]
      %v5447 = vunpack.c.l.b16 %v5443
      %v5448 = vunpack.c.l.b16 %v5444
      %v5449 = vpack.c.b16 %v5448, %v5447
      %v5451 = vsel %vm4553, %v5427, 0
      %v5454 = vsel %vm4553, %v5428, 0
      %v5457 = vsel %vm4553, %v5429, 0
      %v5460 = vsel %vm4553, %v5430, 0
      %v5463 = vsel %vm4553, %v5431, 0
      %v5466 = vsel %vm4553, %v5432, 0
      %v5469 = vsel %vm4553, %v5433, 0
      %v5472 = vsel %vm4553, %v5434, 0
      %v5475 = vsel %vm4553, %v5435, 0
      %v5478 = vsel %vm4553, %v5436, 0
      %v5481 = vsel %vm4553, %v5437, 0
      %v5484 = vsel %vm4553, %v5438, 0
      %v5487 = vsel %vm4553, %v5439, 0
      %v5490 = vsel %vm4553, %v5440, 0
      %v5493 = vsel %vm4553, %v5441, 0
      %v5496 = vsel %vm4553, %v5442, 0
      %vm5498 = vcmask 1045504
      %v5500 = vsel %vm5498, %v5449, 0
      %5502 = vmatprep.subr.bf16.mxu0 0
      %5503 = vmatpush1.bf16.msra.mxu0 %v5500
      %5504 = vmatprep.subr.bf16.mxu0 0
      %5505 = vmatpush1.bf16.msra.mxu0 0
      %5506 = vmatprep.subr.bf16.mxu0 0
      %5507 = vmatpush1.bf16.msra.mxu0 0
      %5508 = vmatprep.subr.bf16.mxu0 0
      %5509 = vmatpush1.bf16.msra.mxu0 0
      %5510 = vmatprep.subr.bf16.mxu0 0
      %5511 = vmatpush1.bf16.msra.mxu0 0
      %5512 = vmatprep.subr.bf16.mxu0 0
      %5513 = vmatpush1.bf16.msra.mxu0 0
      %5514 = vmatprep.subr.bf16.mxu0 0
      %5515 = vmatpush1.bf16.msra.mxu0 0
      %5516 = vmatprep.subr.bf16.mxu0 0
      %5517 = vmatpush1.bf16.msra.mxu0 0
      %5518 = vmatprep.subr.bf16.mxu0 0
      %5519 = vmatpush1.bf16.msra.mxu0 0
      %5520 = vmatprep.subr.bf16.mxu0 0
      %5521 = vmatpush1.bf16.msra.mxu0 0
      %5522 = vmatprep.subr.bf16.mxu0 0
      %5523 = vmatpush1.bf16.msra.mxu0 0
      %5524 = vmatprep.subr.bf16.mxu0 0
      %5525 = vmatpush1.bf16.msra.mxu0 0
      %5526 = vmatprep.subr.bf16.mxu0 0
      %5527 = vmatpush1.bf16.msra.mxu0 0
      %5528 = vmatprep.subr.bf16.mxu0 0
      %5529 = vmatpush1.bf16.msra.mxu0 0
      %5530 = vmatprep.subr.bf16.mxu0 0
      %5531 = vmatpush1.bf16.msra.mxu0 0
      %5532 = vmatprep.subr.bf16.mxu0 0
      %5533 = vmatpush1.bf16.msra.mxu0 0
      %5534 = vmatprep.mubr.bf16.mxu0 0
      %5535 = vmatmul.mubr.bf16.gmra.mrb[0].mxu0 %v5451
      %v5536 = vpop.f32.mrb[0].mxu0
      %v5537 = vadd.f32 0.0, %v5536
      %v5538 = vpop.f32.mrb[0].mxu0
      %v5539 = vpop.f32.mrb[0].mxu0
      %v5540 = vadd.f32 0.0, %v5539
      %v5541 = vpop.f32.mrb[0].mxu0
      %5542 = vmatprep.mubr.bf16.mxu0 0
      %5543 = vmatmul.mubr.bf16.gmra.mrb[0].mxu0 %v5454
      %v5544 = vpop.f32.mrb[0].mxu0
      %v5545 = vadd.f32 0.0, %v5544
      %v5546 = vpop.f32.mrb[0].mxu0
      %v5547 = vpop.f32.mrb[0].mxu0
      %v5548 = vadd.f32 0.0, %v5547
      %v5549 = vpop.f32.mrb[0].mxu0
      %5550 = vmatprep.mubr.bf16.mxu0 0
      %5551 = vmatmul.mubr.bf16.gmra.mrb[0].mxu0 %v5457
      %v5552 = vpop.f32.mrb[0].mxu0
      %v5553 = vadd.f32 0.0, %v5552
      %v5554 = vpop.f32.mrb[0].mxu0
      %v5555 = vpop.f32.mrb[0].mxu0
      %v5556 = vadd.f32 0.0, %v5555
      %v5557 = vpop.f32.mrb[0].mxu0
      %5558 = vmatprep.mubr.bf16.mxu0 0
      %5559 = vmatmul.mubr.bf16.gmra.mrb[0].mxu0 %v5460
      %v5560 = vpop.f32.mrb[0].mxu0
      %v5561 = vadd.f32 0.0, %v5560
      %v5562 = vpop.f32.mrb[0].mxu0
      %v5563 = vpop.f32.mrb[0].mxu0
      %v5564 = vadd.f32 0.0, %v5563
      %v5565 = vpop.f32.mrb[0].mxu0
      %5566 = vmatprep.mubr.bf16.mxu0 0
      %5567 = vmatmul.mubr.bf16.gmra.mrb[0].mxu0 %v5463
      %v5568 = vpop.f32.mrb[0].mxu0
      %v5569 = vadd.f32 0.0, %v5568
      %v5570 = vpop.f32.mrb[0].mxu0
      %v5571 = vpop.f32.mrb[0].mxu0
      %v5572 = vadd.f32 0.0, %v5571
      %v5573 = vpop.f32.mrb[0].mxu0
      %5574 = vmatprep.mubr.bf16.mxu0 0
      %5575 = vmatmul.mubr.bf16.gmra.mrb[0].mxu0 %v5466
      %v5576 = vpop.f32.mrb[0].mxu0
      %v5577 = vadd.f32 0.0, %v5576
      %v5578 = vpop.f32.mrb[0].mxu0
      %v5579 = vpop.f32.mrb[0].mxu0
      %v5580 = vadd.f32 0.0, %v5579
      %v5581 = vpop.f32.mrb[0].mxu0
      %5582 = vmatprep.mubr.bf16.mxu0 0
      %5583 = vmatmul.mubr.bf16.gmra.mrb[0].mxu0 %v5469
      %v5584 = vpop.f32.mrb[0].mxu0
      %v5585 = vadd.f32 0.0, %v5584
      %v5586 = vpop.f32.mrb[0].mxu0
      %v5587 = vpop.f32.mrb[0].mxu0
      %v5588 = vadd.f32 0.0, %v5587
      %v5589 = vpop.f32.mrb[0].mxu0
      %5590 = vmatprep.mubr.bf16.mxu0 0
      %5591 = vmatmul.mubr.bf16.gmra.mrb[0].mxu0 %v5472
      %v5592 = vpop.f32.mrb[0].mxu0
      %v5593 = vadd.f32 0.0, %v5592
      %v5594 = vpop.f32.mrb[0].mxu0
      %v5595 = vpop.f32.mrb[0].mxu0
      %v5596 = vadd.f32 0.0, %v5595
      %v5597 = vpop.f32.mrb[0].mxu0
      %5598 = vmatprep.mubr.bf16.mxu0 0
      %5599 = vmatmul.mubr.bf16.gmra.mrb[0].mxu0 %v5475
      %v5600 = vpop.f32.mrb[0].mxu0
      %v5601 = vadd.f32 0.0, %v5600
      %v5602 = vpop.f32.mrb[0].mxu0
      %v5603 = vpop.f32.mrb[0].mxu0
      %v5604 = vadd.f32 0.0, %v5603
      %v5605 = vpop.f32.mrb[0].mxu0
      %5606 = vmatprep.mubr.bf16.mxu0 0
      %5607 = vmatmul.mubr.bf16.gmra.mrb[0].mxu0 %v5478
      %v5608 = vpop.f32.mrb[0].mxu0
      %v5609 = vadd.f32 0.0, %v5608
      %v5610 = vpop.f32.mrb[0].mxu0
      %v5611 = vpop.f32.mrb[0].mxu0
      %v5612 = vadd.f32 0.0, %v5611
      %v5613 = vpop.f32.mrb[0].mxu0
      %5614 = vmatprep.mubr.bf16.mxu0 0
      %5615 = vmatmul.mubr.bf16.gmra.mrb[0].mxu0 %v5481
      %v5616 = vpop.f32.mrb[0].mxu0
      %v5617 = vadd.f32 0.0, %v5616
      %v5618 = vpop.f32.mrb[0].mxu0
      %v5619 = vpop.f32.mrb[0].mxu0
      %v5620 = vadd.f32 0.0, %v5619
      %v5621 = vpop.f32.mrb[0].mxu0
      %5622 = vmatprep.mubr.bf16.mxu0 0
      %5623 = vmatmul.mubr.bf16.gmra.mrb[0].mxu0 %v5484
      %v5624 = vpop.f32.mrb[0].mxu0
      %v5625 = vadd.f32 0.0, %v5624
      %v5626 = vpop.f32.mrb[0].mxu0
      %v5627 = vpop.f32.mrb[0].mxu0
      %v5628 = vadd.f32 0.0, %v5627
      %v5629 = vpop.f32.mrb[0].mxu0
      %5630 = vmatprep.mubr.bf16.mxu0 0
      %5631 = vmatmul.mubr.bf16.gmra.mrb[0].mxu0 %v5487
      %v5632 = vpop.f32.mrb[0].mxu0
      %v5633 = vadd.f32 0.0, %v5632
      %v5634 = vpop.f32.mrb[0].mxu0
      %v5635 = vpop.f32.mrb[0].mxu0
      %v5636 = vadd.f32 0.0, %v5635
      %v5637 = vpop.f32.mrb[0].mxu0
      %5638 = vmatprep.mubr.bf16.mxu0 0
      %5639 = vmatmul.mubr.bf16.gmra.mrb[0].mxu0 %v5490
      %v5640 = vpop.f32.mrb[0].mxu0
      %v5641 = vadd.f32 0.0, %v5640
      %v5642 = vpop.f32.mrb[0].mxu0
      %v5643 = vpop.f32.mrb[0].mxu0
      %v5644 = vadd.f32 0.0, %v5643
      %v5645 = vpop.f32.mrb[0].mxu0
      %5646 = vmatprep.mubr.bf16.mxu0 0
      %5647 = vmatmul.mubr.bf16.gmra.mrb[0].mxu0 %v5493
      %v5648 = vpop.f32.mrb[0].mxu0
      %v5649 = vadd.f32 0.0, %v5648
      %v5650 = vpop.f32.mrb[0].mxu0
      %v5651 = vpop.f32.mrb[0].mxu0
      %v5652 = vadd.f32 0.0, %v5651
      %v5653 = vpop.f32.mrb[0].mxu0
      %5654 = vmatprep.mubr.bf16.mxu0 0
      %5655 = vmatmul.mubr.bf16.gmra.mrb[0].mxu0 %v5496
      %v5656 = vpop.f32.mrb[0].mxu0
      %v5657 = vadd.f32 0.0, %v5656
      %v5658 = vpop.f32.mrb[0].mxu0
      %v5659 = vpop.f32.mrb[0].mxu0
      %v5660 = vadd.f32 0.0, %v5659
      %v5661 = vpop.f32.mrb[0].mxu0
      %5662 = vdwg.mxu0
      %v5663 = vld [vmem:[%s10] sm:$0x1]
      %v5664 = vlaneseq
      %v5665 = vshrl.u32 %v5664, 7
      %v5666 = vsub.s32 0, %v5665
      %v5667 = vrot.slane %v5663, %v5666
      %v5668 = vmul.f32 %v5537, %v5667
      %v5669 = vmul.f32 %v5540, %v5667
      %v5670 = vmul.f32 %v5545, %v5667
      %v5671 = vmul.f32 %v5548, %v5667
      %v5672 = vmul.f32 %v5553, %v5667
      %v5673 = vmul.f32 %v5556, %v5667
      %v5674 = vmul.f32 %v5561, %v5667
      %v5675 = vmul.f32 %v5564, %v5667
      %v5676 = vmul.f32 %v5569, %v5667
      %v5677 = vmul.f32 %v5572, %v5667
      %v5678 = vmul.f32 %v5577, %v5667
      %v5679 = vmul.f32 %v5580, %v5667
      %v5680 = vmul.f32 %v5585, %v5667
      %v5681 = vmul.f32 %v5588, %v5667
      %v5682 = vmul.f32 %v5593, %v5667
      %v5683 = vmul.f32 %v5596, %v5667
      %v5684 = vmul.f32 %v5601, %v5667
      %v5685 = vmul.f32 %v5604, %v5667
      %v5686 = vmul.f32 %v5609, %v5667
      %v5687 = vmul.f32 %v5612, %v5667
      %v5688 = vmul.f32 %v5617, %v5667
      %v5689 = vmul.f32 %v5620, %v5667
      %v5690 = vmul.f32 %v5625, %v5667
      %v5691 = vmul.f32 %v5628, %v5667
      %v5692 = vmul.f32 %v5633, %v5667
      %v5693 = vmul.f32 %v5636, %v5667
      %v5694 = vmul.f32 %v5641, %v5667
      %v5695 = vmul.f32 %v5644, %v5667
      %v5696 = vmul.f32 %v5649, %v5667
      %v5697 = vmul.f32 %v5652, %v5667
      %v5698 = vmul.f32 %v5657, %v5667
      %v5699 = vmul.f32 %v5660, %v5667
      %v5700 = vld [vmem:[%s10 + $0x1] sm:$0x1]
      %v5701 = vlaneseq
      %v5702 = vshrl.u32 %v5701, 7
      %v5703 = vsub.s32 0, %v5702
      %v5704 = vrot.slane %v5700, %v5703
      %v5705 = vadd.f32 %v5668, %v5704
      %v5706 = vadd.f32 %v5669, %v5704
      %v5707 = vadd.f32 %v5670, %v5704
      %v5708 = vadd.f32 %v5671, %v5704
      %v5709 = vadd.f32 %v5672, %v5704
      %v5710 = vadd.f32 %v5673, %v5704
      %v5711 = vadd.f32 %v5674, %v5704
      %v5712 = vadd.f32 %v5675, %v5704
      %v5713 = vadd.f32 %v5676, %v5704
      %v5714 = vadd.f32 %v5677, %v5704
      %v5715 = vadd.f32 %v5678, %v5704
      %v5716 = vadd.f32 %v5679, %v5704
      %v5717 = vadd.f32 %v5680, %v5704
      %v5718 = vadd.f32 %v5681, %v5704
      %v5719 = vadd.f32 %v5682, %v5704
      %v5720 = vadd.f32 %v5683, %v5704
      %v5721 = vadd.f32 %v5684, %v5704
      %v5722 = vadd.f32 %v5685, %v5704
      %v5723 = vadd.f32 %v5686, %v5704
      %v5724 = vadd.f32 %v5687, %v5704
      %v5725 = vadd.f32 %v5688, %v5704
      %v5726 = vadd.f32 %v5689, %v5704
      %v5727 = vadd.f32 %v5690, %v5704
      %v5728 = vadd.f32 %v5691, %v5704
      %v5729 = vadd.f32 %v5692, %v5704
      %v5730 = vadd.f32 %v5693, %v5704
      %v5731 = vadd.f32 %v5694, %v5704
      %v5732 = vadd.f32 %v5695, %v5704
      %v5733 = vadd.f32 %v5696, %v5704
      %v5734 = vadd.f32 %v5697, %v5704
      %v5735 = vadd.f32 %v5698, %v5704
      %v5736 = vadd.f32 %v5699, %v5704
      %v5737 = vsub.f32 0.0, %v5705
      %v5738 = vsub.f32 0.0, %v5706
      %v5739 = vsub.f32 0.0, %v5707
      %v5740 = vsub.f32 0.0, %v5708
      %v5741 = vsub.f32 0.0, %v5709
      %v5742 = vsub.f32 0.0, %v5710
      %v5743 = vsub.f32 0.0, %v5711
      %v5744 = vsub.f32 0.0, %v5712
      %v5745 = vsub.f32 0.0, %v5713
      %v5746 = vsub.f32 0.0, %v5714
      %v5747 = vsub.f32 0.0, %v5715
      %v5748 = vsub.f32 0.0, %v5716
      %v5749 = vsub.f32 0.0, %v5717
      %v5750 = vsub.f32 0.0, %v5718
      %v5751 = vsub.f32 0.0, %v5719
      %v5752 = vsub.f32 0.0, %v5720
      %v5753 = vsub.f32 0.0, %v5721
      %v5754 = vsub.f32 0.0, %v5722
      %v5755 = vsub.f32 0.0, %v5723
      %v5756 = vsub.f32 0.0, %v5724
      %v5757 = vsub.f32 0.0, %v5725
      %v5758 = vsub.f32 0.0, %v5726
      %v5759 = vsub.f32 0.0, %v5727
      %v5760 = vsub.f32 0.0, %v5728
      %v5761 = vsub.f32 0.0, %v5729
      %v5762 = vsub.f32 0.0, %v5730
      %v5763 = vsub.f32 0.0, %v5731
      %v5764 = vsub.f32 0.0, %v5732
      %v5765 = vsub.f32 0.0, %v5733
      %v5766 = vsub.f32 0.0, %v5734
      %v5767 = vsub.f32 0.0, %v5735
      %v5768 = vsub.f32 0.0, %v5736
      %v5769 = vmul.f32 %v5737, 1.442695
      %v5770 = vpow.pop %v5769
      %v5771 = vmul.f32 %v5738, 1.442695
      %v5772 = vpow.pop %v5771
      %v5773 = vmul.f32 %v5739, 1.442695
      %v5774 = vpow.pop %v5773
      %v5775 = vmul.f32 %v5740, 1.442695
      %v5776 = vpow.pop %v5775
      %v5777 = vmul.f32 %v5741, 1.442695
      %v5778 = vpow.pop %v5777
      %v5779 = vmul.f32 %v5742, 1.442695
      %v5780 = vpow.pop %v5779
      %v5781 = vmul.f32 %v5743, 1.442695
      %v5782 = vpow.pop %v5781
      %v5783 = vmul.f32 %v5744, 1.442695
      %v5784 = vpow.pop %v5783
      %v5785 = vmul.f32 %v5745, 1.442695
      %v5786 = vpow.pop %v5785
      %v5787 = vmul.f32 %v5746, 1.442695
      %v5788 = vpow.pop %v5787
      %v5789 = vmul.f32 %v5747, 1.442695
      %v5790 = vpow.pop %v5789
      %v5791 = vmul.f32 %v5748, 1.442695
      %v5792 = vpow.pop %v5791
      %v5793 = vmul.f32 %v5749, 1.442695
      %v5794 = vpow.pop %v5793
      %v5795 = vmul.f32 %v5750, 1.442695
      %v5796 = vpow.pop %v5795
      %v5797 = vmul.f32 %v5751, 1.442695
      %v5798 = vpow.pop %v5797
      %v5799 = vmul.f32 %v5752, 1.442695
      %v5800 = vpow.pop %v5799
      %v5801 = vmul.f32 %v5753, 1.442695
      %v5802 = vpow.pop %v5801
      %v5803 = vmul.f32 %v5754, 1.442695
      %v5804 = vpow.pop %v5803
      %v5805 = vmul.f32 %v5755, 1.442695
      %v5806 = vpow.pop %v5805
      %v5807 = vmul.f32 %v5756, 1.442695
      %v5808 = vpow.pop %v5807
      %v5809 = vmul.f32 %v5757, 1.442695
      %v5810 = vpow.pop %v5809
      %v5811 = vmul.f32 %v5758, 1.442695
      %v5812 = vpow.pop %v5811
      %v5813 = vmul.f32 %v5759, 1.442695
      %v5814 = vpow.pop %v5813
      %v5815 = vmul.f32 %v5760, 1.442695
      %v5816 = vpow.pop %v5815
      %v5817 = vmul.f32 %v5761, 1.442695
      %v5818 = vpow.pop %v5817
      %v5819 = vmul.f32 %v5762, 1.442695
      %v5820 = vpow.pop %v5819
      %v5821 = vmul.f32 %v5763, 1.442695
      %v5822 = vpow.pop %v5821
      %v5823 = vmul.f32 %v5764, 1.442695
      %v5824 = vpow.pop %v5823
      %v5825 = vmul.f32 %v5765, 1.442695
      %v5826 = vpow.pop %v5825
      %v5827 = vmul.f32 %v5766, 1.442695
      %v5828 = vpow.pop %v5827
      %v5829 = vmul.f32 %v5767, 1.442695
      %v5830 = vpow.pop %v5829
      %v5831 = vmul.f32 %v5768, 1.442695
      %v5832 = vpow.pop %v5831
      %v5833 = vadd.f32 %v5770, 1.0
      %v5834 = vadd.f32 %v5772, 1.0
      %v5835 = vadd.f32 %v5774, 1.0
      %v5836 = vadd.f32 %v5776, 1.0
      %v5837 = vadd.f32 %v5778, 1.0
      %v5838 = vadd.f32 %v5780, 1.0
      %v5839 = vadd.f32 %v5782, 1.0
      %v5840 = vadd.f32 %v5784, 1.0
      %v5841 = vadd.f32 %v5786, 1.0
      %v5842 = vadd.f32 %v5788, 1.0
      %v5843 = vadd.f32 %v5790, 1.0
      %v5844 = vadd.f32 %v5792, 1.0
      %v5845 = vadd.f32 %v5794, 1.0
      %v5846 = vadd.f32 %v5796, 1.0
      %v5847 = vadd.f32 %v5798, 1.0
      %v5848 = vadd.f32 %v5800, 1.0
      %v5849 = vadd.f32 %v5802, 1.0
      %v5850 = vadd.f32 %v5804, 1.0
      %v5851 = vadd.f32 %v5806, 1.0
      %v5852 = vadd.f32 %v5808, 1.0
      %v5853 = vadd.f32 %v5810, 1.0
      %v5854 = vadd.f32 %v5812, 1.0
      %v5855 = vadd.f32 %v5814, 1.0
      %v5856 = vadd.f32 %v5816, 1.0
      %v5857 = vadd.f32 %v5818, 1.0
      %v5858 = vadd.f32 %v5820, 1.0
      %v5859 = vadd.f32 %v5822, 1.0
      %v5860 = vadd.f32 %v5824, 1.0
      %v5861 = vadd.f32 %v5826, 1.0
      %v5862 = vadd.f32 %v5828, 1.0
      %v5863 = vadd.f32 %v5830, 1.0
      %v5864 = vadd.f32 %v5832, 1.0
      %v5865 = vrcp.pop %v5833
      %v5866 = vrcp.pop %v5834
      %v5867 = vrcp.pop %v5835
      %v5868 = vrcp.pop %v5836
      %v5869 = vrcp.pop %v5837
      %v5870 = vrcp.pop %v5838
      %v5871 = vrcp.pop %v5839
      %v5872 = vrcp.pop %v5840
      %v5873 = vrcp.pop %v5841
      %v5874 = vrcp.pop %v5842
      %v5875 = vrcp.pop %v5843
      %v5876 = vrcp.pop %v5844
      %v5877 = vrcp.pop %v5845
      %v5878 = vrcp.pop %v5846
      %v5879 = vrcp.pop %v5847
      %v5880 = vrcp.pop %v5848
      %v5881 = vrcp.pop %v5849
      %v5882 = vrcp.pop %v5850
      %v5883 = vrcp.pop %v5851
      %v5884 = vrcp.pop %v5852
      %v5885 = vrcp.pop %v5853
      %v5886 = vrcp.pop %v5854
      %v5887 = vrcp.pop %v5855
      %v5888 = vrcp.pop %v5856
      %v5889 = vrcp.pop %v5857
      %v5890 = vrcp.pop %v5858
      %v5891 = vrcp.pop %v5859
      %v5892 = vrcp.pop %v5860
      %v5893 = vrcp.pop %v5861
      %v5894 = vrcp.pop %v5862
      %v5895 = vrcp.pop %v5863
      %v5896 = vrcp.pop %v5864
      %v5897 = vmul.f32 %v5705, %v5865
      %v5898 = vmul.f32 %v5706, %v5866
      %v5899 = vmul.f32 %v5707, %v5867
      %v5900 = vmul.f32 %v5708, %v5868
      %v5901 = vmul.f32 %v5709, %v5869
      %v5902 = vmul.f32 %v5710, %v5870
      %v5903 = vmul.f32 %v5711, %v5871
      %v5904 = vmul.f32 %v5712, %v5872
      %v5905 = vmul.f32 %v5713, %v5873
      %v5906 = vmul.f32 %v5714, %v5874
      %v5907 = vmul.f32 %v5715, %v5875
      %v5908 = vmul.f32 %v5716, %v5876
      %v5909 = vmul.f32 %v5717, %v5877
      %v5910 = vmul.f32 %v5718, %v5878
      %v5911 = vmul.f32 %v5719, %v5879
      %v5912 = vmul.f32 %v5720, %v5880
      %v5913 = vmul.f32 %v5721, %v5881
      %v5914 = vmul.f32 %v5722, %v5882
      %v5915 = vmul.f32 %v5723, %v5883
      %v5916 = vmul.f32 %v5724, %v5884
      %v5917 = vmul.f32 %v5725, %v5885
      %v5918 = vmul.f32 %v5726, %v5886
      %v5919 = vmul.f32 %v5727, %v5887
      %v5920 = vmul.f32 %v5728, %v5888
      %v5921 = vmul.f32 %v5729, %v5889
      %v5922 = vmul.f32 %v5730, %v5890
      %v5923 = vmul.f32 %v5731, %v5891
      %v5924 = vmul.f32 %v5732, %v5892
      %v5925 = vmul.f32 %v5733, %v5893
      %v5926 = vmul.f32 %v5734, %v5894
      %v5927 = vmul.f32 %v5735, %v5895
      %v5928 = vmul.f32 %v5736, %v5896
      %5929 = vst.msk [vmem:[%s386] sm:$0xff] %vm565, %v5897
      %5930 = vst.msk [vmem:[%s386 + $0x8] sm:$0xff] %vm565, %v5898
      %5931 = vst.msk [vmem:[%s386 + $0x10] sm:$0xff] %vm565, %v5899
      %5932 = vst.msk [vmem:[%s386 + $0x18] sm:$0xff] %vm565, %v5900
      %5933 = vst.msk [vmem:[%s386 + $0x20] sm:$0xff] %vm565, %v5901
      %5934 = vst.msk [vmem:[%s386 + $0x28] sm:$0xff] %vm565, %v5902
      %5935 = vst.msk [vmem:[%s386 + $0x30] sm:$0xff] %vm565, %v5903
      %5936 = vst.msk [vmem:[%s386 + $0x38] sm:$0xff] %vm565, %v5904
      %5937 = vst.msk [vmem:[%s386 + $0x40] sm:$0xff] %vm565, %v5905
      %5938 = vst.msk [vmem:[%s386 + $0x48] sm:$0xff] %vm565, %v5906
      %5939 = vst.msk [vmem:[%s386 + $0x50] sm:$0xff] %vm565, %v5907
      %5940 = vst.msk [vmem:[%s386 + $0x58] sm:$0xff] %vm565, %v5908
      %5941 = vst.msk [vmem:[%s386 + $0x60] sm:$0xff] %vm565, %v5909
      %5942 = vst.msk [vmem:[%s386 + $0x68] sm:$0xff] %vm565, %v5910
      %5943 = vst.msk [vmem:[%s386 + $0x70] sm:$0xff] %vm565, %v5911
      %5944 = vst.msk [vmem:[%s386 + $0x78] sm:$0xff] %vm565, %v5912
      %5945 = vst.msk [vmem:[%s386 + $0x80] sm:$0xff] %vm565, %v5913
      %5946 = vst.msk [vmem:[%s386 + $0x88] sm:$0xff] %vm565, %v5914
      %5947 = vst.msk [vmem:[%s386 + $0x90] sm:$0xff] %vm565, %v5915
      %5948 = vst.msk [vmem:[%s386 + $0x98] sm:$0xff] %vm565, %v5916
      %5949 = vst.msk [vmem:[%s386 + $0xa0] sm:$0xff] %vm565, %v5917
      %5950 = vst.msk [vmem:[%s386 + $0xa8] sm:$0xff] %vm565, %v5918
      %5951 = vst.msk [vmem:[%s386 + $0xb0] sm:$0xff] %vm565, %v5919
      %5952 = vst.msk [vmem:[%s386 + $0xb8] sm:$0xff] %vm565, %v5920
      %5953 = vst.msk [vmem:[%s386 + $0xc0] sm:$0xff] %vm565, %v5921
      %5954 = vst.msk [vmem:[%s386 + $0xc8] sm:$0xff] %vm565, %v5922
      %5955 = vst.msk [vmem:[%s386 + $0xd0] sm:$0xff] %vm565, %v5923
      %5956 = vst.msk [vmem:[%s386 + $0xd8] sm:$0xff] %vm565, %v5924
      %5957 = vst.msk [vmem:[%s386 + $0xe0] sm:$0xff] %vm565, %v5925
      %5958 = vst.msk [vmem:[%s386 + $0xe8] sm:$0xff] %vm565, %v5926
      %5959 = vst.msk [vmem:[%s386 + $0xf0] sm:$0xff] %vm565, %v5927
      %5960 = vst.msk [vmem:[%s386 + $0xf8] sm:$0xff] %vm565, %v5928
      %p5961 = scmp.lt.s32.totalorder %s22, 1
      %s5962 = scalar_select %p5961, %s22, 1
      %s5963 = smul.addr %s5962, 32
      %s5964 = smul.addr %s5963, 8
      %s5965 = scalar_lea.vmem %s11, %s5964
      // Predicated region
      $region65: #{c3_forward.1} parent=63 // pred_check
        %p5966 = pneg %p276
      $region66: #{c3_forward.1} parent=63 // pred_check_branch
        %5968 = sbr.rel (%p5966) target = $region68
      $region67: #{c3_forward.1} parent=63 // pred_region
        _
      $region68: #{c3_forward.1} parent=63 // pred_fallthru
        _
    $region64: #{c3_forward.1} parent=5 // pred_fallthru
      _
    %p5969 = scmp.le.s32.totalorder 2, %s17
    // Predicated region
    $region69: #{c3_forward.1} parent=5 // pred_check
      %p5970 = pneg %p5969
    $region70: #{c3_forward.1} parent=5 // pred_check_branch
      %5972 = sbr.rel (%p5970) target = $region72
    $region71: #{c3_forward.1} parent=5 // pred_region
      %s5973 = ssub.s32 %s17, 2
      // Predicated region
      $region73: #{c3_forward.1} parent=71 // pred_check
        %p5974 = pneg %p282
      $region74: #{c3_forward.1} parent=71 // pred_check_branch
        %5976 = sbr.rel (%p5974) target = $region76
      $region75: #{c3_forward.1} parent=71 // pred_region
        %p5977 = scmp.lt.s32.totalorder %s23, 1
        %s5978 = scalar_select %p5977, %s23, 1
        %s5979 = smul.addr %s5978, 32
        %s5980 = smul.addr %s5979, 8
        %s5981 = scalar_lea.vmem %s11, %s5980
      $region76: #{c3_forward.1} parent=71 // pred_fallthru
        _
    $region72: #{c3_forward.1} parent=5 // pred_fallthru
      _
  $region6: #{c3_forward.1} parent=0 // loop_footer
    %s21 = sadd.s32 1, %s17
  $region7: #{c3_forward.1} parent=0 // loop_footer_branch
    %16 = sbr.rel target = $region3
  $region8: #{c3_forward.1} parent=0 // loop_exit
    _

</llo_original>
